<compile_context>
chip_gen: v7x
topology: tpu7x:2x2x1
jax: 0.10.0
libtpu: 0.0.40
codegen_flags: <defaults>
</compile_context>

<pallas_src>
import functools

import jax
import jax.numpy as jnp
from jax.experimental import pallas as pl
from jax.experimental.pallas import tpu as pltpu

# ----------------------------- config ---------------------------------------
B = 2            # batch
C = 3            # image channels
IMG = 16         # image height/width
PATCH = 8        # conv patch size / stride
GP = IMG // PATCH
N_IMG = GP * GP                 # image tokens per sample (4)
PATCH_DIM = C * PATCH * PATCH   # flattened patch (192)
T_TXT = 8                       # text sequence length
S = N_IMG + T_TXT               # full sequence length (12)
D = 128                         # hidden size
V = 256                         # vocab size
MM_H = 256                      # mm_projector hidden
MLP_H = 256                     # decoder MLP hidden
NH = 4                          # attention heads
HD = D // NH                    # head dim (32)
IGNORE = -100
NEG = -1e30

# TODO(synk): the real module runs a pretrained 24-layer CLIP vision tower and
# a 32-layer LLaMA-7B; a single synthetic block stands in for each.
# TODO(synk): at real 7B shapes (D=4096, V=32000) the "whole weight as one
# VMEM-resident block" pattern below must become a tiled grid (token axis
# parallel, contraction axis last with a VMEM accumulator) to fit v7x's 64 MiB.


# ----------------------------- helpers ---------------------------------------


def _rms(x, gain):
    var = jnp.mean(x * x, axis=-1, keepdims=True)
    return x * jax.lax.rsqrt(var + 1e-6) * gain


# --------------------- fused multimodal forward kernel -----------------------


def _fused_kernel(
    ids_ref, mask_ref,                                   # scalar prefetch (SMEM)
    patches_ref,                                         # (1, N_IMG, PATCH_DIM)
    patch_w_ref, patch_b_ref,                            # vision patch embed
    mm_w1_ref, mm_b1_ref, mm_w2_ref, mm_b2_ref,          # mm_projector
    embed_ref,                                           # token embedding table
    ln1_ref, wqkv_ref, wo_ref,                           # attention
    ln2_ref, w_gu_ref, w_down_ref,                       # SwiGLU MLP
    lnf_ref, lm_w_ref, lm_b_ref,                         # final norm + lm head
    logits_ref, h0_ref, h2_ref, hf_ref,                  # outputs
):
    b = pl.program_id(0)
    bf16 = jnp.bfloat16
    f32 = jnp.float32

    # ---- vision tower (patch conv as matmul) + mm_projector ------------------
    p = patches_ref[0].astype(bf16)                                    # (N_IMG, PATCH_DIM)
    img = jnp.dot(p, patch_w_ref[...].astype(bf16),
                  preferred_element_type=f32) + patch_b_ref[...]       # (N_IMG, D)
    h = jnp.dot(img.astype(bf16), mm_w1_ref[...].astype(bf16),
                preferred_element_type=f32) + mm_b1_ref[...]           # (N_IMG, MM_H)
    # TODO(synk): real LLaVA mm_projector uses exact GELU (CLIP uses quick-GELU);
    # jax.nn.gelu's tanh approximation stands in here.
    h = jax.nn.gelu(h)
    img_emb = jnp.dot(h.astype(bf16), mm_w2_ref[...].astype(bf16),
                      preferred_element_type=f32) + mm_b2_ref[...]     # (N_IMG, D)

    # ---- multimodal input embeddings [img ; text] -----------------------------
    # scatter image tokens into rows [0, N_IMG) with a constant placement matrix
    prow = jax.lax.broadcasted_iota(jnp.int32, (S, N_IMG), 0)
    pcol = jax.lax.broadcasted_iota(jnp.int32, (S, N_IMG), 1)
    img_place = (prow == pcol).astype(f32)                             # (S, N_IMG)
    img_part = jnp.dot(img_place, img_emb, preferred_element_type=f32)

    # gather text embeddings into rows [N_IMG, S) as a one-hot matmul on the MXU
    row_s = jax.lax.broadcasted_iota(jnp.int32, (S, 1), 0)
    tok = jnp.full((S, 1), -1, jnp.int32)
    for t in range(T_TXT):                                             # static unroll
        tok = jnp.where(row_s == (N_IMG + t), ids_ref[b, t], tok)
    vcol = jax.lax.broadcasted_iota(jnp.int32, (S, V), 1)
    txt_onehot = (vcol == tok).astype(f32)                             # (S, V)
    txt_part = jnp.dot(txt_onehot, embed_ref[...], preferred_element_type=f32)

    h0 = img_part + txt_part                                           # (S, D)

    # ---- causal + key-padding bias built in-kernel from SMEM scalars ----------
    row2 = jax.lax.broadcasted_iota(jnp.int32, (S, S), 0)
    col2 = jax.lax.broadcasted_iota(jnp.int32, (S, S), 1)
    bias = jnp.where(col2 <= row2, 0.0, NEG)                           # causal
    for t in range(T_TXT):                                             # key padding
        pen = jnp.where(mask_ref[b, t] > 0, 0.0, NEG)
        bias = bias + jnp.where(col2 == (N_IMG + t), pen, 0.0)

    # ---- decoder block: RMSNorm -> MHA -> residual -> RMSNorm -> SwiGLU -------
    hn = _rms(h0, ln1_ref[...])
    qkv = jnp.dot(hn.astype(bf16), wqkv_ref[...].astype(bf16),
                  preferred_element_type=f32)                          # (S, 3D)
    q_all = qkv[:, 0:D]
    k_all = qkv[:, D:2 * D]
    v_all = qkv[:, 2 * D:3 * D]
    kb = k_all.astype(bf16)

    scale = 1.0 / (HD ** 0.5)
    lane = jax.lax.broadcasted_iota(jnp.int32, (1, D), 1)
    ctx = jnp.zeros((S, D), f32)
    for hh in range(NH):                                               # static unroll
        lo = hh * HD
        hmask = jnp.logical_and(lane >= lo, lane < lo + HD).astype(f32)  # (1, D)
        # per-head scores via lane-masked Q against full-width K: keeps the MXU
        # contraction 128-deep and avoids any transpose / lane slicing.
        qh = (q_all * hmask).astype(bf16)
        scores = jax.lax.dot_general(qh, kb, (((1,), (1,)), ((), ())),
                                     preferred_element_type=f32) * scale + bias
        probs = jax.nn.softmax(scores, axis=-1)                        # f32
        vh = (v_all * hmask).astype(bf16)
        ctx = ctx + jnp.dot(probs.astype(bf16), vh, preferred_element_type=f32)
    attn_out = jnp.dot(ctx.astype(bf16), wo_ref[...].astype(bf16),
                       preferred_element_type=f32)                     # one wo matmul
    h1 = h0 + attn_out

    hn2 = _rms(h1, ln2_ref[...])
    gu = jnp.dot(hn2.astype(bf16), w_gu_ref[...].astype(bf16),
                 preferred_element_type=f32)                           # (S, 2*MLP_H)
    g = gu[:, :MLP_H]
    u = gu[:, MLP_H:]
    mlp_out = jnp.dot((jax.nn.silu(g) * u).astype(bf16),
                      w_down_ref[...].astype(bf16),
                      preferred_element_type=f32)
    h2 = h1 + mlp_out

    hf = _rms(h2, lnf_ref[...])
    logits = jnp.dot(hf.astype(bf16), lm_w_ref[...].astype(bf16),
                     preferred_element_type=f32) + lm_b_ref[...]       # (S, V)

    logits_ref[0] = logits
    h0_ref[0] = h0
    h2_ref[0] = h2
    hf_ref[0] = hf


def _fused_call(params, patches, ids, mask):
    weights = (
        params["patch_w"], params["patch_b"],
        params["mm_w1"], params["mm_b1"], params["mm_w2"], params["mm_b2"],
        params["embed"],
        params["ln1_g"], params["wqkv"], params["wo"],
        params["ln2_g"], params["w_gu"], params["w_down"],
        params["lnf_g"], params["lm_w"], params["lm_b"],
    )

    def _resident(a):
        # whole weight as a single VMEM-resident block (all 2-D, < 200 KiB each)
        return pl.BlockSpec(a.shape, lambda b, ids, msk: (0, 0))

    in_specs = [pl.BlockSpec((1, N_IMG, PATCH_DIM), lambda b, ids, msk: (b, 0, 0))]
    in_specs += [_resident(w) for w in weights]

    out_shape = (
        jax.ShapeDtypeStruct((B, S, V), jnp.float32),   # logits
        jax.ShapeDtypeStruct((B, S, D), jnp.float32),   # h0  (input embeddings)
        jax.ShapeDtypeStruct((B, S, D), jnp.float32),   # h2  (post-block hidden)
        jax.ShapeDtypeStruct((B, S, D), jnp.float32),   # hf  (final normed hidden)
    )
    out_specs = (
        pl.BlockSpec((1, S, V), lambda b, ids, msk: (b, 0, 0)),
        pl.BlockSpec((1, S, D), lambda b, ids, msk: (b, 0, 0)),
        pl.BlockSpec((1, S, D), lambda b, ids, msk: (b, 0, 0)),
        pl.BlockSpec((1, S, D), lambda b, ids, msk: (b, 0, 0)),
    )

    return pl.pallas_call(
        _fused_kernel,
        out_shape=out_shape,
        grid_spec=pltpu.PrefetchScalarGridSpec(
            num_scalar_prefetch=2,
            grid=(B,),
            in_specs=in_specs,
            out_specs=out_specs,
        ),
        compiler_params=pltpu.CompilerParams(
            dimension_semantics=("parallel",)),
    )(ids, mask, patches, *weights)


# --------------------------- cross-entropy loss -------------------------------


def _ce_kernel(labels_ref, logits_ref, out_ref):
    # labels_ref: SMEM (B, T_TXT) int32 ; logits_ref: VMEM (B, S, V) f32
    # out_ref:    SMEM (2,) f32  -> [sum of per-token losses, valid-token count]
    total = jnp.float32(0.0)
    cnt = jnp.float32(0.0)
    for b in range(B):                                     # static unroll
        lg = logits_ref[b]                                 # (S, V)
        lg = lg[:S - 1, :]                                 # shift logits (S-1, V)
        m = jnp.max(lg, axis=-1, keepdims=True)
        lse = m + jnp.log(jnp.sum(jnp.exp(lg - m), axis=-1, keepdims=True))
        # shifted targets: rows [0, N_IMG-1) are image positions -> IGNORE,
        # rows [N_IMG-1, S-1) predict the text labels.
        row = jax.lax.broadcasted_iota(jnp.int32, (S - 1, 1), 0)
        tgt = jnp.full((S - 1, 1), IGNORE, jnp.int32)
        for t in range(T_TXT):
            tgt = jnp.where(row == (N_IMG - 1 + t), labels_ref[b, t], tgt)
        valid = (tgt != IGNORE).astype(jnp.float32)        # (S-1, 1)
        safe = jnp.clip(tgt, 0, V - 1)
        col = jax.lax.broadcasted_iota(jnp.int32, (S - 1, V), 1)
        tgt_logit = jnp.sum(jnp.where(col == safe, lg, 0.0),
                            axis=-1, keepdims=True)
        total = total + jnp.sum((lse - tgt_logit) * valid)
        cnt = cnt + jnp.sum(valid)
    out_ref[0] = total
    out_ref[1] = cnt


def _ce_call(logits, labels):
    return pl.pallas_call(
        _ce_kernel,
        out_shape=jax.ShapeDtypeStruct((2,), jnp.float32),
        grid_spec=pltpu.PrefetchScalarGridSpec(
            num_scalar_prefetch=1,
            grid=(1,),
            in_specs=[pl.BlockSpec((B, S, V), lambda i, lbl: (0, 0, 0))],
            out_specs=pl.BlockSpec(memory_space=pltpu.MemorySpace.SMEM),
        ),
    )(labels, logits)


# --------------------------- parameters --------------------------------------


def init_params(key):
    ks = jax.random.split(key, 12)
    sc = 0.02
    return {
        # vision patch embedding (conv stride=PATCH flattened to a matmul)
        "patch_w": sc * jax.random.normal(ks[0], (PATCH_DIM, D), jnp.float32),
        "patch_b": jnp.zeros((1, D), jnp.float32),
        # mm_projector: Linear -> GELU -> Linear
        "mm_w1": sc * jax.random.normal(ks[1], (D, MM_H), jnp.float32),
        "mm_b1": jnp.zeros((1, MM_H), jnp.float32),
        "mm_w2": sc * jax.random.normal(ks[2], (MM_H, D), jnp.float32),
        "mm_b2": jnp.zeros((1, D), jnp.float32),
        # token embedding
        "embed": sc * jax.random.normal(ks[3], (V, D), jnp.float32),
        # decoder block (QKV fused; gate|up fused)
        "ln1_g": jnp.ones((1, D), jnp.float32),
        "wqkv": sc * jax.random.normal(ks[4], (D, 3 * D), jnp.float32),
        "wo": sc * jax.random.normal(ks[5], (D, D), jnp.float32),
        "ln2_g": jnp.ones((1, D), jnp.float32),
        "w_gu": sc * jax.random.normal(ks[6], (D, 2 * MLP_H), jnp.float32),
        "w_down": sc * jax.random.normal(ks[7], (MLP_H, D), jnp.float32),
        # final norm + lm head
        "lnf_g": jnp.ones((1, D), jnp.float32),
        "lm_w": sc * jax.random.normal(ks[8], (D, V), jnp.float32),
        "lm_b": jnp.zeros((1, V), jnp.float32),
    }


# ----------------------------- forward ---------------------------------------


def llava_forward(params, input_ids, pixel_values, attention_mask, labels=None):
    # NCHW pixel_values -> flattened non-overlapping patches (layout glue only)
    px = pixel_values.astype(jnp.float32)
    patches = px.reshape(B, C, GP, PATCH, GP, PATCH)
    patches = patches.transpose(0, 2, 4, 1, 3, 5).reshape(B, N_IMG, PATCH_DIM)

    ids = input_ids.astype(jnp.int32)
    mask = attention_mask.astype(jnp.int32)

    # one fused Pallas call: vision tower + projector + embedding gather +
    # decoder block + lm_head, grid=(B,) sharded across TensorCores.
    logits, h0, h2, hf = _fused_call(params, patches, ids, mask)

    outputs = {
        "logits": logits,
        "hidden_states": (h0, h2, hf),
    }

    if labels is not None:
        sums = _ce_call(logits, labels.astype(jnp.int32))
        outputs["loss"] = sums[0] / jnp.maximum(sums[1], 1.0)

    return outputs


# ------------------------------- main ----------------------------------------

if __name__ == "__main__":
    key = jax.random.PRNGKey(0)
    kp, ki, kx = jax.random.split(key, 3)

    params = init_params(kp)
    input_ids = jax.random.randint(ki, (B, T_TXT), 0, V, dtype=jnp.int32)
    pixel_values = jax.random.normal(kx, (B, C, IMG, IMG), jnp.float32)  # NCHW
    attention_mask = jnp.ones((B, T_TXT), jnp.float32)
    labels = input_ids

    fwd = jax.jit(functools.partial(llava_forward, params))
    outputs = fwd(input_ids, pixel_values, attention_mask, labels)

    jax.block_until_ready(outputs["logits"])
    jax.block_until_ready(outputs["loss"])
    assert outputs["logits"].shape == (B, S, V)
    assert jnp.isfinite(outputs["loss"])
    print("KERNEL_OK")
</pallas_src>

<mosaic_0001>
module attributes {stable_mosaic.version = 11 : i64} {
  func.func @_ce_kernel(%arg0: i32, %arg1: memref<2x8xi32, #tpu.memory_space<smem>>, %arg2: memref<2x12x256xf32, #tpu.memory_space<vmem>>, %arg3: memref<2xf32, #tpu.memory_space<smem>>) attributes {dimension_semantics = [#tpu.dimension_semantics<arbitrary>], iteration_bounds = array<i64: 1>, scalar_prefetch = 1 : i64, scratch_operands = 0 : i64, tpu.core_type = #tpu.core_type<tc>, window_params = [{pipeline_mode = #tpu.pipeline_mode<synchronous>, transform_indices = @transform_0, window_bounds = array<i64: 2, 12, 256>}, {transform_indices = @transform_1, window_bounds = array<i64: 2>}]} {
    %c0 = arith.constant 0 : index
    %c0_0 = arith.constant 0 : index
    %c0_1 = arith.constant 0 : index
    %0 = vector.load %arg2[%c0, %c0_0, %c0_1] : memref<2x12x256xf32, #tpu.memory_space<vmem>>, vector<1x12x256xf32>
    %1 = vector.shape_cast %0 : vector<1x12x256xf32> to vector<12x256xf32>
    %2 = vector.extract_strided_slice %1 {offsets = [0, 0], sizes = [11, 256], strides = [1, 1]} : vector<12x256xf32> to vector<11x256xf32>
    %cst = arith.constant dense<0xFF800000> : vector<11xf32>
    %3 = vector.multi_reduction <maximumf>, %2, %cst [1] : vector<11x256xf32> to vector<11xf32>
    %4 = vector.shape_cast %3 : vector<11xf32> to vector<11x1xf32>
    %5 = vector.broadcast %4 : vector<11x1xf32> to vector<11x256xf32>
    %6 = arith.subf %2, %5 : vector<11x256xf32>
    %7 = math.exp %6 : vector<11x256xf32>
    %cst_2 = arith.constant dense<0.000000e+00> : vector<11xf32>
    %8 = vector.multi_reduction <add>, %7, %cst_2 [1] : vector<11x256xf32> to vector<11xf32>
    %9 = vector.shape_cast %8 : vector<11xf32> to vector<11x1xf32>
    %10 = math.log %9 : vector<11x1xf32>
    %11 = arith.addf %4, %10 : vector<11x1xf32>
    %12 = tpu.iota {dimensions = array<i32: 0>} : vector<11x1xi32>
    %c-100_i32 = arith.constant -100 : i32
    %13 = vector.broadcast %c-100_i32 : i32 to vector<11x1xi32>
    %c3_i32 = arith.constant 3 : i32
    %14 = vector.broadcast %c3_i32 : i32 to vector<11x1xi32>
    %15 = arith.cmpi eq, %12, %14 : vector<11x1xi32>
    %c0_3 = arith.constant 0 : index
    %c0_4 = arith.constant 0 : index
    %16 = memref.load %arg1[%c0_3, %c0_4] : memref<2x8xi32, #tpu.memory_space<smem>>
    %17 = vector.broadcast %16 : i32 to vector<11x1xi32>
    %18 = arith.select %15, %17, %13 : vector<11x1xi1>, vector<11x1xi32>
    %c4_i32 = arith.constant 4 : i32
    %19 = vector.broadcast %c4_i32 : i32 to vector<11x1xi32>
    %20 = arith.cmpi eq, %12, %19 : vector<11x1xi32>
    %c0_5 = arith.constant 0 : index
    %c1 = arith.constant 1 : index
    %21 = memref.load %arg1[%c0_5, %c1] : memref<2x8xi32, #tpu.memory_space<smem>>
    %22 = vector.broadcast %21 : i32 to vector<11x1xi32>
    %23 = arith.select %20, %22, %18 : vector<11x1xi1>, vector<11x1xi32>
    %c5_i32 = arith.constant 5 : i32
    %24 = vector.broadcast %c5_i32 : i32 to vector<11x1xi32>
    %25 = arith.cmpi eq, %12, %24 : vector<11x1xi32>
    %c0_6 = arith.constant 0 : index
    %c2 = arith.constant 2 : index
    %26 = memref.load %arg1[%c0_6, %c2] : memref<2x8xi32, #tpu.memory_space<smem>>
    %27 = vector.broadcast %26 : i32 to vector<11x1xi32>
    %28 = arith.select %25, %27, %23 : vector<11x1xi1>, vector<11x1xi32>
    %c6_i32 = arith.constant 6 : i32
    %29 = vector.broadcast %c6_i32 : i32 to vector<11x1xi32>
    %30 = arith.cmpi eq, %12, %29 : vector<11x1xi32>
    %c0_7 = arith.constant 0 : index
    %c3 = arith.constant 3 : index
    %31 = memref.load %arg1[%c0_7, %c3] : memref<2x8xi32, #tpu.memory_space<smem>>
    %32 = vector.broadcast %31 : i32 to vector<11x1xi32>
    %33 = arith.select %30, %32, %28 : vector<11x1xi1>, vector<11x1xi32>
    %c7_i32 = arith.constant 7 : i32
    %34 = vector.broadcast %c7_i32 : i32 to vector<11x1xi32>
    %35 = arith.cmpi eq, %12, %34 : vector<11x1xi32>
    %c0_8 = arith.constant 0 : index
    %c4 = arith.constant 4 : index
    %36 = memref.load %arg1[%c0_8, %c4] : memref<2x8xi32, #tpu.memory_space<smem>>
    %37 = vector.broadcast %36 : i32 to vector<11x1xi32>
    %38 = arith.select %35, %37, %33 : vector<11x1xi1>, vector<11x1xi32>
    %c8_i32 = arith.constant 8 : i32
    %39 = vector.broadcast %c8_i32 : i32 to vector<11x1xi32>
    %40 = arith.cmpi eq, %12, %39 : vector<11x1xi32>
    %c0_9 = arith.constant 0 : index
    %c5 = arith.constant 5 : index
    %41 = memref.load %arg1[%c0_9, %c5] : memref<2x8xi32, #tpu.memory_space<smem>>
    %42 = vector.broadcast %41 : i32 to vector<11x1xi32>
    %43 = arith.select %40, %42, %38 : vector<11x1xi1>, vector<11x1xi32>
    %c9_i32 = arith.constant 9 : i32
    %44 = vector.broadcast %c9_i32 : i32 to vector<11x1xi32>
    %45 = arith.cmpi eq, %12, %44 : vector<11x1xi32>
    %c0_10 = arith.constant 0 : index
    %c6 = arith.constant 6 : index
    %46 = memref.load %arg1[%c0_10, %c6] : memref<2x8xi32, #tpu.memory_space<smem>>
    %47 = vector.broadcast %46 : i32 to vector<11x1xi32>
    %48 = arith.select %45, %47, %43 : vector<11x1xi1>, vector<11x1xi32>
    %c10_i32 = arith.constant 10 : i32
    %49 = vector.broadcast %c10_i32 : i32 to vector<11x1xi32>
    %50 = arith.cmpi eq, %12, %49 : vector<11x1xi32>
    %c0_11 = arith.constant 0 : index
    %c7 = arith.constant 7 : index
    %51 = memref.load %arg1[%c0_11, %c7] : memref<2x8xi32, #tpu.memory_space<smem>>
    %52 = vector.broadcast %51 : i32 to vector<11x1xi32>
    %53 = arith.select %50, %52, %48 : vector<11x1xi1>, vector<11x1xi32>
    %c-100_i32_12 = arith.constant -100 : i32
    %54 = vector.broadcast %c-100_i32_12 : i32 to vector<11x1xi32>
    %55 = arith.cmpi ne, %53, %54 : vector<11x1xi32>
    %56 = arith.extui %55 : vector<11x1xi1> to vector<11x1xi32>
    %57 = arith.sitofp %56 : vector<11x1xi32> to vector<11x1xf32>
    %c0_i32 = arith.constant 0 : i32
    %c255_i32 = arith.constant 255 : i32
    %58 = vector.broadcast %c0_i32 : i32 to vector<11x1xi32>
    %59 = arith.maxsi %58, %53 : vector<11x1xi32>
    %60 = vector.broadcast %c255_i32 : i32 to vector<11x1xi32>
    %61 = arith.minsi %60, %59 : vector<11x1xi32>
    %62 = tpu.iota {dimensions = array<i32: 1>} : vector<11x256xi32>
    %63 = vector.broadcast %61 : vector<11x1xi32> to vector<11x256xi32>
    %64 = arith.cmpi eq, %62, %63 : vector<11x256xi32>
    %cst_13 = arith.constant 0.000000e+00 : f32
    %65 = vector.broadcast %cst_13 : f32 to vector<11x256xf32>
    %66 = arith.select %64, %2, %65 : vector<11x256xi1>, vector<11x256xf32>
    %cst_14 = arith.constant dense<0.000000e+00> : vector<11xf32>
    %67 = vector.multi_reduction <add>, %66, %cst_14 [1] : vector<11x256xf32> to vector<11xf32>
    %68 = vector.shape_cast %67 : vector<11xf32> to vector<11x1xf32>
    %69 = arith.subf %11, %68 : vector<11x1xf32>
    %70 = arith.mulf %69, %57 : vector<11x1xf32>
    %71 = vector.shape_cast %70 : vector<11x1xf32> to vector<1x11x1xf32>
    %cst_15 = arith.constant dense<0.000000e+00> : vector<1xf32>
    %72 = vector.multi_reduction <add>, %71, %cst_15 [1, 2] : vector<1x11x1xf32> to vector<1xf32>
    %73 = vector.shape_cast %72 : vector<1xf32> to vector<1x1x1xf32>
    %74 = vector.extract %73[0, 0, 0] : f32 from vector<1x1x1xf32>
    %cst_16 = arith.constant 0.000000e+00 : f32
    %75 = arith.addf %cst_16, %74 : f32
    %76 = vector.shape_cast %57 : vector<11x1xf32> to vector<1x11x1xf32>
    %cst_17 = arith.constant dense<0.000000e+00> : vector<1xf32>
    %77 = vector.multi_reduction <add>, %76, %cst_17 [1, 2] : vector<1x11x1xf32> to vector<1xf32>
    %78 = vector.shape_cast %77 : vector<1xf32> to vector<1x1x1xf32>
    %79 = vector.extract %78[0, 0, 0] : f32 from vector<1x1x1xf32>
    %cst_18 = arith.constant 0.000000e+00 : f32
    %80 = arith.addf %cst_18, %79 : f32
    %c1_19 = arith.constant 1 : index
    %c0_20 = arith.constant 0 : index
    %c0_21 = arith.constant 0 : index
    %81 = vector.load %arg2[%c1_19, %c0_20, %c0_21] : memref<2x12x256xf32, #tpu.memory_space<vmem>>, vector<1x12x256xf32>
    %82 = vector.shape_cast %81 : vector<1x12x256xf32> to vector<12x256xf32>
    %83 = vector.extract_strided_slice %82 {offsets = [0, 0], sizes = [11, 256], strides = [1, 1]} : vector<12x256xf32> to vector<11x256xf32>
    %cst_22 = arith.constant dense<0xFF800000> : vector<11xf32>
    %84 = vector.multi_reduction <maximumf>, %83, %cst_22 [1] : vector<11x256xf32> to vector<11xf32>
    %85 = vector.shape_cast %84 : vector<11xf32> to vector<11x1xf32>
    %86 = vector.broadcast %85 : vector<11x1xf32> to vector<11x256xf32>
    %87 = arith.subf %83, %86 : vector<11x256xf32>
    %88 = math.exp %87 : vector<11x256xf32>
    %cst_23 = arith.constant dense<0.000000e+00> : vector<11xf32>
    %89 = vector.multi_reduction <add>, %88, %cst_23 [1] : vector<11x256xf32> to vector<11xf32>
    %90 = vector.shape_cast %89 : vector<11xf32> to vector<11x1xf32>
    %91 = math.log %90 : vector<11x1xf32>
    %92 = arith.addf %85, %91 : vector<11x1xf32>
    %93 = tpu.iota {dimensions = array<i32: 0>} : vector<11x1xi32>
    %c-100_i32_24 = arith.constant -100 : i32
    %94 = vector.broadcast %c-100_i32_24 : i32 to vector<11x1xi32>
    %c3_i32_25 = arith.constant 3 : i32
    %95 = vector.broadcast %c3_i32_25 : i32 to vector<11x1xi32>
    %96 = arith.cmpi eq, %93, %95 : vector<11x1xi32>
    %c1_26 = arith.constant 1 : index
    %c0_27 = arith.constant 0 : index
    %97 = memref.load %arg1[%c1_26, %c0_27] : memref<2x8xi32, #tpu.memory_space<smem>>
    %98 = vector.broadcast %97 : i32 to vector<11x1xi32>
    %99 = arith.select %96, %98, %94 : vector<11x1xi1>, vector<11x1xi32>
    %c4_i32_28 = arith.constant 4 : i32
    %100 = vector.broadcast %c4_i32_28 : i32 to vector<11x1xi32>
    %101 = arith.cmpi eq, %93, %100 : vector<11x1xi32>
    %c1_29 = arith.constant 1 : index
    %c1_30 = arith.constant 1 : index
    %102 = memref.load %arg1[%c1_29, %c1_30] : memref<2x8xi32, #tpu.memory_space<smem>>
    %103 = vector.broadcast %102 : i32 to vector<11x1xi32>
    %104 = arith.select %101, %103, %99 : vector<11x1xi1>, vector<11x1xi32>
    %c5_i32_31 = arith.constant 5 : i32
    %105 = vector.broadcast %c5_i32_31 : i32 to vector<11x1xi32>
    %106 = arith.cmpi eq, %93, %105 : vector<11x1xi32>
    %c1_32 = arith.constant 1 : index
    %c2_33 = arith.constant 2 : index
    %107 = memref.load %arg1[%c1_32, %c2_33] : memref<2x8xi32, #tpu.memory_space<smem>>
    %108 = vector.broadcast %107 : i32 to vector<11x1xi32>
    %109 = arith.select %106, %108, %104 : vector<11x1xi1>, vector<11x1xi32>
    %c6_i32_34 = arith.constant 6 : i32
    %110 = vector.broadcast %c6_i32_34 : i32 to vector<11x1xi32>
    %111 = arith.cmpi eq, %93, %110 : vector<11x1xi32>
    %c1_35 = arith.constant 1 : index
    %c3_36 = arith.constant 3 : index
    %112 = memref.load %arg1[%c1_35, %c3_36] : memref<2x8xi32, #tpu.memory_space<smem>>
    %113 = vector.broadcast %112 : i32 to vector<11x1xi32>
    %114 = arith.select %111, %113, %109 : vector<11x1xi1>, vector<11x1xi32>
    %c7_i32_37 = arith.constant 7 : i32
    %115 = vector.broadcast %c7_i32_37 : i32 to vector<11x1xi32>
    %116 = arith.cmpi eq, %93, %115 : vector<11x1xi32>
    %c1_38 = arith.constant 1 : index
    %c4_39 = arith.constant 4 : index
    %117 = memref.load %arg1[%c1_38, %c4_39] : memref<2x8xi32, #tpu.memory_space<smem>>
    %118 = vector.broadcast %117 : i32 to vector<11x1xi32>
    %119 = arith.select %116, %118, %114 : vector<11x1xi1>, vector<11x1xi32>
    %c8_i32_40 = arith.constant 8 : i32
    %120 = vector.broadcast %c8_i32_40 : i32 to vector<11x1xi32>
    %121 = arith.cmpi eq, %93, %120 : vector<11x1xi32>
    %c1_41 = arith.constant 1 : index
    %c5_42 = arith.constant 5 : index
    %122 = memref.load %arg1[%c1_41, %c5_42] : memref<2x8xi32, #tpu.memory_space<smem>>
    %123 = vector.broadcast %122 : i32 to vector<11x1xi32>
    %124 = arith.select %121, %123, %119 : vector<11x1xi1>, vector<11x1xi32>
    %c9_i32_43 = arith.constant 9 : i32
    %125 = vector.broadcast %c9_i32_43 : i32 to vector<11x1xi32>
    %126 = arith.cmpi eq, %93, %125 : vector<11x1xi32>
    %c1_44 = arith.constant 1 : index
    %c6_45 = arith.constant 6 : index
    %127 = memref.load %arg1[%c1_44, %c6_45] : memref<2x8xi32, #tpu.memory_space<smem>>
    %128 = vector.broadcast %127 : i32 to vector<11x1xi32>
    %129 = arith.select %126, %128, %124 : vector<11x1xi1>, vector<11x1xi32>
    %c10_i32_46 = arith.constant 10 : i32
    %130 = vector.broadcast %c10_i32_46 : i32 to vector<11x1xi32>
    %131 = arith.cmpi eq, %93, %130 : vector<11x1xi32>
    %c1_47 = arith.constant 1 : index
    %c7_48 = arith.constant 7 : index
    %132 = memref.load %arg1[%c1_47, %c7_48] : memref<2x8xi32, #tpu.memory_space<smem>>
    %133 = vector.broadcast %132 : i32 to vector<11x1xi32>
    %134 = arith.select %131, %133, %129 : vector<11x1xi1>, vector<11x1xi32>
    %c-100_i32_49 = arith.constant -100 : i32
    %135 = vector.broadcast %c-100_i32_49 : i32 to vector<11x1xi32>
    %136 = arith.cmpi ne, %134, %135 : vector<11x1xi32>
    %137 = arith.extui %136 : vector<11x1xi1> to vector<11x1xi32>
    %138 = arith.sitofp %137 : vector<11x1xi32> to vector<11x1xf32>
    %c0_i32_50 = arith.constant 0 : i32
    %c255_i32_51 = arith.constant 255 : i32
    %139 = vector.broadcast %c0_i32_50 : i32 to vector<11x1xi32>
    %140 = arith.maxsi %139, %134 : vector<11x1xi32>
    %141 = vector.broadcast %c255_i32_51 : i32 to vector<11x1xi32>
    %142 = arith.minsi %141, %140 : vector<11x1xi32>
    %143 = tpu.iota {dimensions = array<i32: 1>} : vector<11x256xi32>
    %144 = vector.broadcast %142 : vector<11x1xi32> to vector<11x256xi32>
    %145 = arith.cmpi eq, %143, %144 : vector<11x256xi32>
    %cst_52 = arith.constant 0.000000e+00 : f32
    %146 = vector.broadcast %cst_52 : f32 to vector<11x256xf32>
    %147 = arith.select %145, %83, %146 : vector<11x256xi1>, vector<11x256xf32>
    %cst_53 = arith.constant dense<0.000000e+00> : vector<11xf32>
    %148 = vector.multi_reduction <add>, %147, %cst_53 [1] : vector<11x256xf32> to vector<11xf32>
    %149 = vector.shape_cast %148 : vector<11xf32> to vector<11x1xf32>
    %150 = arith.subf %92, %149 : vector<11x1xf32>
    %151 = arith.mulf %150, %138 : vector<11x1xf32>
    %152 = vector.shape_cast %151 : vector<11x1xf32> to vector<1x11x1xf32>
    %cst_54 = arith.constant dense<0.000000e+00> : vector<1xf32>
    %153 = vector.multi_reduction <add>, %152, %cst_54 [1, 2] : vector<1x11x1xf32> to vector<1xf32>
    %154 = vector.shape_cast %153 : vector<1xf32> to vector<1x1x1xf32>
    %155 = vector.extract %154[0, 0, 0] : f32 from vector<1x1x1xf32>
    %156 = arith.addf %75, %155 : f32
    %157 = vector.shape_cast %138 : vector<11x1xf32> to vector<1x11x1xf32>
    %cst_55 = arith.constant dense<0.000000e+00> : vector<1xf32>
    %158 = vector.multi_reduction <add>, %157, %cst_55 [1, 2] : vector<1x11x1xf32> to vector<1xf32>
    %159 = vector.shape_cast %158 : vector<1xf32> to vector<1x1x1xf32>
    %160 = vector.extract %159[0, 0, 0] : f32 from vector<1x1x1xf32>
    %161 = arith.addf %80, %160 : f32
    %c0_56 = arith.constant 0 : index
    %162 = memref.load %arg3[%c0_56] : memref<2xf32, #tpu.memory_space<smem>>
    memref.store %156, %arg3[%c0_56] : memref<2xf32, #tpu.memory_space<smem>>
    %c1_57 = arith.constant 1 : index
    %163 = memref.load %arg3[%c1_57] : memref<2xf32, #tpu.memory_space<smem>>
    memref.store %161, %arg3[%c1_57] : memref<2xf32, #tpu.memory_space<smem>>
    return
  }
  func.func @transform_0(%arg0: i32, %arg1: memref<2x8xi32, #tpu.memory_space<smem>>) -> (i32, i32, i32) {
    %c0_i32 = arith.constant 0 : i32
    %c0_i32_0 = arith.constant 0 : i32
    %c0_i32_1 = arith.constant 0 : i32
    %c0_i32_2 = arith.constant 0 : i32
    return %c0_i32, %c0_i32_0, %c0_i32_1 : i32, i32, i32
  }
  func.func @transform_1(%arg0: i32, %arg1: memref<2x8xi32, #tpu.memory_space<smem>>) -> i32 {
    %c0_i32 = arith.constant 0 : i32
    %c0_i32_0 = arith.constant 0 : i32
    return %c0_i32 : i32
  }
}

module attributes {stable_mosaic.version = 11 : i64} {
  func.func @_fused_kernel(%arg0: i32, %arg1: memref<2x8xi32, #tpu.memory_space<smem>>, %arg2: memref<2x8xi32, #tpu.memory_space<smem>>, %arg3: memref<1x4x192xf32, #tpu.memory_space<vmem>>, %arg4: memref<192x128xf32, #tpu.memory_space<vmem>>, %arg5: memref<1x128xf32, #tpu.memory_space<vmem>>, %arg6: memref<128x256xf32, #tpu.memory_space<vmem>>, %arg7: memref<1x256xf32, #tpu.memory_space<vmem>>, %arg8: memref<256x128xf32, #tpu.memory_space<vmem>>, %arg9: memref<1x128xf32, #tpu.memory_space<vmem>>, %arg10: memref<256x128xf32, #tpu.memory_space<vmem>>, %arg11: memref<1x128xf32, #tpu.memory_space<vmem>>, %arg12: memref<128x384xf32, #tpu.memory_space<vmem>>, %arg13: memref<128x128xf32, #tpu.memory_space<vmem>>, %arg14: memref<1x128xf32, #tpu.memory_space<vmem>>, %arg15: memref<128x512xf32, #tpu.memory_space<vmem>>, %arg16: memref<256x128xf32, #tpu.memory_space<vmem>>, %arg17: memref<1x128xf32, #tpu.memory_space<vmem>>, %arg18: memref<128x256xf32, #tpu.memory_space<vmem>>, %arg19: memref<1x256xf32, #tpu.memory_space<vmem>>, %arg20: memref<1x12x256xf32, #tpu.memory_space<vmem>>, %arg21: memref<1x12x128xf32, #tpu.memory_space<vmem>>, %arg22: memref<1x12x128xf32, #tpu.memory_space<vmem>>, %arg23: memref<1x12x128xf32, #tpu.memory_space<vmem>>) attributes {dimension_semantics = [#tpu.dimension_semantics<parallel>], iteration_bounds = array<i64: 2>, scalar_prefetch = 2 : i64, scratch_operands = 0 : i64, tpu.core_type = #tpu.core_type<tc>, window_params = [{transform_indices = @transform_0, window_bounds = array<i64: 1, 4, 192>}, {pipeline_mode = #tpu.pipeline_mode<synchronous>, transform_indices = @transform_1, window_bounds = array<i64: 192, 128>}, {pipeline_mode = #tpu.pipeline_mode<synchronous>, transform_indices = @transform_2, window_bounds = array<i64: 1, 128>}, {pipeline_mode = #tpu.pipeline_mode<synchronous>, transform_indices = @transform_3, window_bounds = array<i64: 128, 256>}, {pipeline_mode = #tpu.pipeline_mode<synchronous>, transform_indices = @transform_4, window_bounds = array<i64: 1, 256>}, {pipeline_mode = #tpu.pipeline_mode<synchronous>, transform_indices = @transform_5, window_bounds = array<i64: 256, 128>}, {pipeline_mode = #tpu.pipeline_mode<synchronous>, transform_indices = @transform_6, window_bounds = array<i64: 1, 128>}, {pipeline_mode = #tpu.pipeline_mode<synchronous>, transform_indices = @transform_7, window_bounds = array<i64: 256, 128>}, {pipeline_mode = #tpu.pipeline_mode<synchronous>, transform_indices = @transform_8, window_bounds = array<i64: 1, 128>}, {pipeline_mode = #tpu.pipeline_mode<synchronous>, transform_indices = @transform_9, window_bounds = array<i64: 128, 384>}, {pipeline_mode = #tpu.pipeline_mode<synchronous>, transform_indices = @transform_10, window_bounds = array<i64: 128, 128>}, {pipeline_mode = #tpu.pipeline_mode<synchronous>, transform_indices = @transform_11, window_bounds = array<i64: 1, 128>}, {pipeline_mode = #tpu.pipeline_mode<synchronous>, transform_indices = @transform_12, window_bounds = array<i64: 128, 512>}, {pipeline_mode = #tpu.pipeline_mode<synchronous>, transform_indices = @transform_13, window_bounds = array<i64: 256, 128>}, {pipeline_mode = #tpu.pipeline_mode<synchronous>, transform_indices = @transform_14, window_bounds = array<i64: 1, 128>}, {pipeline_mode = #tpu.pipeline_mode<synchronous>, transform_indices = @transform_15, window_bounds = array<i64: 128, 256>}, {pipeline_mode = #tpu.pipeline_mode<synchronous>, transform_indices = @transform_16, window_bounds = array<i64: 1, 256>}, {transform_indices = @transform_17, window_bounds = array<i64: 1, 12, 256>}, {transform_indices = @transform_18, window_bounds = array<i64: 1, 12, 128>}, {transform_indices = @transform_19, window_bounds = array<i64: 1, 12, 128>}, {transform_indices = @transform_20, window_bounds = array<i64: 1, 12, 128>}]} {
    %c0 = arith.constant 0 : index
    %c0_0 = arith.constant 0 : index
    %c0_1 = arith.constant 0 : index
    %0 = vector.load %arg3[%c0, %c0_0, %c0_1] : memref<1x4x192xf32, #tpu.memory_space<vmem>>, vector<1x4x192xf32>
    %1 = vector.shape_cast %0 : vector<1x4x192xf32> to vector<4x192xf32>
    %2 = arith.truncf %1 : vector<4x192xf32> to vector<4x192xbf16>
    %c0_2 = arith.constant 0 : index
    %c0_3 = arith.constant 0 : index
    %3 = vector.load %arg4[%c0_2, %c0_3] : memref<192x128xf32, #tpu.memory_space<vmem>>, vector<192x128xf32>
    %4 = arith.truncf %3 : vector<192x128xf32> to vector<192x128xbf16>
    %cst = arith.constant dense<0.000000e+00> : vector<4x128xf32>
    %5 = tpu.matmul %2, %4, %cst {dimension_numbers = #tpu.dot_dimension_numbers<[1], [0], [0], [1], [0, 0, 1, 1], [], []>} : vector<4x192xbf16>, vector<192x128xbf16>, vector<4x128xf32> -> vector<4x128xf32>
    %c0_4 = arith.constant 0 : index
    %c0_5 = arith.constant 0 : index
    %6 = vector.load %arg5[%c0_4, %c0_5] : memref<1x128xf32, #tpu.memory_space<vmem>>, vector<1x128xf32>
    %7 = vector.broadcast %6 : vector<1x128xf32> to vector<4x128xf32>
    %8 = arith.addf %5, %7 : vector<4x128xf32>
    %9 = arith.truncf %8 : vector<4x128xf32> to vector<4x128xbf16>
    %c0_6 = arith.constant 0 : index
    %c0_7 = arith.constant 0 : index
    %10 = vector.load %arg6[%c0_6, %c0_7] : memref<128x256xf32, #tpu.memory_space<vmem>>, vector<128x256xf32>
    %11 = arith.truncf %10 : vector<128x256xf32> to vector<128x256xbf16>
    %cst_8 = arith.constant dense<0.000000e+00> : vector<4x256xf32>
    %12 = tpu.matmul %9, %11, %cst_8 {dimension_numbers = #tpu.dot_dimension_numbers<[1], [0], [0], [1], [0, 0, 1, 1], [], []>} : vector<4x128xbf16>, vector<128x256xbf16>, vector<4x256xf32> -> vector<4x256xf32>
    %c0_9 = arith.constant 0 : index
    %c0_10 = arith.constant 0 : index
    %13 = vector.load %arg7[%c0_9, %c0_10] : memref<1x256xf32, #tpu.memory_space<vmem>>, vector<1x256xf32>
    %14 = vector.broadcast %13 : vector<1x256xf32> to vector<4x256xf32>
    %15 = arith.addf %12, %14 : vector<4x256xf32>
    %16 = arith.mulf %15, %15 : vector<4x256xf32>
    %17 = arith.mulf %15, %16 : vector<4x256xf32>
    %cst_11 = arith.constant 4.471500e-02 : f32
    %18 = vector.broadcast %cst_11 : f32 to vector<4x256xf32>
    %19 = arith.mulf %18, %17 : vector<4x256xf32>
    %20 = arith.addf %15, %19 : vector<4x256xf32>
    %cst_12 = arith.constant 0.797884583 : f32
    %21 = vector.broadcast %cst_12 : f32 to vector<4x256xf32>
    %22 = arith.mulf %21, %20 : vector<4x256xf32>
    %23 = math.tanh %22 : vector<4x256xf32>
    %cst_13 = arith.constant 1.000000e+00 : f32
    %24 = vector.broadcast %cst_13 : f32 to vector<4x256xf32>
    %25 = arith.addf %24, %23 : vector<4x256xf32>
    %cst_14 = arith.constant 5.000000e-01 : f32
    %26 = vector.broadcast %cst_14 : f32 to vector<4x256xf32>
    %27 = arith.mulf %26, %25 : vector<4x256xf32>
    %28 = arith.mulf %15, %27 : vector<4x256xf32>
    %29 = arith.truncf %28 : vector<4x256xf32> to vector<4x256xbf16>
    %c0_15 = arith.constant 0 : index
    %c0_16 = arith.constant 0 : index
    %30 = vector.load %arg8[%c0_15, %c0_16] : memref<256x128xf32, #tpu.memory_space<vmem>>, vector<256x128xf32>
    %31 = arith.truncf %30 : vector<256x128xf32> to vector<256x128xbf16>
    %cst_17 = arith.constant dense<0.000000e+00> : vector<4x128xf32>
    %32 = tpu.matmul %29, %31, %cst_17 {dimension_numbers = #tpu.dot_dimension_numbers<[1], [0], [0], [1], [0, 0, 1, 1], [], []>} : vector<4x256xbf16>, vector<256x128xbf16>, vector<4x128xf32> -> vector<4x128xf32>
    %c0_18 = arith.constant 0 : index
    %c0_19 = arith.constant 0 : index
    %33 = vector.load %arg9[%c0_18, %c0_19] : memref<1x128xf32, #tpu.memory_space<vmem>>, vector<1x128xf32>
    %34 = vector.broadcast %33 : vector<1x128xf32> to vector<4x128xf32>
    %35 = arith.addf %32, %34 : vector<4x128xf32>
    %36 = tpu.iota {dimensions = array<i32: 0>} : vector<12x4xi32>
    %37 = tpu.iota {dimensions = array<i32: 1>} : vector<12x4xi32>
    %38 = arith.cmpi eq, %36, %37 : vector<12x4xi32>
    %39 = arith.extui %38 : vector<12x4xi1> to vector<12x4xi32>
    %40 = arith.sitofp %39 : vector<12x4xi32> to vector<12x4xf32>
    %cst_20 = arith.constant dense<0.000000e+00> : vector<12x128xf32>
    %41 = tpu.matmul %40, %35, %cst_20 {dimension_numbers = #tpu.dot_dimension_numbers<[1], [0], [0], [1], [0, 0, 1, 1], [], []>} : vector<12x4xf32>, vector<4x128xf32>, vector<12x128xf32> -> vector<12x128xf32>
    %42 = tpu.iota {dimensions = array<i32: 0>} : vector<12x1xi32>
    %c-1_i32 = arith.constant -1 : i32
    %43 = vector.broadcast %c-1_i32 : i32 to vector<12x1xi32>
    %c4_i32 = arith.constant 4 : i32
    %44 = vector.broadcast %c4_i32 : i32 to vector<12x1xi32>
    %45 = arith.cmpi eq, %42, %44 : vector<12x1xi32>
    %46 = arith.index_cast %arg0 : i32 to index
    %c0_21 = arith.constant 0 : index
    %47 = memref.load %arg1[%46, %c0_21] : memref<2x8xi32, #tpu.memory_space<smem>>
    %48 = vector.broadcast %47 : i32 to vector<12x1xi32>
    %49 = arith.select %45, %48, %43 : vector<12x1xi1>, vector<12x1xi32>
    %c5_i32 = arith.constant 5 : i32
    %50 = vector.broadcast %c5_i32 : i32 to vector<12x1xi32>
    %51 = arith.cmpi eq, %42, %50 : vector<12x1xi32>
    %52 = arith.index_cast %arg0 : i32 to index
    %c1 = arith.constant 1 : index
    %53 = memref.load %arg1[%52, %c1] : memref<2x8xi32, #tpu.memory_space<smem>>
    %54 = vector.broadcast %53 : i32 to vector<12x1xi32>
    %55 = arith.select %51, %54, %49 : vector<12x1xi1>, vector<12x1xi32>
    %c6_i32 = arith.constant 6 : i32
    %56 = vector.broadcast %c6_i32 : i32 to vector<12x1xi32>
    %57 = arith.cmpi eq, %42, %56 : vector<12x1xi32>
    %58 = arith.index_cast %arg0 : i32 to index
    %c2 = arith.constant 2 : index
    %59 = memref.load %arg1[%58, %c2] : memref<2x8xi32, #tpu.memory_space<smem>>
    %60 = vector.broadcast %59 : i32 to vector<12x1xi32>
    %61 = arith.select %57, %60, %55 : vector<12x1xi1>, vector<12x1xi32>
    %c7_i32 = arith.constant 7 : i32
    %62 = vector.broadcast %c7_i32 : i32 to vector<12x1xi32>
    %63 = arith.cmpi eq, %42, %62 : vector<12x1xi32>
    %64 = arith.index_cast %arg0 : i32 to index
    %c3 = arith.constant 3 : index
    %65 = memref.load %arg1[%64, %c3] : memref<2x8xi32, #tpu.memory_space<smem>>
    %66 = vector.broadcast %65 : i32 to vector<12x1xi32>
    %67 = arith.select %63, %66, %61 : vector<12x1xi1>, vector<12x1xi32>
    %c8_i32 = arith.constant 8 : i32
    %68 = vector.broadcast %c8_i32 : i32 to vector<12x1xi32>
    %69 = arith.cmpi eq, %42, %68 : vector<12x1xi32>
    %70 = arith.index_cast %arg0 : i32 to index
    %c4 = arith.constant 4 : index
    %71 = memref.load %arg1[%70, %c4] : memref<2x8xi32, #tpu.memory_space<smem>>
    %72 = vector.broadcast %71 : i32 to vector<12x1xi32>
    %73 = arith.select %69, %72, %67 : vector<12x1xi1>, vector<12x1xi32>
    %c9_i32 = arith.constant 9 : i32
    %74 = vector.broadcast %c9_i32 : i32 to vector<12x1xi32>
    %75 = arith.cmpi eq, %42, %74 : vector<12x1xi32>
    %76 = arith.index_cast %arg0 : i32 to index
    %c5 = arith.constant 5 : index
    %77 = memref.load %arg1[%76, %c5] : memref<2x8xi32, #tpu.memory_space<smem>>
    %78 = vector.broadcast %77 : i32 to vector<12x1xi32>
    %79 = arith.select %75, %78, %73 : vector<12x1xi1>, vector<12x1xi32>
    %c10_i32 = arith.constant 10 : i32
    %80 = vector.broadcast %c10_i32 : i32 to vector<12x1xi32>
    %81 = arith.cmpi eq, %42, %80 : vector<12x1xi32>
    %82 = arith.index_cast %arg0 : i32 to index
    %c6 = arith.constant 6 : index
    %83 = memref.load %arg1[%82, %c6] : memref<2x8xi32, #tpu.memory_space<smem>>
    %84 = vector.broadcast %83 : i32 to vector<12x1xi32>
    %85 = arith.select %81, %84, %79 : vector<12x1xi1>, vector<12x1xi32>
    %c11_i32 = arith.constant 11 : i32
    %86 = vector.broadcast %c11_i32 : i32 to vector<12x1xi32>
    %87 = arith.cmpi eq, %42, %86 : vector<12x1xi32>
    %88 = arith.index_cast %arg0 : i32 to index
    %c7 = arith.constant 7 : index
    %89 = memref.load %arg1[%88, %c7] : memref<2x8xi32, #tpu.memory_space<smem>>
    %90 = vector.broadcast %89 : i32 to vector<12x1xi32>
    %91 = arith.select %87, %90, %85 : vector<12x1xi1>, vector<12x1xi32>
    %92 = tpu.iota {dimensions = array<i32: 1>} : vector<12x256xi32>
    %93 = vector.broadcast %91 : vector<12x1xi32> to vector<12x256xi32>
    %94 = arith.cmpi eq, %92, %93 : vector<12x256xi32>
    %95 = arith.extui %94 : vector<12x256xi1> to vector<12x256xi32>
    %96 = arith.sitofp %95 : vector<12x256xi32> to vector<12x256xf32>
    %c0_22 = arith.constant 0 : index
    %c0_23 = arith.constant 0 : index
    %97 = vector.load %arg10[%c0_22, %c0_23] : memref<256x128xf32, #tpu.memory_space<vmem>>, vector<256x128xf32>
    %cst_24 = arith.constant dense<0.000000e+00> : vector<12x128xf32>
    %98 = tpu.matmul %96, %97, %cst_24 {dimension_numbers = #tpu.dot_dimension_numbers<[1], [0], [0], [1], [0, 0, 1, 1], [], []>} : vector<12x256xf32>, vector<256x128xf32>, vector<12x128xf32> -> vector<12x128xf32>
    %99 = arith.addf %41, %98 : vector<12x128xf32>
    %100 = tpu.iota {dimensions = array<i32: 0>} : vector<12x12xi32>
    %101 = tpu.iota {dimensions = array<i32: 1>} : vector<12x12xi32>
    %102 = arith.cmpi sle, %101, %100 : vector<12x12xi32>
    %cst_25 = arith.constant 0.000000e+00 : f32
    %cst_26 = arith.constant -1.000000e+30 : f32
    %103 = vector.broadcast %cst_25 : f32 to vector<12x12xf32>
    %104 = vector.broadcast %cst_26 : f32 to vector<12x12xf32>
    %105 = arith.select %102, %103, %104 : vector<12x12xi1>, vector<12x12xf32>
    %106 = arith.index_cast %arg0 : i32 to index
    %c0_27 = arith.constant 0 : index
    %107 = memref.load %arg2[%106, %c0_27] : memref<2x8xi32, #tpu.memory_space<smem>>
    %c0_i32 = arith.constant 0 : i32
    %108 = arith.cmpi sgt, %107, %c0_i32 : i32
    %cst_28 = arith.constant 0.000000e+00 : f32
    %cst_29 = arith.constant -1.000000e+30 : f32
    %109 = arith.select %108, %cst_28, %cst_29 : f32
    %c4_i32_30 = arith.constant 4 : i32
    %110 = vector.broadcast %c4_i32_30 : i32 to vector<12x12xi32>
    %111 = arith.cmpi eq, %101, %110 : vector<12x12xi32>
    %cst_31 = arith.constant 0.000000e+00 : f32
    %112 = vector.broadcast %109 : f32 to vector<12x12xf32>
    %113 = vector.broadcast %cst_31 : f32 to vector<12x12xf32>
    %114 = arith.select %111, %112, %113 : vector<12x12xi1>, vector<12x12xf32>
    %115 = arith.addf %105, %114 : vector<12x12xf32>
    %116 = arith.index_cast %arg0 : i32 to index
    %c1_32 = arith.constant 1 : index
    %117 = memref.load %arg2[%116, %c1_32] : memref<2x8xi32, #tpu.memory_space<smem>>
    %c0_i32_33 = arith.constant 0 : i32
    %118 = arith.cmpi sgt, %117, %c0_i32_33 : i32
    %cst_34 = arith.constant 0.000000e+00 : f32
    %cst_35 = arith.constant -1.000000e+30 : f32
    %119 = arith.select %118, %cst_34, %cst_35 : f32
    %c5_i32_36 = arith.constant 5 : i32
    %120 = vector.broadcast %c5_i32_36 : i32 to vector<12x12xi32>
    %121 = arith.cmpi eq, %101, %120 : vector<12x12xi32>
    %cst_37 = arith.constant 0.000000e+00 : f32
    %122 = vector.broadcast %119 : f32 to vector<12x12xf32>
    %123 = vector.broadcast %cst_37 : f32 to vector<12x12xf32>
    %124 = arith.select %121, %122, %123 : vector<12x12xi1>, vector<12x12xf32>
    %125 = arith.addf %115, %124 : vector<12x12xf32>
    %126 = arith.index_cast %arg0 : i32 to index
    %c2_38 = arith.constant 2 : index
    %127 = memref.load %arg2[%126, %c2_38] : memref<2x8xi32, #tpu.memory_space<smem>>
    %c0_i32_39 = arith.constant 0 : i32
    %128 = arith.cmpi sgt, %127, %c0_i32_39 : i32
    %cst_40 = arith.constant 0.000000e+00 : f32
    %cst_41 = arith.constant -1.000000e+30 : f32
    %129 = arith.select %128, %cst_40, %cst_41 : f32
    %c6_i32_42 = arith.constant 6 : i32
    %130 = vector.broadcast %c6_i32_42 : i32 to vector<12x12xi32>
    %131 = arith.cmpi eq, %101, %130 : vector<12x12xi32>
    %cst_43 = arith.constant 0.000000e+00 : f32
    %132 = vector.broadcast %129 : f32 to vector<12x12xf32>
    %133 = vector.broadcast %cst_43 : f32 to vector<12x12xf32>
    %134 = arith.select %131, %132, %133 : vector<12x12xi1>, vector<12x12xf32>
    %135 = arith.addf %125, %134 : vector<12x12xf32>
    %136 = arith.index_cast %arg0 : i32 to index
    %c3_44 = arith.constant 3 : index
    %137 = memref.load %arg2[%136, %c3_44] : memref<2x8xi32, #tpu.memory_space<smem>>
    %c0_i32_45 = arith.constant 0 : i32
    %138 = arith.cmpi sgt, %137, %c0_i32_45 : i32
    %cst_46 = arith.constant 0.000000e+00 : f32
    %cst_47 = arith.constant -1.000000e+30 : f32
    %139 = arith.select %138, %cst_46, %cst_47 : f32
    %c7_i32_48 = arith.constant 7 : i32
    %140 = vector.broadcast %c7_i32_48 : i32 to vector<12x12xi32>
    %141 = arith.cmpi eq, %101, %140 : vector<12x12xi32>
    %cst_49 = arith.constant 0.000000e+00 : f32
    %142 = vector.broadcast %139 : f32 to vector<12x12xf32>
    %143 = vector.broadcast %cst_49 : f32 to vector<12x12xf32>
    %144 = arith.select %141, %142, %143 : vector<12x12xi1>, vector<12x12xf32>
    %145 = arith.addf %135, %144 : vector<12x12xf32>
    %146 = arith.index_cast %arg0 : i32 to index
    %c4_50 = arith.constant 4 : index
    %147 = memref.load %arg2[%146, %c4_50] : memref<2x8xi32, #tpu.memory_space<smem>>
    %c0_i32_51 = arith.constant 0 : i32
    %148 = arith.cmpi sgt, %147, %c0_i32_51 : i32
    %cst_52 = arith.constant 0.000000e+00 : f32
    %cst_53 = arith.constant -1.000000e+30 : f32
    %149 = arith.select %148, %cst_52, %cst_53 : f32
    %c8_i32_54 = arith.constant 8 : i32
    %150 = vector.broadcast %c8_i32_54 : i32 to vector<12x12xi32>
    %151 = arith.cmpi eq, %101, %150 : vector<12x12xi32>
    %cst_55 = arith.constant 0.000000e+00 : f32
    %152 = vector.broadcast %149 : f32 to vector<12x12xf32>
    %153 = vector.broadcast %cst_55 : f32 to vector<12x12xf32>
    %154 = arith.select %151, %152, %153 : vector<12x12xi1>, vector<12x12xf32>
    %155 = arith.addf %145, %154 : vector<12x12xf32>
    %156 = arith.index_cast %arg0 : i32 to index
    %c5_56 = arith.constant 5 : index
    %157 = memref.load %arg2[%156, %c5_56] : memref<2x8xi32, #tpu.memory_space<smem>>
    %c0_i32_57 = arith.constant 0 : i32
    %158 = arith.cmpi sgt, %157, %c0_i32_57 : i32
    %cst_58 = arith.constant 0.000000e+00 : f32
    %cst_59 = arith.constant -1.000000e+30 : f32
    %159 = arith.select %158, %cst_58, %cst_59 : f32
    %c9_i32_60 = arith.constant 9 : i32
    %160 = vector.broadcast %c9_i32_60 : i32 to vector<12x12xi32>
    %161 = arith.cmpi eq, %101, %160 : vector<12x12xi32>
    %cst_61 = arith.constant 0.000000e+00 : f32
    %162 = vector.broadcast %159 : f32 to vector<12x12xf32>
    %163 = vector.broadcast %cst_61 : f32 to vector<12x12xf32>
    %164 = arith.select %161, %162, %163 : vector<12x12xi1>, vector<12x12xf32>
    %165 = arith.addf %155, %164 : vector<12x12xf32>
    %166 = arith.index_cast %arg0 : i32 to index
    %c6_62 = arith.constant 6 : index
    %167 = memref.load %arg2[%166, %c6_62] : memref<2x8xi32, #tpu.memory_space<smem>>
    %c0_i32_63 = arith.constant 0 : i32
    %168 = arith.cmpi sgt, %167, %c0_i32_63 : i32
    %cst_64 = arith.constant 0.000000e+00 : f32
    %cst_65 = arith.constant -1.000000e+30 : f32
    %169 = arith.select %168, %cst_64, %cst_65 : f32
    %c10_i32_66 = arith.constant 10 : i32
    %170 = vector.broadcast %c10_i32_66 : i32 to vector<12x12xi32>
    %171 = arith.cmpi eq, %101, %170 : vector<12x12xi32>
    %cst_67 = arith.constant 0.000000e+00 : f32
    %172 = vector.broadcast %169 : f32 to vector<12x12xf32>
    %173 = vector.broadcast %cst_67 : f32 to vector<12x12xf32>
    %174 = arith.select %171, %172, %173 : vector<12x12xi1>, vector<12x12xf32>
    %175 = arith.addf %165, %174 : vector<12x12xf32>
    %176 = arith.index_cast %arg0 : i32 to index
    %c7_68 = arith.constant 7 : index
    %177 = memref.load %arg2[%176, %c7_68] : memref<2x8xi32, #tpu.memory_space<smem>>
    %c0_i32_69 = arith.constant 0 : i32
    %178 = arith.cmpi sgt, %177, %c0_i32_69 : i32
    %cst_70 = arith.constant 0.000000e+00 : f32
    %cst_71 = arith.constant -1.000000e+30 : f32
    %179 = arith.select %178, %cst_70, %cst_71 : f32
    %c11_i32_72 = arith.constant 11 : i32
    %180 = vector.broadcast %c11_i32_72 : i32 to vector<12x12xi32>
    %181 = arith.cmpi eq, %101, %180 : vector<12x12xi32>
    %cst_73 = arith.constant 0.000000e+00 : f32
    %182 = vector.broadcast %179 : f32 to vector<12x12xf32>
    %183 = vector.broadcast %cst_73 : f32 to vector<12x12xf32>
    %184 = arith.select %181, %182, %183 : vector<12x12xi1>, vector<12x12xf32>
    %185 = arith.addf %175, %184 : vector<12x12xf32>
    %c0_74 = arith.constant 0 : index
    %c0_75 = arith.constant 0 : index
    %186 = vector.load %arg11[%c0_74, %c0_75] : memref<1x128xf32, #tpu.memory_space<vmem>>, vector<1x128xf32>
    %187 = arith.mulf %99, %99 : vector<12x128xf32>
    %cst_76 = arith.constant dense<0.000000e+00> : vector<12xf32>
    %188 = vector.multi_reduction <add>, %187, %cst_76 [1] : vector<12x128xf32> to vector<12xf32>
    %189 = vector.shape_cast %188 : vector<12xf32> to vector<12x1xf32>
    %cst_77 = arith.constant 1.280000e+02 : f32
    %190 = vector.broadcast %cst_77 : f32 to vector<12x1xf32>
    %191 = arith.divf %189, %190 : vector<12x1xf32>
    %cst_78 = arith.constant 9.99999997E-7 : f32
    %192 = vector.broadcast %cst_78 : f32 to vector<12x1xf32>
    %193 = arith.addf %191, %192 : vector<12x1xf32>
    %194 = math.rsqrt %193 : vector<12x1xf32>
    %195 = vector.broadcast %194 : vector<12x1xf32> to vector<12x128xf32>
    %196 = arith.mulf %99, %195 : vector<12x128xf32>
    %197 = vector.broadcast %186 : vector<1x128xf32> to vector<12x128xf32>
    %198 = arith.mulf %196, %197 : vector<12x128xf32>
    %199 = arith.truncf %198 : vector<12x128xf32> to vector<12x128xbf16>
    %c0_79 = arith.constant 0 : index
    %c0_80 = arith.constant 0 : index
    %200 = vector.load %arg12[%c0_79, %c0_80] : memref<128x384xf32, #tpu.memory_space<vmem>>, vector<128x384xf32>
    %201 = arith.truncf %200 : vector<128x384xf32> to vector<128x384xbf16>
    %cst_81 = arith.constant dense<0.000000e+00> : vector<12x384xf32>
    %202 = tpu.matmul %199, %201, %cst_81 {dimension_numbers = #tpu.dot_dimension_numbers<[1], [0], [0], [1], [0, 0, 1, 1], [], []>} : vector<12x128xbf16>, vector<128x384xbf16>, vector<12x384xf32> -> vector<12x384xf32>
    %203 = vector.extract_strided_slice %202 {offsets = [0, 0], sizes = [12, 128], strides = [1, 1]} : vector<12x384xf32> to vector<12x128xf32>
    %204 = vector.extract_strided_slice %202 {offsets = [0, 128], sizes = [12, 128], strides = [1, 1]} : vector<12x384xf32> to vector<12x128xf32>
    %205 = vector.extract_strided_slice %202 {offsets = [0, 256], sizes = [12, 128], strides = [1, 1]} : vector<12x384xf32> to vector<12x128xf32>
    %206 = arith.truncf %204 : vector<12x128xf32> to vector<12x128xbf16>
    %207 = tpu.iota {dimensions = array<i32: 1>} : vector<1x128xi32>
    %cst_82 = arith.constant 0.000000e+00 : f32
    %208 = vector.broadcast %cst_82 : f32 to vector<12x128xf32>
    %c0_i32_83 = arith.constant 0 : i32
    %209 = vector.broadcast %c0_i32_83 : i32 to vector<1x128xi32>
    %210 = arith.cmpi sge, %207, %209 : vector<1x128xi32>
    %c32_i32 = arith.constant 32 : i32
    %211 = vector.broadcast %c32_i32 : i32 to vector<1x128xi32>
    %212 = arith.cmpi slt, %207, %211 : vector<1x128xi32>
    %213 = arith.andi %210, %212 : vector<1x128xi1>
    %214 = arith.extui %213 : vector<1x128xi1> to vector<1x128xi32>
    %215 = arith.sitofp %214 : vector<1x128xi32> to vector<1x128xf32>
    %216 = vector.broadcast %215 : vector<1x128xf32> to vector<12x128xf32>
    %217 = arith.mulf %203, %216 : vector<12x128xf32>
    %218 = arith.truncf %217 : vector<12x128xf32> to vector<12x128xbf16>
    %cst_84 = arith.constant dense<0.000000e+00> : vector<12x12xf32>
    %219 = tpu.matmul %218, %206, %cst_84 {dimension_numbers = #tpu.dot_dimension_numbers<[1], [1], [0], [0], [0, 0, 1, 0], [], []>} : vector<12x128xbf16>, vector<12x128xbf16>, vector<12x12xf32> -> vector<12x12xf32>
    %cst_85 = arith.constant 0.176776692 : f32
    %220 = vector.broadcast %cst_85 : f32 to vector<12x12xf32>
    %221 = arith.mulf %219, %220 : vector<12x12xf32>
    %222 = arith.addf %221, %185 : vector<12x12xf32>
    %cst_86 = arith.constant dense<0xFF800000> : vector<12xf32>
    %223 = vector.multi_reduction <maximumf>, %222, %cst_86 [1] : vector<12x12xf32> to vector<12xf32>
    %cst_87 = arith.constant 0xFF800000 : f32
    %224 = vector.broadcast %cst_87 : f32 to vector<12xf32>
    %225 = arith.maximumf %224, %223 : vector<12xf32>
    %226 = vector.shape_cast %225 : vector<12xf32> to vector<12x1xf32>
    %227 = vector.broadcast %226 : vector<12x1xf32> to vector<12x12xf32>
    %228 = arith.subf %222, %227 : vector<12x12xf32>
    %229 = math.exp %228 : vector<12x12xf32>
    %cst_88 = arith.constant dense<0.000000e+00> : vector<12xf32>
    %230 = vector.multi_reduction <add>, %229, %cst_88 [1] : vector<12x12xf32> to vector<12xf32>
    %231 = vector.shape_cast %230 : vector<12xf32> to vector<12x1xf32>
    %232 = vector.broadcast %231 : vector<12x1xf32> to vector<12x12xf32>
    %233 = arith.divf %229, %232 : vector<12x12xf32>
    %234 = vector.broadcast %215 : vector<1x128xf32> to vector<12x128xf32>
    %235 = arith.mulf %205, %234 : vector<12x128xf32>
    %236 = arith.truncf %235 : vector<12x128xf32> to vector<12x128xbf16>
    %237 = arith.truncf %233 : vector<12x12xf32> to vector<12x12xbf16>
    %cst_89 = arith.constant dense<0.000000e+00> : vector<12x128xf32>
    %238 = tpu.matmul %237, %236, %cst_89 {dimension_numbers = #tpu.dot_dimension_numbers<[1], [0], [0], [1], [0, 0, 1, 1], [], []>} : vector<12x12xbf16>, vector<12x128xbf16>, vector<12x128xf32> -> vector<12x128xf32>
    %239 = arith.addf %208, %238 : vector<12x128xf32>
    %c32_i32_90 = arith.constant 32 : i32
    %240 = vector.broadcast %c32_i32_90 : i32 to vector<1x128xi32>
    %241 = arith.cmpi sge, %207, %240 : vector<1x128xi32>
    %c64_i32 = arith.constant 64 : i32
    %242 = vector.broadcast %c64_i32 : i32 to vector<1x128xi32>
    %243 = arith.cmpi slt, %207, %242 : vector<1x128xi32>
    %244 = arith.andi %241, %243 : vector<1x128xi1>
    %245 = arith.extui %244 : vector<1x128xi1> to vector<1x128xi32>
    %246 = arith.sitofp %245 : vector<1x128xi32> to vector<1x128xf32>
    %247 = vector.broadcast %246 : vector<1x128xf32> to vector<12x128xf32>
    %248 = arith.mulf %203, %247 : vector<12x128xf32>
    %249 = arith.truncf %248 : vector<12x128xf32> to vector<12x128xbf16>
    %cst_91 = arith.constant dense<0.000000e+00> : vector<12x12xf32>
    %250 = tpu.matmul %249, %206, %cst_91 {dimension_numbers = #tpu.dot_dimension_numbers<[1], [1], [0], [0], [0, 0, 1, 0], [], []>} : vector<12x128xbf16>, vector<12x128xbf16>, vector<12x12xf32> -> vector<12x12xf32>
    %cst_92 = arith.constant 0.176776692 : f32
    %251 = vector.broadcast %cst_92 : f32 to vector<12x12xf32>
    %252 = arith.mulf %250, %251 : vector<12x12xf32>
    %253 = arith.addf %252, %185 : vector<12x12xf32>
    %cst_93 = arith.constant dense<0xFF800000> : vector<12xf32>
    %254 = vector.multi_reduction <maximumf>, %253, %cst_93 [1] : vector<12x12xf32> to vector<12xf32>
    %cst_94 = arith.constant 0xFF800000 : f32
    %255 = vector.broadcast %cst_94 : f32 to vector<12xf32>
    %256 = arith.maximumf %255, %254 : vector<12xf32>
    %257 = vector.shape_cast %256 : vector<12xf32> to vector<12x1xf32>
    %258 = vector.broadcast %257 : vector<12x1xf32> to vector<12x12xf32>
    %259 = arith.subf %253, %258 : vector<12x12xf32>
    %260 = math.exp %259 : vector<12x12xf32>
    %cst_95 = arith.constant dense<0.000000e+00> : vector<12xf32>
    %261 = vector.multi_reduction <add>, %260, %cst_95 [1] : vector<12x12xf32> to vector<12xf32>
    %262 = vector.shape_cast %261 : vector<12xf32> to vector<12x1xf32>
    %263 = vector.broadcast %262 : vector<12x1xf32> to vector<12x12xf32>
    %264 = arith.divf %260, %263 : vector<12x12xf32>
    %265 = vector.broadcast %246 : vector<1x128xf32> to vector<12x128xf32>
    %266 = arith.mulf %205, %265 : vector<12x128xf32>
    %267 = arith.truncf %266 : vector<12x128xf32> to vector<12x128xbf16>
    %268 = arith.truncf %264 : vector<12x12xf32> to vector<12x12xbf16>
    %cst_96 = arith.constant dense<0.000000e+00> : vector<12x128xf32>
    %269 = tpu.matmul %268, %267, %cst_96 {dimension_numbers = #tpu.dot_dimension_numbers<[1], [0], [0], [1], [0, 0, 1, 1], [], []>} : vector<12x12xbf16>, vector<12x128xbf16>, vector<12x128xf32> -> vector<12x128xf32>
    %270 = arith.addf %239, %269 : vector<12x128xf32>
    %c64_i32_97 = arith.constant 64 : i32
    %271 = vector.broadcast %c64_i32_97 : i32 to vector<1x128xi32>
    %272 = arith.cmpi sge, %207, %271 : vector<1x128xi32>
    %c96_i32 = arith.constant 96 : i32
    %273 = vector.broadcast %c96_i32 : i32 to vector<1x128xi32>
    %274 = arith.cmpi slt, %207, %273 : vector<1x128xi32>
    %275 = arith.andi %272, %274 : vector<1x128xi1>
    %276 = arith.extui %275 : vector<1x128xi1> to vector<1x128xi32>
    %277 = arith.sitofp %276 : vector<1x128xi32> to vector<1x128xf32>
    %278 = vector.broadcast %277 : vector<1x128xf32> to vector<12x128xf32>
    %279 = arith.mulf %203, %278 : vector<12x128xf32>
    %280 = arith.truncf %279 : vector<12x128xf32> to vector<12x128xbf16>
    %cst_98 = arith.constant dense<0.000000e+00> : vector<12x12xf32>
    %281 = tpu.matmul %280, %206, %cst_98 {dimension_numbers = #tpu.dot_dimension_numbers<[1], [1], [0], [0], [0, 0, 1, 0], [], []>} : vector<12x128xbf16>, vector<12x128xbf16>, vector<12x12xf32> -> vector<12x12xf32>
    %cst_99 = arith.constant 0.176776692 : f32
    %282 = vector.broadcast %cst_99 : f32 to vector<12x12xf32>
    %283 = arith.mulf %281, %282 : vector<12x12xf32>
    %284 = arith.addf %283, %185 : vector<12x12xf32>
    %cst_100 = arith.constant dense<0xFF800000> : vector<12xf32>
    %285 = vector.multi_reduction <maximumf>, %284, %cst_100 [1] : vector<12x12xf32> to vector<12xf32>
    %cst_101 = arith.constant 0xFF800000 : f32
    %286 = vector.broadcast %cst_101 : f32 to vector<12xf32>
    %287 = arith.maximumf %286, %285 : vector<12xf32>
    %288 = vector.shape_cast %287 : vector<12xf32> to vector<12x1xf32>
    %289 = vector.broadcast %288 : vector<12x1xf32> to vector<12x12xf32>
    %290 = arith.subf %284, %289 : vector<12x12xf32>
    %291 = math.exp %290 : vector<12x12xf32>
    %cst_102 = arith.constant dense<0.000000e+00> : vector<12xf32>
    %292 = vector.multi_reduction <add>, %291, %cst_102 [1] : vector<12x12xf32> to vector<12xf32>
    %293 = vector.shape_cast %292 : vector<12xf32> to vector<12x1xf32>
    %294 = vector.broadcast %293 : vector<12x1xf32> to vector<12x12xf32>
    %295 = arith.divf %291, %294 : vector<12x12xf32>
    %296 = vector.broadcast %277 : vector<1x128xf32> to vector<12x128xf32>
    %297 = arith.mulf %205, %296 : vector<12x128xf32>
    %298 = arith.truncf %297 : vector<12x128xf32> to vector<12x128xbf16>
    %299 = arith.truncf %295 : vector<12x12xf32> to vector<12x12xbf16>
    %cst_103 = arith.constant dense<0.000000e+00> : vector<12x128xf32>
    %300 = tpu.matmul %299, %298, %cst_103 {dimension_numbers = #tpu.dot_dimension_numbers<[1], [0], [0], [1], [0, 0, 1, 1], [], []>} : vector<12x12xbf16>, vector<12x128xbf16>, vector<12x128xf32> -> vector<12x128xf32>
    %301 = arith.addf %270, %300 : vector<12x128xf32>
    %c96_i32_104 = arith.constant 96 : i32
    %302 = vector.broadcast %c96_i32_104 : i32 to vector<1x128xi32>
    %303 = arith.cmpi sge, %207, %302 : vector<1x128xi32>
    %c128_i32 = arith.constant 128 : i32
    %304 = vector.broadcast %c128_i32 : i32 to vector<1x128xi32>
    %305 = arith.cmpi slt, %207, %304 : vector<1x128xi32>
    %306 = arith.andi %303, %305 : vector<1x128xi1>
    %307 = arith.extui %306 : vector<1x128xi1> to vector<1x128xi32>
    %308 = arith.sitofp %307 : vector<1x128xi32> to vector<1x128xf32>
    %309 = vector.broadcast %308 : vector<1x128xf32> to vector<12x128xf32>
    %310 = arith.mulf %203, %309 : vector<12x128xf32>
    %311 = arith.truncf %310 : vector<12x128xf32> to vector<12x128xbf16>
    %cst_105 = arith.constant dense<0.000000e+00> : vector<12x12xf32>
    %312 = tpu.matmul %311, %206, %cst_105 {dimension_numbers = #tpu.dot_dimension_numbers<[1], [1], [0], [0], [0, 0, 1, 0], [], []>} : vector<12x128xbf16>, vector<12x128xbf16>, vector<12x12xf32> -> vector<12x12xf32>
    %cst_106 = arith.constant 0.176776692 : f32
    %313 = vector.broadcast %cst_106 : f32 to vector<12x12xf32>
    %314 = arith.mulf %312, %313 : vector<12x12xf32>
    %315 = arith.addf %314, %185 : vector<12x12xf32>
    %cst_107 = arith.constant dense<0xFF800000> : vector<12xf32>
    %316 = vector.multi_reduction <maximumf>, %315, %cst_107 [1] : vector<12x12xf32> to vector<12xf32>
    %cst_108 = arith.constant 0xFF800000 : f32
    %317 = vector.broadcast %cst_108 : f32 to vector<12xf32>
    %318 = arith.maximumf %317, %316 : vector<12xf32>
    %319 = vector.shape_cast %318 : vector<12xf32> to vector<12x1xf32>
    %320 = vector.broadcast %319 : vector<12x1xf32> to vector<12x12xf32>
    %321 = arith.subf %315, %320 : vector<12x12xf32>
    %322 = math.exp %321 : vector<12x12xf32>
    %cst_109 = arith.constant dense<0.000000e+00> : vector<12xf32>
    %323 = vector.multi_reduction <add>, %322, %cst_109 [1] : vector<12x12xf32> to vector<12xf32>
    %324 = vector.shape_cast %323 : vector<12xf32> to vector<12x1xf32>
    %325 = vector.broadcast %324 : vector<12x1xf32> to vector<12x12xf32>
    %326 = arith.divf %322, %325 : vector<12x12xf32>
    %327 = vector.broadcast %308 : vector<1x128xf32> to vector<12x128xf32>
    %328 = arith.mulf %205, %327 : vector<12x128xf32>
    %329 = arith.truncf %328 : vector<12x128xf32> to vector<12x128xbf16>
    %330 = arith.truncf %326 : vector<12x12xf32> to vector<12x12xbf16>
    %cst_110 = arith.constant dense<0.000000e+00> : vector<12x128xf32>
    %331 = tpu.matmul %330, %329, %cst_110 {dimension_numbers = #tpu.dot_dimension_numbers<[1], [0], [0], [1], [0, 0, 1, 1], [], []>} : vector<12x12xbf16>, vector<12x128xbf16>, vector<12x128xf32> -> vector<12x128xf32>
    %332 = arith.addf %301, %331 : vector<12x128xf32>
    %333 = arith.truncf %332 : vector<12x128xf32> to vector<12x128xbf16>
    %c0_111 = arith.constant 0 : index
    %c0_112 = arith.constant 0 : index
    %334 = vector.load %arg13[%c0_111, %c0_112] : memref<128x128xf32, #tpu.memory_space<vmem>>, vector<128x128xf32>
    %335 = arith.truncf %334 : vector<128x128xf32> to vector<128x128xbf16>
    %cst_113 = arith.constant dense<0.000000e+00> : vector<12x128xf32>
    %336 = tpu.matmul %333, %335, %cst_113 {dimension_numbers = #tpu.dot_dimension_numbers<[1], [0], [0], [1], [0, 0, 1, 1], [], []>} : vector<12x128xbf16>, vector<128x128xbf16>, vector<12x128xf32> -> vector<12x128xf32>
    %337 = arith.addf %99, %336 : vector<12x128xf32>
    %c0_114 = arith.constant 0 : index
    %c0_115 = arith.constant 0 : index
    %338 = vector.load %arg14[%c0_114, %c0_115] : memref<1x128xf32, #tpu.memory_space<vmem>>, vector<1x128xf32>
    %339 = arith.mulf %337, %337 : vector<12x128xf32>
    %cst_116 = arith.constant dense<0.000000e+00> : vector<12xf32>
    %340 = vector.multi_reduction <add>, %339, %cst_116 [1] : vector<12x128xf32> to vector<12xf32>
    %341 = vector.shape_cast %340 : vector<12xf32> to vector<12x1xf32>
    %cst_117 = arith.constant 1.280000e+02 : f32
    %342 = vector.broadcast %cst_117 : f32 to vector<12x1xf32>
    %343 = arith.divf %341, %342 : vector<12x1xf32>
    %cst_118 = arith.constant 9.99999997E-7 : f32
    %344 = vector.broadcast %cst_118 : f32 to vector<12x1xf32>
    %345 = arith.addf %343, %344 : vector<12x1xf32>
    %346 = math.rsqrt %345 : vector<12x1xf32>
    %347 = vector.broadcast %346 : vector<12x1xf32> to vector<12x128xf32>
    %348 = arith.mulf %337, %347 : vector<12x128xf32>
    %349 = vector.broadcast %338 : vector<1x128xf32> to vector<12x128xf32>
    %350 = arith.mulf %348, %349 : vector<12x128xf32>
    %351 = arith.truncf %350 : vector<12x128xf32> to vector<12x128xbf16>
    %c0_119 = arith.constant 0 : index
    %c0_120 = arith.constant 0 : index
    %352 = vector.load %arg15[%c0_119, %c0_120] : memref<128x512xf32, #tpu.memory_space<vmem>>, vector<128x512xf32>
    %353 = arith.truncf %352 : vector<128x512xf32> to vector<128x512xbf16>
    %cst_121 = arith.constant dense<0.000000e+00> : vector<12x512xf32>
    %354 = tpu.matmul %351, %353, %cst_121 {dimension_numbers = #tpu.dot_dimension_numbers<[1], [0], [0], [1], [0, 0, 1, 1], [], []>} : vector<12x128xbf16>, vector<128x512xbf16>, vector<12x512xf32> -> vector<12x512xf32>
    %355 = vector.extract_strided_slice %354 {offsets = [0, 0], sizes = [12, 256], strides = [1, 1]} : vector<12x512xf32> to vector<12x256xf32>
    %356 = vector.extract_strided_slice %354 {offsets = [0, 256], sizes = [12, 256], strides = [1, 1]} : vector<12x512xf32> to vector<12x256xf32>
    %357 = arith.negf %355 : vector<12x256xf32>
    %358 = math.exp %357 : vector<12x256xf32>
    %cst_122 = arith.constant 1.000000e+00 : f32
    %359 = vector.broadcast %cst_122 : f32 to vector<12x256xf32>
    %360 = arith.addf %359, %358 : vector<12x256xf32>
    %361 = arith.divf %359, %360 : vector<12x256xf32>
    %362 = arith.mulf %355, %361 : vector<12x256xf32>
    %363 = arith.mulf %362, %356 : vector<12x256xf32>
    %364 = arith.truncf %363 : vector<12x256xf32> to vector<12x256xbf16>
    %c0_123 = arith.constant 0 : index
    %c0_124 = arith.constant 0 : index
    %365 = vector.load %arg16[%c0_123, %c0_124] : memref<256x128xf32, #tpu.memory_space<vmem>>, vector<256x128xf32>
    %366 = arith.truncf %365 : vector<256x128xf32> to vector<256x128xbf16>
    %cst_125 = arith.constant dense<0.000000e+00> : vector<12x128xf32>
    %367 = tpu.matmul %364, %366, %cst_125 {dimension_numbers = #tpu.dot_dimension_numbers<[1], [0], [0], [1], [0, 0, 1, 1], [], []>} : vector<12x256xbf16>, vector<256x128xbf16>, vector<12x128xf32> -> vector<12x128xf32>
    %368 = arith.addf %337, %367 : vector<12x128xf32>
    %c0_126 = arith.constant 0 : index
    %c0_127 = arith.constant 0 : index
    %369 = vector.load %arg17[%c0_126, %c0_127] : memref<1x128xf32, #tpu.memory_space<vmem>>, vector<1x128xf32>
    %370 = arith.mulf %368, %368 : vector<12x128xf32>
    %cst_128 = arith.constant dense<0.000000e+00> : vector<12xf32>
    %371 = vector.multi_reduction <add>, %370, %cst_128 [1] : vector<12x128xf32> to vector<12xf32>
    %372 = vector.shape_cast %371 : vector<12xf32> to vector<12x1xf32>
    %cst_129 = arith.constant 1.280000e+02 : f32
    %373 = vector.broadcast %cst_129 : f32 to vector<12x1xf32>
    %374 = arith.divf %372, %373 : vector<12x1xf32>
    %cst_130 = arith.constant 9.99999997E-7 : f32
    %375 = vector.broadcast %cst_130 : f32 to vector<12x1xf32>
    %376 = arith.addf %374, %375 : vector<12x1xf32>
    %377 = math.rsqrt %376 : vector<12x1xf32>
    %378 = vector.broadcast %377 : vector<12x1xf32> to vector<12x128xf32>
    %379 = arith.mulf %368, %378 : vector<12x128xf32>
    %380 = vector.broadcast %369 : vector<1x128xf32> to vector<12x128xf32>
    %381 = arith.mulf %379, %380 : vector<12x128xf32>
    %382 = arith.truncf %381 : vector<12x128xf32> to vector<12x128xbf16>
    %c0_131 = arith.constant 0 : index
    %c0_132 = arith.constant 0 : index
    %383 = vector.load %arg18[%c0_131, %c0_132] : memref<128x256xf32, #tpu.memory_space<vmem>>, vector<128x256xf32>
    %384 = arith.truncf %383 : vector<128x256xf32> to vector<128x256xbf16>
    %cst_133 = arith.constant dense<0.000000e+00> : vector<12x256xf32>
    %385 = tpu.matmul %382, %384, %cst_133 {dimension_numbers = #tpu.dot_dimension_numbers<[1], [0], [0], [1], [0, 0, 1, 1], [], []>} : vector<12x128xbf16>, vector<128x256xbf16>, vector<12x256xf32> -> vector<12x256xf32>
    %c0_134 = arith.constant 0 : index
    %c0_135 = arith.constant 0 : index
    %386 = vector.load %arg19[%c0_134, %c0_135] : memref<1x256xf32, #tpu.memory_space<vmem>>, vector<1x256xf32>
    %387 = vector.broadcast %386 : vector<1x256xf32> to vector<12x256xf32>
    %388 = arith.addf %385, %387 : vector<12x256xf32>
    %c0_136 = arith.constant 0 : index
    %c0_137 = arith.constant 0 : index
    %c0_138 = arith.constant 0 : index
    %389 = vector.load %arg20[%c0_136, %c0_137, %c0_138] : memref<1x12x256xf32, #tpu.memory_space<vmem>>, vector<1x12x256xf32>
    %390 = vector.shape_cast %389 : vector<1x12x256xf32> to vector<12x256xf32>
    %391 = vector.shape_cast %388 : vector<12x256xf32> to vector<1x12x256xf32>
    tpu.vector_store %arg20[%c0_136, %c0_137, %c0_138], %391 {strides = array<i32>} : memref<1x12x256xf32, #tpu.memory_space<vmem>>, vector<1x12x256xf32>,
    %c0_139 = arith.constant 0 : index
    %c0_140 = arith.constant 0 : index
    %c0_141 = arith.constant 0 : index
    %392 = vector.load %arg21[%c0_139, %c0_140, %c0_141] : memref<1x12x128xf32, #tpu.memory_space<vmem>>, vector<1x12x128xf32>
    %393 = vector.shape_cast %392 : vector<1x12x128xf32> to vector<12x128xf32>
    %394 = vector.shape_cast %99 : vector<12x128xf32> to vector<1x12x128xf32>
    tpu.vector_store %arg21[%c0_139, %c0_140, %c0_141], %394 {strides = array<i32>} : memref<1x12x128xf32, #tpu.memory_space<vmem>>, vector<1x12x128xf32>,
    %c0_142 = arith.constant 0 : index
    %c0_143 = arith.constant 0 : index
    %c0_144 = arith.constant 0 : index
    %395 = vector.load %arg22[%c0_142, %c0_143, %c0_144] : memref<1x12x128xf32, #tpu.memory_space<vmem>>, vector<1x12x128xf32>
    %396 = vector.shape_cast %395 : vector<1x12x128xf32> to vector<12x128xf32>
    %397 = vector.shape_cast %368 : vector<12x128xf32> to vector<1x12x128xf32>
    tpu.vector_store %arg22[%c0_142, %c0_143, %c0_144], %397 {strides = array<i32>} : memref<1x12x128xf32, #tpu.memory_space<vmem>>, vector<1x12x128xf32>,
    %c0_145 = arith.constant 0 : index
    %c0_146 = arith.constant 0 : index
    %c0_147 = arith.constant 0 : index
    %398 = vector.load %arg23[%c0_145, %c0_146, %c0_147] : memref<1x12x128xf32, #tpu.memory_space<vmem>>, vector<1x12x128xf32>
    %399 = vector.shape_cast %398 : vector<1x12x128xf32> to vector<12x128xf32>
    %400 = vector.shape_cast %381 : vector<12x128xf32> to vector<1x12x128xf32>
    tpu.vector_store %arg23[%c0_145, %c0_146, %c0_147], %400 {strides = array<i32>} : memref<1x12x128xf32, #tpu.memory_space<vmem>>, vector<1x12x128xf32>,
    return
  }
  func.func @transform_0(%arg0: i32, %arg1: memref<2x8xi32, #tpu.memory_space<smem>>, %arg2: memref<2x8xi32, #tpu.memory_space<smem>>) -> (i32, i32, i32) {
    %c0_i32 = arith.constant 0 : i32
    %c0_i32_0 = arith.constant 0 : i32
    %c0_i32_1 = arith.constant 0 : i32
    return %arg0, %c0_i32, %c0_i32_0 : i32, i32, i32
  }
  func.func @transform_1(%arg0: i32, %arg1: memref<2x8xi32, #tpu.memory_space<smem>>, %arg2: memref<2x8xi32, #tpu.memory_space<smem>>) -> (i32, i32) {
    %c0_i32 = arith.constant 0 : i32
    %c0_i32_0 = arith.constant 0 : i32
    %c0_i32_1 = arith.constant 0 : i32
    return %c0_i32, %c0_i32_0 : i32, i32
  }
  func.func @transform_2(%arg0: i32, %arg1: memref<2x8xi32, #tpu.memory_space<smem>>, %arg2: memref<2x8xi32, #tpu.memory_space<smem>>) -> (i32, i32) {
    %c0_i32 = arith.constant 0 : i32
    %c0_i32_0 = arith.constant 0 : i32
    %c0_i32_1 = arith.constant 0 : i32
    return %c0_i32, %c0_i32_0 : i32, i32
  }
  func.func @transform_3(%arg0: i32, %arg1: memref<2x8xi32, #tpu.memory_space<smem>>, %arg2: memref<2x8xi32, #tpu.memory_space<smem>>) -> (i32, i32) {
    %c0_i32 = arith.constant 0 : i32
    %c0_i32_0 = arith.constant 0 : i32
    %c0_i32_1 = arith.constant 0 : i32
    return %c0_i32, %c0_i32_0 : i32, i32
  }
  func.func @transform_4(%arg0: i32, %arg1: memref<2x8xi32, #tpu.memory_space<smem>>, %arg2: memref<2x8xi32, #tpu.memory_space<smem>>) -> (i32, i32) {
    %c0_i32 = arith.constant 0 : i32
    %c0_i32_0 = arith.constant 0 : i32
    %c0_i32_1 = arith.constant 0 : i32
    return %c0_i32, %c0_i32_0 : i32, i32
  }
  func.func @transform_5(%arg0: i32, %arg1: memref<2x8xi32, #tpu.memory_space<smem>>, %arg2: memref<2x8xi32, #tpu.memory_space<smem>>) -> (i32, i32) {
    %c0_i32 = arith.constant 0 : i32
    %c0_i32_0 = arith.constant 0 : i32
    %c0_i32_1 = arith.constant 0 : i32
    return %c0_i32, %c0_i32_0 : i32, i32
  }
  func.func @transform_6(%arg0: i32, %arg1: memref<2x8xi32, #tpu.memory_space<smem>>, %arg2: memref<2x8xi32, #tpu.memory_space<smem>>) -> (i32, i32) {
    %c0_i32 = arith.constant 0 : i32
    %c0_i32_0 = arith.constant 0 : i32
    %c0_i32_1 = arith.constant 0 : i32
    return %c0_i32, %c0_i32_0 : i32, i32
  }
  func.func @transform_7(%arg0: i32, %arg1: memref<2x8xi32, #tpu.memory_space<smem>>, %arg2: memref<2x8xi32, #tpu.memory_space<smem>>) -> (i32, i32) {
    %c0_i32 = arith.constant 0 : i32
    %c0_i32_0 = arith.constant 0 : i32
    %c0_i32_1 = arith.constant 0 : i32
    return %c0_i32, %c0_i32_0 : i32, i32
  }
  func.func @transform_8(%arg0: i32, %arg1: memref<2x8xi32, #tpu.memory_space<smem>>, %arg2: memref<2x8xi32, #tpu.memory_space<smem>>) -> (i32, i32) {
    %c0_i32 = arith.constant 0 : i32
    %c0_i32_0 = arith.constant 0 : i32
    %c0_i32_1 = arith.constant 0 : i32
    return %c0_i32, %c0_i32_0 : i32, i32
  }
  func.func @transform_9(%arg0: i32, %arg1: memref<2x8xi32, #tpu.memory_space<smem>>, %arg2: memref<2x8xi32, #tpu.memory_space<smem>>) -> (i32, i32) {
    %c0_i32 = arith.constant 0 : i32
    %c0_i32_0 = arith.constant 0 : i32
    %c0_i32_1 = arith.constant 0 : i32
    return %c0_i32, %c0_i32_0 : i32, i32
  }
  func.func @transform_10(%arg0: i32, %arg1: memref<2x8xi32, #tpu.memory_space<smem>>, %arg2: memref<2x8xi32, #tpu.memory_space<smem>>) -> (i32, i32) {
    %c0_i32 = arith.constant 0 : i32
    %c0_i32_0 = arith.constant 0 : i32
    %c0_i32_1 = arith.constant 0 : i32
    return %c0_i32, %c0_i32_0 : i32, i32
  }
  func.func @transform_11(%arg0: i32, %arg1: memref<2x8xi32, #tpu.memory_space<smem>>, %arg2: memref<2x8xi32, #tpu.memory_space<smem>>) -> (i32, i32) {
    %c0_i32 = arith.constant 0 : i32
    %c0_i32_0 = arith.constant 0 : i32
    %c0_i32_1 = arith.constant 0 : i32
    return %c0_i32, %c0_i32_0 : i32, i32
  }
  func.func @transform_12(%arg0: i32, %arg1: memref<2x8xi32, #tpu.memory_space<smem>>, %arg2: memref<2x8xi32, #tpu.memory_space<smem>>) -> (i32, i32) {
    %c0_i32 = arith.constant 0 : i32
    %c0_i32_0 = arith.constant 0 : i32
    %c0_i32_1 = arith.constant 0 : i32
    return %c0_i32, %c0_i32_0 : i32, i32
  }
  func.func @transform_13(%arg0: i32, %arg1: memref<2x8xi32, #tpu.memory_space<smem>>, %arg2: memref<2x8xi32, #tpu.memory_space<smem>>) -> (i32, i32) {
    %c0_i32 = arith.constant 0 : i32
    %c0_i32_0 = arith.constant 0 : i32
    %c0_i32_1 = arith.constant 0 : i32
    return %c0_i32, %c0_i32_0 : i32, i32
  }
  func.func @transform_14(%arg0: i32, %arg1: memref<2x8xi32, #tpu.memory_space<smem>>, %arg2: memref<2x8xi32, #tpu.memory_space<smem>>) -> (i32, i32) {
    %c0_i32 = arith.constant 0 : i32
    %c0_i32_0 = arith.constant 0 : i32
    %c0_i32_1 = arith.constant 0 : i32
    return %c0_i32, %c0_i32_0 : i32, i32
  }
  func.func @transform_15(%arg0: i32, %arg1: memref<2x8xi32, #tpu.memory_space<smem>>, %arg2: memref<2x8xi32, #tpu.memory_space<smem>>) -> (i32, i32) {
    %c0_i32 = arith.constant 0 : i32
    %c0_i32_0 = arith.constant 0 : i32
    %c0_i32_1 = arith.constant 0 : i32
    return %c0_i32, %c0_i32_0 : i32, i32
  }
  func.func @transform_16(%arg0: i32, %arg1: memref<2x8xi32, #tpu.memory_space<smem>>, %arg2: memref<2x8xi32, #tpu.memory_space<smem>>) -> (i32, i32) {
    %c0_i32 = arith.constant 0 : i32
    %c0_i32_0 = arith.constant 0 : i32
    %c0_i32_1 = arith.constant 0 : i32
    return %c0_i32, %c0_i32_0 : i32, i32
  }
  func.func @transform_17(%arg0: i32, %arg1: memref<2x8xi32, #tpu.memory_space<smem>>, %arg2: memref<2x8xi32, #tpu.memory_space<smem>>) -> (i32, i32, i32) {
    %c0_i32 = arith.constant 0 : i32
    %c0_i32_0 = arith.constant 0 : i32
    %c0_i32_1 = arith.constant 0 : i32
    return %arg0, %c0_i32, %c0_i32_0 : i32, i32, i32
  }
  func.func @transform_18(%arg0: i32, %arg1: memref<2x8xi32, #tpu.memory_space<smem>>, %arg2: memref<2x8xi32, #tpu.memory_space<smem>>) -> (i32, i32, i32) {
    %c0_i32 = arith.constant 0 : i32
    %c0_i32_0 = arith.constant 0 : i32
    %c0_i32_1 = arith.constant 0 : i32
    return %arg0, %c0_i32, %c0_i32_0 : i32, i32, i32
  }
  func.func @transform_19(%arg0: i32, %arg1: memref<2x8xi32, #tpu.memory_space<smem>>, %arg2: memref<2x8xi32, #tpu.memory_space<smem>>) -> (i32, i32, i32) {
    %c0_i32 = arith.constant 0 : i32
    %c0_i32_0 = arith.constant 0 : i32
    %c0_i32_1 = arith.constant 0 : i32
    return %arg0, %c0_i32, %c0_i32_0 : i32, i32, i32
  }
  func.func @transform_20(%arg0: i32, %arg1: memref<2x8xi32, #tpu.memory_space<smem>>, %arg2: memref<2x8xi32, #tpu.memory_space<smem>>) -> (i32, i32, i32) {
    %c0_i32 = arith.constant 0 : i32
    %c0_i32_0 = arith.constant 0 : i32
    %c0_i32_1 = arith.constant 0 : i32
    return %arg0, %c0_i32, %c0_i32_0 : i32, i32, i32
  }
}

</mosaic_0001>

<llo_original>
// kernel: llava_forward.3
$region0: #{llava_forward.3}
  #allocation0 [shape = 'u32[]', space=smem, size = 0x4, offset = 0x4, fixed_abs, tag = 'smem constant byte address 0x4 - core index']
  #allocation1 [shape = 'u32[144,128]{1,0:T(1,128)}', space=vmem, size = 0x12000, scoped, tag = 'internal scratch']
  #allocation2 [shape = 's32[1]{0}', space=sflag, size = 0x4, scoped, tag = 'scoped memory for llava_forward.3']
  #allocation3 [shape = 'u8[1024]{0}', space=smem, size = 0x400, scoped, tag = 'prefetched SMEM operand 0']
  %s0 = inlined_call_operand.vmem [shape: s32[2,8], index: 0, kind: input, shape index: {}]
  %s1 = inlined_call_operand.vmem [shape: f32[2,12,256], index: 1, kind: input, shape index: {}]
  %s2 = inlined_call_operand.vmem [shape: f32[2], index: 2, kind: output, shape index: {}]
  %s3 = sld [smem:[#allocation0]]
  $region14: #{llava_forward.3} parent=0
    _
  %s5 = ssub.s32 1, %s3
  %s6 = scalar_select 0, %s5, %s3
  %s7 = sshll.u32 %s0, 4
  %s8 = int_to_ptr.vmem [resolvable:$true] %s7
  %10 = dma.vmem_to_smem %s8, 32, [#allocation3], [#allocation2]
  %11 = dma.done [#allocation2], 32
  %12 = sfence
  $region1: #{llava_forward.3} parent=0
    #allocation4 [shape = 'u8[512]{0}', space=smem, size = 0x200, scoped, tag = 'output window, operand 0, single buffered']
    #allocation5 [shape = 's32[1]{0}', space=sflag, size = 0x4, scoped, tag = 'scoped memory for llava_forward.3']
    %13 = vsyncpa [#allocation5], 0
    // Predicated region
    $region2: #{llava_forward.3} parent=1 // pred_check
      _
    $region3: #{llava_forward.3} parent=1 // pred_check_branch
      %15 = sbr.rel (0) target = $region5
    $region4: #{llava_forward.3} parent=1 // pred_region
      _
    $region5: #{llava_forward.3} parent=1 // pred_fallthru
      _
    %v16 = vld [vmem:[%s1] sm:$0xff]
    %v17 = vld [vmem:[%s1 + $0x8] sm:$0xff]
    %v18 = vld [vmem:[%s1 + $0x10] sm:$0xf]
    %v19 = vld [vmem:[%s1 + $0x18] sm:$0xf]
    %v20 = vmax.f32 %v16, %v17
    %21 = vmax.xlane.f32.xlu0 %v20
    %v22 = vpop.xlane.xlu0 %21
    %vm23 = vcmask 1042432
    %v24 = vsel %vm23, %v18, -inf
    %v25 = vsel %vm23, %v19, -inf
    %v26 = vmax.f32 %v24, %v25
    %27 = vmax.xlane.f32.xlu0 %v26
    %v28 = vpop.xlane.xlu0 %27
    %v29 = vsub.f32 %v16, %v22
    %v30 = vsub.f32 %v17, %v22
    %v31 = vsub.f32 %v18, %v28
    %v32 = vsub.f32 %v19, %v28
    %v33 = vmul.f32 %v29, 1.442695
    %v34 = vpow.pop %v33
    %v35 = vmul.f32 %v30, 1.442695
    %v36 = vpow.pop %v35
    %v37 = vmul.f32 %v31, 1.442695
    %v38 = vpow.pop %v37
    %v39 = vmul.f32 %v32, 1.442695
    %v40 = vpow.pop %v39
    %v41 = vadd.f32 %v34, %v36
    %42 = vadd.xlane.f32.xlu0 %v41
    %v43 = vpop.xlane.xlu0 %42
    %v44 = vsel %vm23, %v38, 0.0
    %v45 = vsel %vm23, %v40, 0.0
    %v46 = vadd.f32 %v44, %v45
    %47 = vadd.xlane.f32.xlu0 %v46
    %v48 = vpop.xlane.xlu0 %47
    %v49 = vlog2.pop %v43
    %v50 = vmul.f32 %v49, 0.6931472
    %v51 = vlog2.pop %v48
    %v52 = vmul.f32 %v51, 0.6931472
    %v53 = vadd.f32 %v22, %v50
    %v54 = vadd.f32 %v28, %v52
    %v55 = vlaneseq
    %v56 = vshrl.u32 %v55, 7
    %v57 = vadd.s32 %v56, 8
    %vm58 = vcmp.eq.s32.totalorder %v56, 3
    %vm59 = vcmp.eq.s32.totalorder %v57, 3
    %s60 = sld [smem:[#allocation3]]
    %v61 = vstv %s60
    %v62 = vsel %vm58, %v61, 4294967196
    %v63 = vsel %vm59, %v61, 4294967196
    %vm64 = vcmp.eq.s32.totalorder %v56, 4
    %vm65 = vcmp.eq.s32.totalorder %v57, 4
    %s66 = sld [smem:[#allocation3 + $0x1]]
    %v67 = vstv %s66
    %v68 = vsel %vm64, %v67, %v62
    %v69 = vsel %vm65, %v67, %v63
    %vm70 = vcmp.eq.s32.totalorder %v56, 5
    %vm71 = vcmp.eq.s32.totalorder %v57, 5
    %s72 = sld [smem:[#allocation3 + $0x2]]
    %v73 = vstv %s72
    %v74 = vsel %vm70, %v73, %v68
    %v75 = vsel %vm71, %v73, %v69
    %vm76 = vcmp.eq.s32.totalorder %v56, 6
    %vm77 = vcmp.eq.s32.totalorder %v57, 6
    %s78 = sld [smem:[#allocation3 + $0x3]]
    %v79 = vstv %s78
    %v80 = vsel %vm76, %v79, %v74
    %v81 = vsel %vm77, %v79, %v75
    %vm82 = vcmp.eq.s32.totalorder %v56, 7
    %vm83 = vcmp.eq.s32.totalorder %v57, 7
    %s84 = sld [smem:[#allocation3 + $0x4]]
    %v85 = vstv %s84
    %v86 = vsel %vm82, %v85, %v80
    %v87 = vsel %vm83, %v85, %v81
    %vm88 = vcmp.eq.s32.totalorder %v56, 8
    %vm89 = vcmp.eq.s32.totalorder %v57, 8
    %s90 = sld [smem:[#allocation3 + $0x5]]
    %v91 = vstv %s90
    %v92 = vsel %vm88, %v91, %v86
    %v93 = vsel %vm89, %v91, %v87
    %vm94 = vcmp.eq.s32.totalorder %v56, 9
    %vm95 = vcmp.eq.s32.totalorder %v57, 9
    %s96 = sld [smem:[#allocation3 + $0x6]]
    %v97 = vstv %s96
    %v98 = vsel %vm94, %v97, %v92
    %v99 = vsel %vm95, %v97, %v93
    %vm100 = vcmp.eq.s32.totalorder %v56, 10
    %vm101 = vcmp.eq.s32.totalorder %v57, 10
    %s102 = sld [smem:[#allocation3 + $0x7]]
    %v103 = vstv %s102
    %v104 = vsel %vm100, %v103, %v98
    %v105 = vsel %vm101, %v103, %v99
    %vm106 = vcmp.ne.s32.totalorder %v104, 4294967196
    %vm107 = vcmp.ne.s32.totalorder %v105, 4294967196
    %v108 = vsel %vm106, 1, 0
    %v109 = vsel %vm107, 1, 0
    %v110 = vcvt.s32.f32 %v108
    %v111 = vcvt.s32.f32 %v109
    %vm112 = vcmp.gt.s32.totalorder %v104, 0
    %v113 = vsel %vm112, %v104, 0
    %vm114 = vcmp.gt.s32.totalorder %v105, 0
    %v115 = vsel %vm114, %v105, 0
    %vm116 = vcmp.lt.s32.totalorder %v113, 255
    %v117 = vsel %vm116, %v113, 255
    %vm118 = vcmp.lt.s32.totalorder %v115, 255
    %v119 = vsel %vm118, %v115, 255
    %v120 = vlaneseq
    %v121 = vand.u32 %v120, 127
    %v122 = vadd.s32 %v121, 128
    %vm123 = vcmp.eq.s32.totalorder %v121, %v117
    %vm124 = vcmp.eq.s32.totalorder %v122, %v117
    %vm125 = vcmp.eq.s32.totalorder %v121, %v119
    %vm126 = vcmp.eq.s32.totalorder %v122, %v119
    %v127 = vsel %vm123, %v16, 0.0
    %v128 = vsel %vm124, %v17, 0.0
    %v129 = vsel %vm125, %v18, 0.0
    %v130 = vsel %vm126, %v19, 0.0
    %v131 = vadd.f32 %v127, %v128
    %132 = vadd.xlane.f32.xlu0 %v131
    %v133 = vpop.xlane.xlu0 %132
    %v134 = vsel %vm23, %v129, 0.0
    %v135 = vsel %vm23, %v130, 0.0
    %v136 = vadd.f32 %v134, %v135
    %137 = vadd.xlane.f32.xlu0 %v136
    %v138 = vpop.xlane.xlu0 %137
    %v139 = vsub.f32 %v53, %v133
    %v140 = vsub.f32 %v54, %v138
    %v141 = vmul.f32 %v139, %v110
    %v142 = vmul.f32 %v140, %v111
    %vm143 = vcmask 7168
    %v144 = vsel %vm143, %v141, 0.0
    %vm145 = vcmask 2048
    %v146 = vsel %vm145, %v142, 0.0
    %v147 = vadd.f32 %v144, %v146
    %148 = vadd.xlane.f32.xlu0 %v147
    %v149 = vpop.xlane.xlu0 %148
    %v150 = vrot.slane %v149, 4
    %v151 = vadd.f32 %v149, %v150
    %v152 = vrot.slane %v151, 2
    %v153 = vadd.f32 %v151, %v152
    %v154 = vrot.slane %v153, 1
    %v155 = vadd.f32 %v153, %v154
    %s156 = vtos %v155
    %s157 = sadd.f32 %s156, 0.0
    %v158 = vsel %vm143, %v110, 0.0
    %v159 = vsel %vm145, %v111, 0.0
    %v160 = vadd.f32 %v158, %v159
    %161 = vadd.xlane.f32.xlu0 %v160
    %v162 = vpop.xlane.xlu0 %161
    %v163 = vrot.slane %v162, 4
    %v164 = vadd.f32 %v162, %v163
    %v165 = vrot.slane %v164, 2
    %v166 = vadd.f32 %v164, %v165
    %v167 = vrot.slane %v166, 1
    %v168 = vadd.f32 %v166, %v167
    %s169 = vtos %v168
    %s170 = sadd.f32 %s169, 0.0
    %s171 = scalar_lea.vmem %s1, 32
    %v172 = vld [vmem:[%s171] sm:$0xff]
    %v173 = vld [vmem:[%s171 + $0x8] sm:$0xff]
    %v174 = vld [vmem:[%s171 + $0x10] sm:$0xf]
    %v175 = vld [vmem:[%s171 + $0x18] sm:$0xf]
    %v176 = vmax.f32 %v172, %v173
    %177 = vmax.xlane.f32.xlu0 %v176
    %v178 = vpop.xlane.xlu0 %177
    %v179 = vsel %vm23, %v174, -inf
    %v180 = vsel %vm23, %v175, -inf
    %v181 = vmax.f32 %v179, %v180
    %182 = vmax.xlane.f32.xlu0 %v181
    %v183 = vpop.xlane.xlu0 %182
    %v184 = vsub.f32 %v172, %v178
    %v185 = vsub.f32 %v173, %v178
    %v186 = vsub.f32 %v174, %v183
    %v187 = vsub.f32 %v175, %v183
    %v188 = vmul.f32 %v184, 1.442695
    %v189 = vpow.pop %v188
    %v190 = vmul.f32 %v185, 1.442695
    %v191 = vpow.pop %v190
    %v192 = vmul.f32 %v186, 1.442695
    %v193 = vpow.pop %v192
    %v194 = vmul.f32 %v187, 1.442695
    %v195 = vpow.pop %v194
    %v196 = vadd.f32 %v189, %v191
    %197 = vadd.xlane.f32.xlu0 %v196
    %v198 = vpop.xlane.xlu0 %197
    %v199 = vsel %vm23, %v193, 0.0
    %v200 = vsel %vm23, %v195, 0.0
    %v201 = vadd.f32 %v199, %v200
    %202 = vadd.xlane.f32.xlu0 %v201
    %v203 = vpop.xlane.xlu0 %202
    %v204 = vlog2.pop %v198
    %v205 = vmul.f32 %v204, 0.6931472
    %v206 = vlog2.pop %v203
    %v207 = vmul.f32 %v206, 0.6931472
    %v208 = vadd.f32 %v178, %v205
    %v209 = vadd.f32 %v183, %v207
    %s210 = sld [smem:[#allocation3 + $0x80]]
    %v211 = vstv %s210
    %v212 = vsel %vm58, %v211, 4294967196
    %v213 = vsel %vm59, %v211, 4294967196
    %s214 = sld [smem:[#allocation3 + $0x81]]
    %v215 = vstv %s214
    %v216 = vsel %vm64, %v215, %v212
    %v217 = vsel %vm65, %v215, %v213
    %s218 = sld [smem:[#allocation3 + $0x82]]
    %v219 = vstv %s218
    %v220 = vsel %vm70, %v219, %v216
    %v221 = vsel %vm71, %v219, %v217
    %s222 = sld [smem:[#allocation3 + $0x83]]
    %v223 = vstv %s222
    %v224 = vsel %vm76, %v223, %v220
    %v225 = vsel %vm77, %v223, %v221
    %s226 = sld [smem:[#allocation3 + $0x84]]
    %v227 = vstv %s226
    %v228 = vsel %vm82, %v227, %v224
    %v229 = vsel %vm83, %v227, %v225
    %s230 = sld [smem:[#allocation3 + $0x85]]
    %v231 = vstv %s230
    %v232 = vsel %vm88, %v231, %v228
    %v233 = vsel %vm89, %v231, %v229
    %s234 = sld [smem:[#allocation3 + $0x86]]
    %v235 = vstv %s234
    %v236 = vsel %vm94, %v235, %v232
    %v237 = vsel %vm95, %v235, %v233
    %s238 = sld [smem:[#allocation3 + $0x87]]
    %v239 = vstv %s238
    %v240 = vsel %vm100, %v239, %v236
    %v241 = vsel %vm101, %v239, %v237
    %vm242 = vcmp.ne.s32.totalorder %v240, 4294967196
    %vm243 = vcmp.ne.s32.totalorder %v241, 4294967196
    %v244 = vsel %vm242, 1, 0
    %v245 = vsel %vm243, 1, 0
    %v246 = vcvt.s32.f32 %v244
    %v247 = vcvt.s32.f32 %v245
    %vm248 = vcmp.gt.s32.totalorder %v240, 0
    %v249 = vsel %vm248, %v240, 0
    %vm250 = vcmp.gt.s32.totalorder %v241, 0
    %v251 = vsel %vm250, %v241, 0
    %vm252 = vcmp.lt.s32.totalorder %v249, 255
    %v253 = vsel %vm252, %v249, 255
    %vm254 = vcmp.lt.s32.totalorder %v251, 255
    %v255 = vsel %vm254, %v251, 255
    %vm256 = vcmp.eq.s32.totalorder %v121, %v253
    %vm257 = vcmp.eq.s32.totalorder %v122, %v253
    %vm258 = vcmp.eq.s32.totalorder %v121, %v255
    %vm259 = vcmp.eq.s32.totalorder %v122, %v255
    %v260 = vsel %vm256, %v172, 0.0
    %v261 = vsel %vm257, %v173, 0.0
    %v262 = vsel %vm258, %v174, 0.0
    %v263 = vsel %vm259, %v175, 0.0
    %v264 = vadd.f32 %v260, %v261
    %265 = vadd.xlane.f32.xlu0 %v264
    %v266 = vpop.xlane.xlu0 %265
    %v267 = vsel %vm23, %v262, 0.0
    %v268 = vsel %vm23, %v263, 0.0
    %v269 = vadd.f32 %v267, %v268
    %270 = vadd.xlane.f32.xlu0 %v269
    %v271 = vpop.xlane.xlu0 %270
    %v272 = vsub.f32 %v208, %v266
    %v273 = vsub.f32 %v209, %v271
    %v274 = vmul.f32 %v272, %v246
    %v275 = vmul.f32 %v273, %v247
    %v276 = vsel %vm143, %v274, 0.0
    %v277 = vsel %vm145, %v275, 0.0
    %v278 = vadd.f32 %v276, %v277
    %279 = vadd.xlane.f32.xlu0 %v278
    %v280 = vpop.xlane.xlu0 %279
    %v281 = vrot.slane %v280, 4
    %v282 = vadd.f32 %v280, %v281
    %v283 = vrot.slane %v282, 2
    %v284 = vadd.f32 %v282, %v283
    %v285 = vrot.slane %v284, 1
    %v286 = vadd.f32 %v284, %v285
    %s287 = vtos %v286
    %s288 = sadd.f32 %s157, %s287
    %v289 = vsel %vm143, %v246, 0.0
    %v290 = vsel %vm145, %v247, 0.0
    %v291 = vadd.f32 %v289, %v290
    %292 = vadd.xlane.f32.xlu0 %v291
    %v293 = vpop.xlane.xlu0 %292
    %v294 = vrot.slane %v293, 4
    %v295 = vadd.f32 %v293, %v294
    %v296 = vrot.slane %v295, 2
    %v297 = vadd.f32 %v295, %v296
    %v298 = vrot.slane %v297, 1
    %v299 = vadd.f32 %v297, %v298
    %s300 = vtos %v299
    %s301 = sadd.f32 %s170, %s300
    %s302 = scalar_lea.smem [#allocation4], 0
    %303 = sst [smem:[%s302]] %s288
    %s304 = scalar_lea.smem [#allocation4], 1
    %305 = sst [smem:[%s304]] %s301
    // Predicated region
    $region6: #{llava_forward.3} parent=1 // pred_check
      _
    $region7: #{llava_forward.3} parent=1 // pred_check_branch
      %307 = sbr.rel (0) target = $region9
    $region8: #{llava_forward.3} parent=1 // pred_region
      %s309 = ssub.s32 16, 16
      %310 = vsyncadd [#allocation5], %s309
      %s312 = sshll.u32 %s2, 4
      %s313 = int_to_ptr.vmem [resolvable:$true] %s312
      %315 = dma.smem_to_vmem [#allocation4], 16, %s313, [#allocation5]
    $region9: #{llava_forward.3} parent=1 // pred_fallthru
      _
    // Predicated region
    $region10: #{llava_forward.3} parent=1 // pred_check
      _
    $region11: #{llava_forward.3} parent=1 // pred_check_branch
      %317 = sbr.rel (0) target = $region13
    $region12: #{llava_forward.3} parent=1 // pred_region
      %318 = dma.done [#allocation5], 16
    $region13: #{llava_forward.3} parent=1 // pred_fallthru
      _
    %319 = sfence
    %320 = vsyncpa [#allocation5], 1

// kernel: llava_forward.2
$region0: #{llava_forward.2}
  #allocation0 [shape = 'u32[]', space=smem, size = 0x4, offset = 0x4, fixed_abs, tag = 'smem constant byte address 0x4 - core index']
  #allocation1 [shape = 'u32[144,128]{1,0:T(1,128)}', space=vmem, size = 0x12000, scoped, tag = 'internal scratch']
  #allocation2 [shape = 's32[1]{0}', space=sflag, size = 0x4, scoped, tag = 'scoped memory for llava_forward.2']
  #allocation3 [shape = 'u8[1024]{0}', space=smem, size = 0x400, scoped, tag = 'prefetched SMEM operand 0']
  #allocation4 [shape = 'u8[1024]{0}', space=smem, size = 0x400, scoped, tag = 'prefetched SMEM operand 1']
  %s0 = inlined_call_operand.vmem [shape: s32[2,8], index: 0, kind: input, shape index: {}]
  %s1 = inlined_call_operand.vmem [shape: s32[2,8], index: 1, kind: input, shape index: {}]
  %s2 = inlined_call_operand.vmem [shape: f32[2,4,192], index: 2, kind: input, shape index: {}]
  %s3 = inlined_call_operand.hbm [shape: f32[192,128], index: 3, kind: input, shape index: {}]
  %s4 = inlined_call_operand.vmem [shape: f32[1,128], index: 4, kind: input, shape index: {}, may-alias: {4,8}]
  %s5 = inlined_call_operand.hbm [shape: f32[128,256], index: 5, kind: input, shape index: {}]
  %s6 = inlined_call_operand.vmem [shape: f32[1,256], index: 6, kind: input, shape index: {}, may-alias: {6,18}]
  %s7 = inlined_call_operand.hbm [shape: f32[256,128], index: 7, kind: input, shape index: {}]
  %s8 = inlined_call_operand.vmem [shape: f32[1,128], index: 8, kind: input, shape index: {}, may-alias: {4,8}]
  %s9 = inlined_call_operand.hbm [shape: f32[256,128], index: 9, kind: input, shape index: {}]
  %s10 = inlined_call_operand.vmem [shape: f32[1,128], index: 10, kind: input, shape index: {}, may-alias: {10,13,16}]
  %s11 = inlined_call_operand.vmem [shape: f32[128,384], index: 11, kind: input, shape index: {}]
  %s12 = inlined_call_operand.hbm [shape: f32[128,128], index: 12, kind: input, shape index: {}]
  %s13 = inlined_call_operand.vmem [shape: f32[1,128], index: 13, kind: input, shape index: {}, may-alias: {10,13,16}]
  %s14 = inlined_call_operand.vmem [shape: f32[128,512], index: 14, kind: input, shape index: {}]
  %s15 = inlined_call_operand.hbm [shape: f32[256,128], index: 15, kind: input, shape index: {}]
  %s16 = inlined_call_operand.vmem [shape: f32[1,128], index: 16, kind: input, shape index: {}, may-alias: {10,13,16}]
  %s17 = inlined_call_operand.hbm [shape: f32[128,256], index: 17, kind: input, shape index: {}]
  %s18 = inlined_call_operand.vmem [shape: f32[1,256], index: 18, kind: input, shape index: {}, may-alias: {6,18}]
  %s19 = inlined_call_operand.vmem [shape: f32[2,12,256], index: 19, kind: output, shape index: {0}]
  %s20 = inlined_call_operand.vmem [shape: f32[2,12,128], index: 20, kind: output, shape index: {1}]
  %s21 = inlined_call_operand.vmem [shape: f32[2,12,128], index: 21, kind: output, shape index: {2}]
  %s22 = inlined_call_operand.vmem [shape: f32[2,12,128], index: 22, kind: output, shape index: {3}]
  %23 = xla_tuple %s19, %s20, %s21, %s22
  %s24 = sld [smem:[#allocation0]]
  $region153: #{llava_forward.2} parent=0
    _
  %s26 = ssub.s32 1, %s24
  %s27 = scalar_select 0, %s26, %s24
  %s28 = sshll.u32 %s0, 4
  %s29 = int_to_ptr.vmem [resolvable:$true] %s28
  %31 = dma.vmem_to_smem %s29, 32, [#allocation3], [#allocation2]
  %s32 = sshll.u32 %s1, 4
  %s33 = int_to_ptr.vmem [resolvable:$true] %s32
  %35 = dma.vmem_to_smem %s33, 32, [#allocation4], [#allocation2]
  %36 = dma.done [#allocation2], 64
  %37 = sfence
  $region1: #{llava_forward.2} parent=0
    #allocation5 [shape = 'u8[98304]{0}', space=vmem, size = 0x18000, scoped, tag = 'input window, operand 3, single buffered']
    #allocation6 [shape = 's32[2]{0}', space=sflag, size = 0x8, scoped, tag = 'scoped memory for llava_forward.2']
    #allocation7 [shape = 'u8[131072]{0}', space=vmem, size = 0x20000, scoped, tag = 'input window, operand 5, single buffered']
    #allocation8 [shape = 's32[1]{0}', space=sflag, size = 0x4, scoped, tag = 'scoped memory for llava_forward.2']
    #allocation9 [shape = 'u8[131072]{0}', space=vmem, size = 0x20000, scoped, tag = 'input window, operand 7, single buffered']
    #allocation10 [shape = 'u8[131072]{0}', space=vmem, size = 0x20000, scoped, tag = 'input window, operand 9, single buffered']
    #allocation11 [shape = 's32[1]{0}', space=sflag, size = 0x4, scoped, tag = 'scoped memory for llava_forward.2']
    #allocation12 [shape = 'u8[65536]{0}', space=vmem, size = 0x10000, scoped, tag = 'input window, operand 12, single buffered']
    #allocation13 [shape = 'u8[131072]{0}', space=vmem, size = 0x20000, scoped, tag = 'input window, operand 15, single buffered']
    #allocation14 [shape = 's32[1]{0}', space=sflag, size = 0x4, scoped, tag = 'scoped memory for llava_forward.2']
    #allocation15 [shape = 'u8[131072]{0}', space=vmem, size = 0x20000, scoped, tag = 'input window, operand 17, single buffered']
    %38 = vsyncpa [#allocation6], 0
    %39 = vsyncpa [#allocation8], 0
    %40 = vsyncpa [#allocation11], 0
    %41 = vsyncpa [#allocation14], 0
    loop: start=0, step=1, limit=4
    $region2: #{llava_forward.2} parent=1 // loop_pre_header
      _
    $region3: #{llava_forward.2} parent=1 // loop_header
      %s43 = sphi 0, %s47
      %p44 = scmp.ge.s32.totalorder %s43, 4
      %s53 = sphi 0, %s55
      %s56 = sphi 0, %s53
      %s57 = sphi 0, %s56
      %s73 = sphi 0, %s57
      %s77 = sphi 0, %s77
      %s79 = sphi 0, %s77
      %s80 = sphi 0, %s79
      %s94 = sphi 0, %s80
      %s98 = sphi 0, %s98
      %s100 = sphi 0, %s98
      %s101 = sphi 0, %s100
      %s115 = sphi 0, %s101
      %s119 = sphi 0, %s119
      %s121 = sphi 0, %s119
      %s122 = sphi 0, %s121
      %s136 = sphi 0, %s122
      %s140 = sphi 0, %s140
      %s142 = sphi 0, %s140
      %s143 = sphi 0, %s142
      %s157 = sphi 0, %s143
      %s161 = sphi 0, %s161
      %s163 = sphi 0, %s161
      %s164 = sphi 0, %s163
      %s178 = sphi 0, %s164
      %s182 = sphi 0, %s182
      %s184 = sphi 0, %s182
      %s185 = sphi 0, %s184
      %s199 = sphi 0, %s185
      %s203 = sphi 0, %s203
      %s205 = sphi 0, %s203
      %s206 = sphi 0, %s205
      %s220 = sphi 0, %s206
      %s224 = sphi 0, %s224
      %s226 = sphi 0, %s224
      %s227 = sphi 0, %s226
      %s241 = sphi 0, %s227
      %s245 = sphi 0, %s245
      %s247 = sphi 0, %s245
      %s248 = sphi 0, %s247
      %s262 = sphi 0, %s248
      %s266 = sphi 0, %s266
      %s268 = sphi 0, %s266
      %s269 = sphi 0, %s268
      %s283 = sphi 0, %s269
      %s287 = sphi 0, %s287
      %s289 = sphi 0, %s287
      %s290 = sphi 0, %s289
      %s304 = sphi 0, %s290
      %s308 = sphi 0, %s308
      %s310 = sphi 0, %s308
      %s311 = sphi 0, %s310
      %s325 = sphi 0, %s311
      %s329 = sphi 0, %s329
      %s331 = sphi 0, %s329
      %s332 = sphi 0, %s331
      %s346 = sphi 0, %s332
      %s350 = sphi 0, %s350
      %s352 = sphi 0, %s350
      %s353 = sphi 0, %s352
      %s367 = sphi 0, %s353
      %s371 = sphi 0, %s371
      %s373 = sphi 0, %s371
      %s374 = sphi 0, %s373
      %s388 = sphi 0, %s374
      %s392 = sphi 0, %s392
      %s394 = sphi 0, %s392
      %s395 = sphi 0, %s394
      %s409 = sphi 0, %s395
      %s415 = sphi 0, %s417
      %s418 = sphi 0, %s415
      %s419 = sphi 0, %s418
      %s435 = sphi 0, %s419
      %s441 = sphi 0, %s443
      %s444 = sphi 0, %s441
      %s445 = sphi 0, %s444
      %s461 = sphi 0, %s445
      %s467 = sphi 0, %s469
      %s470 = sphi 0, %s467
      %s471 = sphi 0, %s470
      %s487 = sphi 0, %s471
      %s493 = sphi 0, %s495
      %s496 = sphi 0, %s493
      %s497 = sphi 0, %s496
      %s513 = sphi 0, %s497
    $region4: #{llava_forward.2} parent=1 // loop_header_branch
      %46 = sbr.rel (%p44) target = $region8
    $region5: #{llava_forward.2} parent=1 // loop_body
      %s48 = ssub.s32 %s43, 1
      %s49 = ssub.s32 %s43, 2
      %s50 = sadd.s32 %s43, 1
      %s51 = ssub.s32 %s43, %s50
      %p52 = scmp.eq.s32.totalorder %s51, 0
      %s54 = sadd.s32 %s53, 1
      %s55 = scalar_select %p52, %s53, %s54
      %p58 = pneg %p52
      %p59 = scmp.eq.s32.totalorder %s43, 1
      %p60 = por %p58, %p59
      %p61 = scmp.ne.s32.totalorder %s53, %s56
      %p62 = scmp.eq.s32.totalorder %s43, 0
      %p63 = por %p61, %p62
      %p64 = scmp.ne.s32.totalorder %s53, %s56
      %p65 = scmp.eq.s32.totalorder %s48, 1
      %p66 = por %p64, %p65
      %p67 = scmp.ne.s32.totalorder %s56, %s57
      %p68 = scmp.eq.s32.totalorder %s48, 0
      %p69 = por %p67, %p68
      %p70 = scmp.ne.s32.totalorder %s56, %s57
      %p71 = scmp.eq.s32.totalorder %s49, 1
      %p72 = por %p70, %p71
      %p74 = scmp.ne.s32.totalorder %s57, %s73
      %p75 = scmp.eq.s32.totalorder %s49, 0
      %p76 = por %p74, %p75
      %s78 = sadd.s32 %s77, 1
      %p81 = scmp.eq.s32.totalorder %s43, 1
      %p82 = scmp.ne.s32.totalorder %s77, %s79
      %p83 = scmp.eq.s32.totalorder %s43, 0
      %p84 = por %p82, %p83
      %p85 = scmp.ne.s32.totalorder %s77, %s79
      %p86 = scmp.eq.s32.totalorder %s48, 1
      %p87 = por %p85, %p86
      %p88 = scmp.ne.s32.totalorder %s79, %s80
      %p89 = scmp.eq.s32.totalorder %s48, 0
      %p90 = por %p88, %p89
      %p91 = scmp.ne.s32.totalorder %s79, %s80
      %p92 = scmp.eq.s32.totalorder %s49, 1
      %p93 = por %p91, %p92
      %p95 = scmp.ne.s32.totalorder %s80, %s94
      %p96 = scmp.eq.s32.totalorder %s49, 0
      %p97 = por %p95, %p96
      %s99 = sadd.s32 %s98, 1
      %p102 = scmp.eq.s32.totalorder %s43, 1
      %p103 = scmp.ne.s32.totalorder %s98, %s100
      %p104 = scmp.eq.s32.totalorder %s43, 0
      %p105 = por %p103, %p104
      %p106 = scmp.ne.s32.totalorder %s98, %s100
      %p107 = scmp.eq.s32.totalorder %s48, 1
      %p108 = por %p106, %p107
      %p109 = scmp.ne.s32.totalorder %s100, %s101
      %p110 = scmp.eq.s32.totalorder %s48, 0
      %p111 = por %p109, %p110
      %p112 = scmp.ne.s32.totalorder %s100, %s101
      %p113 = scmp.eq.s32.totalorder %s49, 1
      %p114 = por %p112, %p113
      %p116 = scmp.ne.s32.totalorder %s101, %s115
      %p117 = scmp.eq.s32.totalorder %s49, 0
      %p118 = por %p116, %p117
      %s120 = sadd.s32 %s119, 1
      %p123 = scmp.eq.s32.totalorder %s43, 1
      %p124 = scmp.ne.s32.totalorder %s119, %s121
      %p125 = scmp.eq.s32.totalorder %s43, 0
      %p126 = por %p124, %p125
      %p127 = scmp.ne.s32.totalorder %s119, %s121
      %p128 = scmp.eq.s32.totalorder %s48, 1
      %p129 = por %p127, %p128
      %p130 = scmp.ne.s32.totalorder %s121, %s122
      %p131 = scmp.eq.s32.totalorder %s48, 0
      %p132 = por %p130, %p131
      %p133 = scmp.ne.s32.totalorder %s121, %s122
      %p134 = scmp.eq.s32.totalorder %s49, 1
      %p135 = por %p133, %p134
      %p137 = scmp.ne.s32.totalorder %s122, %s136
      %p138 = scmp.eq.s32.totalorder %s49, 0
      %p139 = por %p137, %p138
      %s141 = sadd.s32 %s140, 1
      %p144 = scmp.eq.s32.totalorder %s43, 1
      %p145 = scmp.ne.s32.totalorder %s140, %s142
      %p146 = scmp.eq.s32.totalorder %s43, 0
      %p147 = por %p145, %p146
      %p148 = scmp.ne.s32.totalorder %s140, %s142
      %p149 = scmp.eq.s32.totalorder %s48, 1
      %p150 = por %p148, %p149
      %p151 = scmp.ne.s32.totalorder %s142, %s143
      %p152 = scmp.eq.s32.totalorder %s48, 0
      %p153 = por %p151, %p152
      %p154 = scmp.ne.s32.totalorder %s142, %s143
      %p155 = scmp.eq.s32.totalorder %s49, 1
      %p156 = por %p154, %p155
      %p158 = scmp.ne.s32.totalorder %s143, %s157
      %p159 = scmp.eq.s32.totalorder %s49, 0
      %p160 = por %p158, %p159
      %s162 = sadd.s32 %s161, 1
      %p165 = scmp.eq.s32.totalorder %s43, 1
      %p166 = scmp.ne.s32.totalorder %s161, %s163
      %p167 = scmp.eq.s32.totalorder %s43, 0
      %p168 = por %p166, %p167
      %p169 = scmp.ne.s32.totalorder %s161, %s163
      %p170 = scmp.eq.s32.totalorder %s48, 1
      %p171 = por %p169, %p170
      %p172 = scmp.ne.s32.totalorder %s163, %s164
      %p173 = scmp.eq.s32.totalorder %s48, 0
      %p174 = por %p172, %p173
      %p175 = scmp.ne.s32.totalorder %s163, %s164
      %p176 = scmp.eq.s32.totalorder %s49, 1
      %p177 = por %p175, %p176
      %p179 = scmp.ne.s32.totalorder %s164, %s178
      %p180 = scmp.eq.s32.totalorder %s49, 0
      %p181 = por %p179, %p180
      %s183 = sadd.s32 %s182, 1
      %p186 = scmp.eq.s32.totalorder %s43, 1
      %p187 = scmp.ne.s32.totalorder %s182, %s184
      %p188 = scmp.eq.s32.totalorder %s43, 0
      %p189 = por %p187, %p188
      %p190 = scmp.ne.s32.totalorder %s182, %s184
      %p191 = scmp.eq.s32.totalorder %s48, 1
      %p192 = por %p190, %p191
      %p193 = scmp.ne.s32.totalorder %s184, %s185
      %p194 = scmp.eq.s32.totalorder %s48, 0
      %p195 = por %p193, %p194
      %p196 = scmp.ne.s32.totalorder %s184, %s185
      %p197 = scmp.eq.s32.totalorder %s49, 1
      %p198 = por %p196, %p197
      %p200 = scmp.ne.s32.totalorder %s185, %s199
      %p201 = scmp.eq.s32.totalorder %s49, 0
      %p202 = por %p200, %p201
      %s204 = sadd.s32 %s203, 1
      %p207 = scmp.eq.s32.totalorder %s43, 1
      %p208 = scmp.ne.s32.totalorder %s203, %s205
      %p209 = scmp.eq.s32.totalorder %s43, 0
      %p210 = por %p208, %p209
      %p211 = scmp.ne.s32.totalorder %s203, %s205
      %p212 = scmp.eq.s32.totalorder %s48, 1
      %p213 = por %p211, %p212
      %p214 = scmp.ne.s32.totalorder %s205, %s206
      %p215 = scmp.eq.s32.totalorder %s48, 0
      %p216 = por %p214, %p215
      %p217 = scmp.ne.s32.totalorder %s205, %s206
      %p218 = scmp.eq.s32.totalorder %s49, 1
      %p219 = por %p217, %p218
      %p221 = scmp.ne.s32.totalorder %s206, %s220
      %p222 = scmp.eq.s32.totalorder %s49, 0
      %p223 = por %p221, %p222
      %s225 = sadd.s32 %s224, 1
      %p228 = scmp.eq.s32.totalorder %s43, 1
      %p229 = scmp.ne.s32.totalorder %s224, %s226
      %p230 = scmp.eq.s32.totalorder %s43, 0
      %p231 = por %p229, %p230
      %p232 = scmp.ne.s32.totalorder %s224, %s226
      %p233 = scmp.eq.s32.totalorder %s48, 1
      %p234 = por %p232, %p233
      %p235 = scmp.ne.s32.totalorder %s226, %s227
      %p236 = scmp.eq.s32.totalorder %s48, 0
      %p237 = por %p235, %p236
      %p238 = scmp.ne.s32.totalorder %s226, %s227
      %p239 = scmp.eq.s32.totalorder %s49, 1
      %p240 = por %p238, %p239
      %p242 = scmp.ne.s32.totalorder %s227, %s241
      %p243 = scmp.eq.s32.totalorder %s49, 0
      %p244 = por %p242, %p243
      %s246 = sadd.s32 %s245, 1
      %p249 = scmp.eq.s32.totalorder %s43, 1
      %p250 = scmp.ne.s32.totalorder %s245, %s247
      %p251 = scmp.eq.s32.totalorder %s43, 0
      %p252 = por %p250, %p251
      %p253 = scmp.ne.s32.totalorder %s245, %s247
      %p254 = scmp.eq.s32.totalorder %s48, 1
      %p255 = por %p253, %p254
      %p256 = scmp.ne.s32.totalorder %s247, %s248
      %p257 = scmp.eq.s32.totalorder %s48, 0
      %p258 = por %p256, %p257
      %p259 = scmp.ne.s32.totalorder %s247, %s248
      %p260 = scmp.eq.s32.totalorder %s49, 1
      %p261 = por %p259, %p260
      %p263 = scmp.ne.s32.totalorder %s248, %s262
      %p264 = scmp.eq.s32.totalorder %s49, 0
      %p265 = por %p263, %p264
      %s267 = sadd.s32 %s266, 1
      %p270 = scmp.eq.s32.totalorder %s43, 1
      %p271 = scmp.ne.s32.totalorder %s266, %s268
      %p272 = scmp.eq.s32.totalorder %s43, 0
      %p273 = por %p271, %p272
      %p274 = scmp.ne.s32.totalorder %s266, %s268
      %p275 = scmp.eq.s32.totalorder %s48, 1
      %p276 = por %p274, %p275
      %p277 = scmp.ne.s32.totalorder %s268, %s269
      %p278 = scmp.eq.s32.totalorder %s48, 0
      %p279 = por %p277, %p278
      %p280 = scmp.ne.s32.totalorder %s268, %s269
      %p281 = scmp.eq.s32.totalorder %s49, 1
      %p282 = por %p280, %p281
      %p284 = scmp.ne.s32.totalorder %s269, %s283
      %p285 = scmp.eq.s32.totalorder %s49, 0
      %p286 = por %p284, %p285
      %s288 = sadd.s32 %s287, 1
      %p291 = scmp.eq.s32.totalorder %s43, 1
      %p292 = scmp.ne.s32.totalorder %s287, %s289
      %p293 = scmp.eq.s32.totalorder %s43, 0
      %p294 = por %p292, %p293
      %p295 = scmp.ne.s32.totalorder %s287, %s289
      %p296 = scmp.eq.s32.totalorder %s48, 1
      %p297 = por %p295, %p296
      %p298 = scmp.ne.s32.totalorder %s289, %s290
      %p299 = scmp.eq.s32.totalorder %s48, 0
      %p300 = por %p298, %p299
      %p301 = scmp.ne.s32.totalorder %s289, %s290
      %p302 = scmp.eq.s32.totalorder %s49, 1
      %p303 = por %p301, %p302
      %p305 = scmp.ne.s32.totalorder %s290, %s304
      %p306 = scmp.eq.s32.totalorder %s49, 0
      %p307 = por %p305, %p306
      %s309 = sadd.s32 %s308, 1
      %p312 = scmp.eq.s32.totalorder %s43, 1
      %p313 = scmp.ne.s32.totalorder %s308, %s310
      %p314 = scmp.eq.s32.totalorder %s43, 0
      %p315 = por %p313, %p314
      %p316 = scmp.ne.s32.totalorder %s308, %s310
      %p317 = scmp.eq.s32.totalorder %s48, 1
      %p318 = por %p316, %p317
      %p319 = scmp.ne.s32.totalorder %s310, %s311
      %p320 = scmp.eq.s32.totalorder %s48, 0
      %p321 = por %p319, %p320
      %p322 = scmp.ne.s32.totalorder %s310, %s311
      %p323 = scmp.eq.s32.totalorder %s49, 1
      %p324 = por %p322, %p323
      %p326 = scmp.ne.s32.totalorder %s311, %s325
      %p327 = scmp.eq.s32.totalorder %s49, 0
      %p328 = por %p326, %p327
      %s330 = sadd.s32 %s329, 1
      %p333 = scmp.eq.s32.totalorder %s43, 1
      %p334 = scmp.ne.s32.totalorder %s329, %s331
      %p335 = scmp.eq.s32.totalorder %s43, 0
      %p336 = por %p334, %p335
      %p337 = scmp.ne.s32.totalorder %s329, %s331
      %p338 = scmp.eq.s32.totalorder %s48, 1
      %p339 = por %p337, %p338
      %p340 = scmp.ne.s32.totalorder %s331, %s332
      %p341 = scmp.eq.s32.totalorder %s48, 0
      %p342 = por %p340, %p341
      %p343 = scmp.ne.s32.totalorder %s331, %s332
      %p344 = scmp.eq.s32.totalorder %s49, 1
      %p345 = por %p343, %p344
      %p347 = scmp.ne.s32.totalorder %s332, %s346
      %p348 = scmp.eq.s32.totalorder %s49, 0
      %p349 = por %p347, %p348
      %s351 = sadd.s32 %s350, 1
      %p354 = scmp.eq.s32.totalorder %s43, 1
      %p355 = scmp.ne.s32.totalorder %s350, %s352
      %p356 = scmp.eq.s32.totalorder %s43, 0
      %p357 = por %p355, %p356
      %p358 = scmp.ne.s32.totalorder %s350, %s352
      %p359 = scmp.eq.s32.totalorder %s48, 1
      %p360 = por %p358, %p359
      %p361 = scmp.ne.s32.totalorder %s352, %s353
      %p362 = scmp.eq.s32.totalorder %s48, 0
      %p363 = por %p361, %p362
      %p364 = scmp.ne.s32.totalorder %s352, %s353
      %p365 = scmp.eq.s32.totalorder %s49, 1
      %p366 = por %p364, %p365
      %p368 = scmp.ne.s32.totalorder %s353, %s367
      %p369 = scmp.eq.s32.totalorder %s49, 0
      %p370 = por %p368, %p369
      %s372 = sadd.s32 %s371, 1
      %p375 = scmp.eq.s32.totalorder %s43, 1
      %p376 = scmp.ne.s32.totalorder %s371, %s373
      %p377 = scmp.eq.s32.totalorder %s43, 0
      %p378 = por %p376, %p377
      %p379 = scmp.ne.s32.totalorder %s371, %s373
      %p380 = scmp.eq.s32.totalorder %s48, 1
      %p381 = por %p379, %p380
      %p382 = scmp.ne.s32.totalorder %s373, %s374
      %p383 = scmp.eq.s32.totalorder %s48, 0
      %p384 = por %p382, %p383
      %p385 = scmp.ne.s32.totalorder %s373, %s374
      %p386 = scmp.eq.s32.totalorder %s49, 1
      %p387 = por %p385, %p386
      %p389 = scmp.ne.s32.totalorder %s374, %s388
      %p390 = scmp.eq.s32.totalorder %s49, 0
      %p391 = por %p389, %p390
      %s393 = sadd.s32 %s392, 1
      %p396 = scmp.eq.s32.totalorder %s43, 1
      %p397 = scmp.ne.s32.totalorder %s392, %s394
      %p398 = scmp.eq.s32.totalorder %s43, 0
      %p399 = por %p397, %p398
      %p400 = scmp.ne.s32.totalorder %s392, %s394
      %p401 = scmp.eq.s32.totalorder %s48, 1
      %p402 = por %p400, %p401
      %p403 = scmp.ne.s32.totalorder %s394, %s395
      %p404 = scmp.eq.s32.totalorder %s48, 0
      %p405 = por %p403, %p404
      %p406 = scmp.ne.s32.totalorder %s394, %s395
      %p407 = scmp.eq.s32.totalorder %s49, 1
      %p408 = por %p406, %p407
      %p410 = scmp.ne.s32.totalorder %s395, %s409
      %p411 = scmp.eq.s32.totalorder %s49, 0
      %p412 = por %p410, %p411
      %s413 = ssub.s32 %s43, %s50
      %p414 = scmp.eq.s32.totalorder %s413, 0
      %s416 = sadd.s32 %s415, 1
      %s417 = scalar_select %p414, %s415, %s416
      %p420 = pneg %p414
      %p421 = scmp.eq.s32.totalorder %s43, 1
      %p422 = por %p420, %p421
      %p423 = scmp.ne.s32.totalorder %s415, %s418
      %p424 = scmp.eq.s32.totalorder %s43, 0
      %p425 = por %p423, %p424
      %p426 = scmp.ne.s32.totalorder %s415, %s418
      %p427 = scmp.eq.s32.totalorder %s48, 1
      %p428 = por %p426, %p427
      %p429 = scmp.ne.s32.totalorder %s418, %s419
      %p430 = scmp.eq.s32.totalorder %s48, 0
      %p431 = por %p429, %p430
      %p432 = scmp.ne.s32.totalorder %s418, %s419
      %p433 = scmp.eq.s32.totalorder %s49, 1
      %p434 = por %p432, %p433
      %p436 = scmp.ne.s32.totalorder %s419, %s435
      %p437 = scmp.eq.s32.totalorder %s49, 0
      %p438 = por %p436, %p437
      %s439 = ssub.s32 %s43, %s50
      %p440 = scmp.eq.s32.totalorder %s439, 0
      %s442 = sadd.s32 %s441, 1
      %s443 = scalar_select %p440, %s441, %s442
      %p446 = pneg %p440
      %p447 = scmp.eq.s32.totalorder %s43, 1
      %p448 = por %p446, %p447
      %p449 = scmp.ne.s32.totalorder %s441, %s444
      %p450 = scmp.eq.s32.totalorder %s43, 0
      %p451 = por %p449, %p450
      %p452 = scmp.ne.s32.totalorder %s441, %s444
      %p453 = scmp.eq.s32.totalorder %s48, 1
      %p454 = por %p452, %p453
      %p455 = scmp.ne.s32.totalorder %s444, %s445
      %p456 = scmp.eq.s32.totalorder %s48, 0
      %p457 = por %p455, %p456
      %p458 = scmp.ne.s32.totalorder %s444, %s445
      %p459 = scmp.eq.s32.totalorder %s49, 1
      %p460 = por %p458, %p459
      %p462 = scmp.ne.s32.totalorder %s445, %s461
      %p463 = scmp.eq.s32.totalorder %s49, 0
      %p464 = por %p462, %p463
      %s465 = ssub.s32 %s43, %s50
      %p466 = scmp.eq.s32.totalorder %s465, 0
      %s468 = sadd.s32 %s467, 1
      %s469 = scalar_select %p466, %s467, %s468
      %p472 = pneg %p466
      %p473 = scmp.eq.s32.totalorder %s43, 1
      %p474 = por %p472, %p473
      %p475 = scmp.ne.s32.totalorder %s467, %s470
      %p476 = scmp.eq.s32.totalorder %s43, 0
      %p477 = por %p475, %p476
      %p478 = scmp.ne.s32.totalorder %s467, %s470
      %p479 = scmp.eq.s32.totalorder %s48, 1
      %p480 = por %p478, %p479
      %p481 = scmp.ne.s32.totalorder %s470, %s471
      %p482 = scmp.eq.s32.totalorder %s48, 0
      %p483 = por %p481, %p482
      %p484 = scmp.ne.s32.totalorder %s470, %s471
      %p485 = scmp.eq.s32.totalorder %s49, 1
      %p486 = por %p484, %p485
      %p488 = scmp.ne.s32.totalorder %s471, %s487
      %p489 = scmp.eq.s32.totalorder %s49, 0
      %p490 = por %p488, %p489
      %s491 = ssub.s32 %s43, %s50
      %p492 = scmp.eq.s32.totalorder %s491, 0
      %s494 = sadd.s32 %s493, 1
      %s495 = scalar_select %p492, %s493, %s494
      %p498 = pneg %p492
      %p499 = scmp.eq.s32.totalorder %s43, 1
      %p500 = por %p498, %p499
      %p501 = scmp.ne.s32.totalorder %s493, %s496
      %p502 = scmp.eq.s32.totalorder %s43, 0
      %p503 = por %p501, %p502
      %p504 = scmp.ne.s32.totalorder %s493, %s496
      %p505 = scmp.eq.s32.totalorder %s48, 1
      %p506 = por %p504, %p505
      %p507 = scmp.ne.s32.totalorder %s496, %s497
      %p508 = scmp.eq.s32.totalorder %s48, 0
      %p509 = por %p507, %p508
      %p510 = scmp.ne.s32.totalorder %s496, %s497
      %p511 = scmp.eq.s32.totalorder %s49, 1
      %p512 = por %p510, %p511
      %p514 = scmp.ne.s32.totalorder %s497, %s513
      %p515 = scmp.eq.s32.totalorder %s49, 0
      %p516 = por %p514, %p515
      %p517 = scmp.le.s32.totalorder 1, %s43
      %p518 = scmp.lt.s32.totalorder %s43, 3
      %p519 = pnand %p517, %p518
      %p520 = pneg %p519
      // Predicated region
      $region9: #{llava_forward.2} parent=5 // pred_check
        _
      $region10: #{llava_forward.2} parent=5 // pred_check_branch
        %522 = sbr.rel (%p519) target = $region12
      $region11: #{llava_forward.2} parent=5 // pred_region
        %s523 = ssub.s32 %s43, 1
        // Predicated region
        $region13: #{llava_forward.2} parent=11 // pred_check
          %p524 = pneg %p90
        $region14: #{llava_forward.2} parent=11 // pred_check_branch
          %526 = sbr.rel (%p524) target = $region16
        $region15: #{llava_forward.2} parent=11 // pred_region
          %s528 = ssub.s32 3072, 3072
          %529 = vsyncadd [#allocation6], %s528
          %s530 = sshll.u32 [#allocation5], 4
          %s531 = int_to_ptr.vmem [resolvable:$true] %s530
          %536 = dma.hbm_to_vmem [thread:$0]  %s3, 3072, %s531, [#allocation6], 128, 128, 8
        $region16: #{llava_forward.2} parent=11 // pred_fallthru
          _
        // Predicated region
        $region17: #{llava_forward.2} parent=11 // pred_check
          %p537 = pneg %p111
        $region18: #{llava_forward.2} parent=11 // pred_check_branch
          %539 = sbr.rel (%p537) target = $region20
        $region19: #{llava_forward.2} parent=11 // pred_region
          _
        $region20: #{llava_forward.2} parent=11 // pred_fallthru
          _
        // Predicated region
        $region21: #{llava_forward.2} parent=11 // pred_check
          %p540 = pneg %p132
        $region22: #{llava_forward.2} parent=11 // pred_check_branch
          %542 = sbr.rel (%p540) target = $region24
        $region23: #{llava_forward.2} parent=11 // pred_region
          %s544 = ssub.s32 4096, 4096
          %545 = vsyncadd [#allocation8], %s544
          %s546 = sshll.u32 [#allocation7], 4
          %s547 = int_to_ptr.vmem [resolvable:$true] %s546
          %552 = dma.hbm_to_vmem [thread:$0]  %s5, 4096, %s547, [#allocation8], 256, 256, 16
        $region24: #{llava_forward.2} parent=11 // pred_fallthru
          _
        // Predicated region
        $region25: #{llava_forward.2} parent=11 // pred_check
          %p553 = pneg %p153
        $region26: #{llava_forward.2} parent=11 // pred_check_branch
          %555 = sbr.rel (%p553) target = $region28
        $region27: #{llava_forward.2} parent=11 // pred_region
          _
        $region28: #{llava_forward.2} parent=11 // pred_fallthru
          _
        // Predicated region
        $region29: #{llava_forward.2} parent=11 // pred_check
          %p556 = pneg %p174
        $region30: #{llava_forward.2} parent=11 // pred_check_branch
          %558 = sbr.rel (%p556) target = $region32
        $region31: #{llava_forward.2} parent=11 // pred_region
          %s560 = ssub.s32 4096, 4096
          %561 = vsyncadd [#allocation8], %s560
          %s562 = sshll.u32 [#allocation9], 4
          %s563 = int_to_ptr.vmem [resolvable:$true] %s562
          %568 = dma.hbm_to_vmem [thread:$0]  %s7, 4096, %s563, [#allocation8], 128, 128, 8
        $region32: #{llava_forward.2} parent=11 // pred_fallthru
          _
        // Predicated region
        $region33: #{llava_forward.2} parent=11 // pred_check
          %p569 = pneg %p195
        $region34: #{llava_forward.2} parent=11 // pred_check_branch
          %571 = sbr.rel (%p569) target = $region36
        $region35: #{llava_forward.2} parent=11 // pred_region
          _
        $region36: #{llava_forward.2} parent=11 // pred_fallthru
          _
        // Predicated region
        $region37: #{llava_forward.2} parent=11 // pred_check
          %p572 = pneg %p216
        $region38: #{llava_forward.2} parent=11 // pred_check_branch
          %574 = sbr.rel (%p572) target = $region40
        $region39: #{llava_forward.2} parent=11 // pred_region
          %s576 = ssub.s32 4096, 4096
          %577 = vsyncadd [#allocation11], %s576
          %s578 = sshll.u32 [#allocation10], 4
          %s579 = int_to_ptr.vmem [resolvable:$true] %s578
          %584 = dma.hbm_to_vmem [thread:$0]  %s9, 4096, %s579, [#allocation11], 128, 128, 8
        $region40: #{llava_forward.2} parent=11 // pred_fallthru
          _
        // Predicated region
        $region41: #{llava_forward.2} parent=11 // pred_check
          %p585 = pneg %p237
        $region42: #{llava_forward.2} parent=11 // pred_check_branch
          %587 = sbr.rel (%p585) target = $region44
        $region43: #{llava_forward.2} parent=11 // pred_region
          _
        $region44: #{llava_forward.2} parent=11 // pred_fallthru
          _
        // Predicated region
        $region45: #{llava_forward.2} parent=11 // pred_check
          %p588 = pneg %p258
        $region46: #{llava_forward.2} parent=11 // pred_check_branch
          %590 = sbr.rel (%p588) target = $region48
        $region47: #{llava_forward.2} parent=11 // pred_region
          _
        $region48: #{llava_forward.2} parent=11 // pred_fallthru
          _
        // Predicated region
        $region49: #{llava_forward.2} parent=11 // pred_check
          %p591 = pneg %p279
        $region50: #{llava_forward.2} parent=11 // pred_check_branch
          %593 = sbr.rel (%p591) target = $region52
        $region51: #{llava_forward.2} parent=11 // pred_region
          %s595 = ssub.s32 2048, 2048
          %596 = vsyncadd [#allocation11], %s595
          %s597 = sshll.u32 [#allocation12], 4
          %s598 = int_to_ptr.vmem [resolvable:$true] %s597
          %603 = dma.hbm_to_vmem [thread:$0]  %s12, 2048, %s598, [#allocation11], 128, 128, 8
        $region52: #{llava_forward.2} parent=11 // pred_fallthru
          _
        // Predicated region
        $region53: #{llava_forward.2} parent=11 // pred_check
          %p604 = pneg %p300
        $region54: #{llava_forward.2} parent=11 // pred_check_branch
          %606 = sbr.rel (%p604) target = $region56
        $region55: #{llava_forward.2} parent=11 // pred_region
          _
        $region56: #{llava_forward.2} parent=11 // pred_fallthru
          _
        // Predicated region
        $region57: #{llava_forward.2} parent=11 // pred_check
          %p607 = pneg %p321
        $region58: #{llava_forward.2} parent=11 // pred_check_branch
          %609 = sbr.rel (%p607) target = $region60
        $region59: #{llava_forward.2} parent=11 // pred_region
          _
        $region60: #{llava_forward.2} parent=11 // pred_fallthru
          _
        // Predicated region
        $region61: #{llava_forward.2} parent=11 // pred_check
          %p610 = pneg %p342
        $region62: #{llava_forward.2} parent=11 // pred_check_branch
          %612 = sbr.rel (%p610) target = $region64
        $region63: #{llava_forward.2} parent=11 // pred_region
          %s614 = ssub.s32 4096, 4096
          %615 = vsyncadd [#allocation14], %s614
          %s616 = sshll.u32 [#allocation13], 4
          %s617 = int_to_ptr.vmem [resolvable:$true] %s616
          %622 = dma.hbm_to_vmem [thread:$0]  %s15, 4096, %s617, [#allocation14], 128, 128, 8
        $region64: #{llava_forward.2} parent=11 // pred_fallthru
          _
        // Predicated region
        $region65: #{llava_forward.2} parent=11 // pred_check
          %p623 = pneg %p363
        $region66: #{llava_forward.2} parent=11 // pred_check_branch
          %625 = sbr.rel (%p623) target = $region68
        $region67: #{llava_forward.2} parent=11 // pred_region
          _
        $region68: #{llava_forward.2} parent=11 // pred_fallthru
          _
        // Predicated region
        $region69: #{llava_forward.2} parent=11 // pred_check
          %p626 = pneg %p384
        $region70: #{llava_forward.2} parent=11 // pred_check_branch
          %628 = sbr.rel (%p626) target = $region72
        $region71: #{llava_forward.2} parent=11 // pred_region
          %s630 = ssub.s32 4096, 4096
          %631 = vsyncadd [#allocation14], %s630
          %s632 = sshll.u32 [#allocation15], 4
          %s633 = int_to_ptr.vmem [resolvable:$true] %s632
          %638 = dma.hbm_to_vmem [thread:$0]  %s17, 4096, %s633, [#allocation14], 256, 256, 16
        $region72: #{llava_forward.2} parent=11 // pred_fallthru
          _
        // Predicated region
        $region73: #{llava_forward.2} parent=11 // pred_check
          %p639 = pneg %p405
        $region74: #{llava_forward.2} parent=11 // pred_check_branch
          %641 = sbr.rel (%p639) target = $region76
        $region75: #{llava_forward.2} parent=11 // pred_region
          _
        $region76: #{llava_forward.2} parent=11 // pred_fallthru
          _
      $region12: #{llava_forward.2} parent=5 // pred_fallthru
        _
      %p642 = scmp.lt.s32.totalorder %s43, 2
      // Predicated region
      $region77: #{llava_forward.2} parent=5 // pred_check
        %p643 = pneg %p642
      $region78: #{llava_forward.2} parent=5 // pred_check_branch
        %645 = sbr.rel (%p643) target = $region80
      $region79: #{llava_forward.2} parent=5 // pred_region
        // Predicated region
        $region81: #{llava_forward.2} parent=79 // pred_check
          %p646 = pneg %p63
        $region82: #{llava_forward.2} parent=79 // pred_check_branch
          %648 = sbr.rel (%p646) target = $region84
        $region83: #{llava_forward.2} parent=79 // pred_region
          %p649 = scmp.lt.s32.totalorder %s43, 1
          %s650 = scalar_select %p649, %s43, 1
          %s651 = smul.addr %s650, 2
          %s652 = smul.addr %s651, 4
          %s653 = scalar_lea.vmem %s2, %s652
        $region84: #{llava_forward.2} parent=79 // pred_fallthru
          _
      $region80: #{llava_forward.2} parent=5 // pred_fallthru
        _
      %p654 = scmp.le.s32.totalorder 1, %s43
      %p655 = scmp.lt.s32.totalorder %s43, 3
      %p656 = pnand %p654, %p655
      %p657 = pneg %p656
      // Predicated region
      $region85: #{llava_forward.2} parent=5 // pred_check
        _
      $region86: #{llava_forward.2} parent=5 // pred_check_branch
        %659 = sbr.rel (%p656) target = $region88
      $region87: #{llava_forward.2} parent=5 // pred_region
        %s660 = ssub.s32 %s43, 1
        // Predicated region
        $region89: #{llava_forward.2} parent=87 // pred_check
          %p661 = pneg %p90
        $region90: #{llava_forward.2} parent=87 // pred_check_branch
          %663 = sbr.rel (%p661) target = $region92
        $region91: #{llava_forward.2} parent=87 // pred_region
          %664 = dma.done [#allocation6], 3072
        $region92: #{llava_forward.2} parent=87 // pred_fallthru
          _
        // Predicated region
        $region93: #{llava_forward.2} parent=87 // pred_check
          %p665 = pneg %p132
        $region94: #{llava_forward.2} parent=87 // pred_check_branch
          %667 = sbr.rel (%p665) target = $region96
        $region95: #{llava_forward.2} parent=87 // pred_region
          %668 = dma.done [#allocation8], 4096
        $region96: #{llava_forward.2} parent=87 // pred_fallthru
          _
        // Predicated region
        $region97: #{llava_forward.2} parent=87 // pred_check
          %p669 = pneg %p174
        $region98: #{llava_forward.2} parent=87 // pred_check_branch
          %671 = sbr.rel (%p669) target = $region100
        $region99: #{llava_forward.2} parent=87 // pred_region
          %672 = dma.done [#allocation8], 4096
        $region100: #{llava_forward.2} parent=87 // pred_fallthru
          _
        // Predicated region
        $region101: #{llava_forward.2} parent=87 // pred_check
          %p673 = pneg %p216
        $region102: #{llava_forward.2} parent=87 // pred_check_branch
          %675 = sbr.rel (%p673) target = $region104
        $region103: #{llava_forward.2} parent=87 // pred_region
          %676 = dma.done [#allocation11], 4096
        $region104: #{llava_forward.2} parent=87 // pred_fallthru
          _
        // Predicated region
        $region105: #{llava_forward.2} parent=87 // pred_check
          %p677 = pneg %p279
        $region106: #{llava_forward.2} parent=87 // pred_check_branch
          %679 = sbr.rel (%p677) target = $region108
        $region107: #{llava_forward.2} parent=87 // pred_region
          %680 = dma.done [#allocation11], 2048
        $region108: #{llava_forward.2} parent=87 // pred_fallthru
          _
        // Predicated region
        $region109: #{llava_forward.2} parent=87 // pred_check
          %p681 = pneg %p342
        $region110: #{llava_forward.2} parent=87 // pred_check_branch
          %683 = sbr.rel (%p681) target = $region112
        $region111: #{llava_forward.2} parent=87 // pred_region
          %684 = dma.done [#allocation14], 4096
        $region112: #{llava_forward.2} parent=87 // pred_fallthru
          _
        // Predicated region
        $region113: #{llava_forward.2} parent=87 // pred_check
          %p685 = pneg %p384
        $region114: #{llava_forward.2} parent=87 // pred_check_branch
          %687 = sbr.rel (%p685) target = $region116
        $region115: #{llava_forward.2} parent=87 // pred_region
          %688 = dma.done [#allocation14], 4096
        $region116: #{llava_forward.2} parent=87 // pred_fallthru
          _
        %p689 = scmp.lt.s32.totalorder %s48, 1
        %s690 = scalar_select %p689, %s48, 1
        %s691 = smul.addr %s690, 2
        %s692 = smul.addr %s691, 4
        %s693 = scalar_lea.vmem %s2, %s692
        %p694 = pneg %p69
        %p695 = pneg %p66
        %p696 = pneg %p90
        %p697 = pneg %p87
        %p698 = pneg %p111
        %p699 = pneg %p108
        %p700 = pneg %p132
        %p701 = pneg %p129
        %p702 = pneg %p153
        %p703 = pneg %p150
        %p704 = pneg %p174
        %p705 = pneg %p171
        %p706 = pneg %p195
        %p707 = pneg %p192
        %p708 = pneg %p216
        %p709 = pneg %p213
        %p710 = pneg %p237
        %p711 = pneg %p234
        %p712 = pneg %p258
        %p713 = pneg %p255
        %p714 = pneg %p279
        %p715 = pneg %p276
        %p716 = pneg %p300
        %p717 = pneg %p297
        %p718 = pneg %p321
        %p719 = pneg %p318
        %p720 = pneg %p342
        %p721 = pneg %p339
        %p722 = pneg %p363
        %p723 = pneg %p360
        %p724 = pneg %p384
        %p725 = pneg %p381
        %p726 = pneg %p405
        %p727 = pneg %p402
        %p728 = pneg %p431
        %p729 = pneg %p428
        %p730 = scmp.lt.s32.totalorder %s48, 1
        %s731 = scalar_select %p730, %s48, 1
        %s732 = smul.addr %s731, 4
        %s733 = smul.addr %s732, 8
        %s734 = scalar_lea.vmem %s19, %s733
        %p735 = pneg %p457
        %p736 = pneg %p454
        %p737 = scmp.lt.s32.totalorder %s48, 1
        %s738 = scalar_select %p737, %s48, 1
        %s739 = smul.addr %s738, 2
        %s740 = smul.addr %s739, 8
        %s741 = scalar_lea.vmem %s20, %s740
        %p742 = pneg %p483
        %p743 = pneg %p480
        %p744 = scmp.lt.s32.totalorder %s48, 1
        %s745 = scalar_select %p744, %s48, 1
        %s746 = smul.addr %s745, 2
        %s747 = smul.addr %s746, 8
        %s748 = scalar_lea.vmem %s21, %s747
        %p749 = pneg %p509
        %p750 = pneg %p506
        %p751 = scmp.lt.s32.totalorder %s48, 1
        %s752 = scalar_select %p751, %s48, 1
        %s753 = smul.addr %s752, 2
        %s754 = smul.addr %s753, 8
        %s755 = scalar_lea.vmem %s22, %s754
        %p756 = scmp.lt.s32.totalorder %s48, 1
        %s757 = scalar_select %p756, %s48, 1
        %s758 = smul.addr %s757, 2
        %s759 = smul.addr %s758, 4
        %s760 = scalar_lea.vmem %s2, %s759
        %p761 = scmp.lt.s32.totalorder %s48, 1
        %s762 = scalar_select %p761, %s48, 1
        %s763 = smul.addr %s762, 4
        %s764 = smul.addr %s763, 8
        %s765 = scalar_lea.vmem %s19, %s764
        %p766 = scmp.lt.s32.totalorder %s48, 1
        %s767 = scalar_select %p766, %s48, 1
        %s768 = smul.addr %s767, 2
        %s769 = smul.addr %s768, 8
        %s770 = scalar_lea.vmem %s20, %s769
        %p771 = scmp.lt.s32.totalorder %s48, 1
        %s772 = scalar_select %p771, %s48, 1
        %s773 = smul.addr %s772, 2
        %s774 = smul.addr %s773, 8
        %s775 = scalar_lea.vmem %s21, %s774
        %p776 = scmp.lt.s32.totalorder %s48, 1
        %s777 = scalar_select %p776, %s48, 1
        %s778 = smul.addr %s777, 2
        %s779 = smul.addr %s778, 8
        %s780 = scalar_lea.vmem %s22, %s779
        %v782 = vld [vmem:[%s760] sm:$0xff]
        %v784 = vcombine.high %v782, %v782
        %v786 = vpack.c.bf16 %v782, %v782
        %v787 = vpack.c.bf16 %v784, %v784
        %v788 = vld [vmem:[#allocation5] sm:$0xff]
        %v789 = vld [vmem:[#allocation5 + $0x8] sm:$0xff]
        %v790 = vld [vmem:[#allocation5 + $0x10] sm:$0xff]
        %v791 = vld [vmem:[#allocation5 + $0x18] sm:$0xff]
        %v792 = vld [vmem:[#allocation5 + $0x20] sm:$0xff]
        %v793 = vld [vmem:[#allocation5 + $0x28] sm:$0xff]
        %v794 = vld [vmem:[#allocation5 + $0x30] sm:$0xff]
        %v795 = vld [vmem:[#allocation5 + $0x38] sm:$0xff]
        %v796 = vld [vmem:[#allocation5 + $0x40] sm:$0xff]
        %v797 = vld [vmem:[#allocation5 + $0x48] sm:$0xff]
        %v798 = vld [vmem:[#allocation5 + $0x50] sm:$0xff]
        %v799 = vld [vmem:[#allocation5 + $0x58] sm:$0xff]
        %v800 = vld [vmem:[#allocation5 + $0x60] sm:$0xff]
        %v801 = vld [vmem:[#allocation5 + $0x68] sm:$0xff]
        %v802 = vld [vmem:[#allocation5 + $0x70] sm:$0xff]
        %v803 = vld [vmem:[#allocation5 + $0x78] sm:$0xff]
        %v804 = vld [vmem:[#allocation5 + $0x80] sm:$0xff]
        %v805 = vld [vmem:[#allocation5 + $0x88] sm:$0xff]
        %v806 = vld [vmem:[#allocation5 + $0x90] sm:$0xff]
        %v807 = vld [vmem:[#allocation5 + $0x98] sm:$0xff]
        %v808 = vld [vmem:[#allocation5 + $0xa0] sm:$0xff]
        %v809 = vld [vmem:[#allocation5 + $0xa8] sm:$0xff]
        %v810 = vld [vmem:[#allocation5 + $0xb0] sm:$0xff]
        %v811 = vld [vmem:[#allocation5 + $0xb8] sm:$0xff]
        %v812 = vpack.c.bf16 %v789, %v788
        %v813 = vpack.c.bf16 %v791, %v790
        %v814 = vpack.c.bf16 %v793, %v792
        %v815 = vpack.c.bf16 %v795, %v794
        %v816 = vpack.c.bf16 %v797, %v796
        %v817 = vpack.c.bf16 %v799, %v798
        %v818 = vpack.c.bf16 %v801, %v800
        %v819 = vpack.c.bf16 %v803, %v802
        %v820 = vpack.c.bf16 %v805, %v804
        %v821 = vpack.c.bf16 %v807, %v806
        %v822 = vpack.c.bf16 %v809, %v808
        %v823 = vpack.c.bf16 %v811, %v810
        %v824 = vld [vmem:[%s4] sm:$0x1]
        %v826 = vlaneseq
        %v827 = vshrl.u32 %v826, 7
        %v828 = vsub.s32 0, %v827
        %v829 = vrot.slane %v824, %v828
        %vm831 = vcmask 523264
        %v833 = vsel %vm831, %v787, 0
        %835 = vmatprep.subr.bf16.mxu0 0
        %836 = vmatpush1.bf16.msra.mxu0 %v812
        %837 = vmatprep.subr.bf16.mxu0 0
        %838 = vmatpush1.bf16.msra.mxu0 %v813
        %839 = vmatprep.subr.bf16.mxu0 0
        %840 = vmatpush1.bf16.msra.mxu0 %v814
        %841 = vmatprep.subr.bf16.mxu0 0
        %842 = vmatpush1.bf16.msra.mxu0 %v815
        %843 = vmatprep.subr.bf16.mxu0 0
        %844 = vmatpush1.bf16.msra.mxu0 %v816
        %845 = vmatprep.subr.bf16.mxu0 0
        %846 = vmatpush1.bf16.msra.mxu0 %v817
        %847 = vmatprep.subr.bf16.mxu0 0
        %848 = vmatpush1.bf16.msra.mxu0 %v818
        %849 = vmatprep.subr.bf16.mxu0 0
        %850 = vmatpush1.bf16.msra.mxu0 %v819
        %851 = vmatprep.subr.bf16.mxu0 0
        %852 = vmatpush1.bf16.msra.mxu0 %v820
        %853 = vmatprep.subr.bf16.mxu0 0
        %854 = vmatpush1.bf16.msra.mxu0 %v821
        %855 = vmatprep.subr.bf16.mxu0 0
        %856 = vmatpush1.bf16.msra.mxu0 %v822
        %857 = vmatprep.subr.bf16.mxu0 0
        %858 = vmatpush1.bf16.msra.mxu0 %v823
        %859 = vmatprep.subr.bf16.mxu0 0
        %860 = vmatpush1.bf16.msra.mxu0 0
        %861 = vmatprep.subr.bf16.mxu0 0
        %862 = vmatpush1.bf16.msra.mxu0 0
        %863 = vmatprep.subr.bf16.mxu0 0
        %864 = vmatpush1.bf16.msra.mxu0 0
        %865 = vmatprep.subr.bf16.mxu0 0
        %866 = vmatpush1.bf16.msra.mxu0 0
        %867 = vmatprep.mubr.bf16.mxu0 %v833
        %868 = vmatmul.mubr.bf16.gmra.mrb[0].mxu0 %v786
        %v869 = vpop.f32.mrb[0].mxu0
        %v870 = vadd.f32 %v829, %v869
        %v871 = vpop.f32.mrb[0].mxu0
        %v872 = vpop.f32.mrb[0].mxu0
        %v873 = vpop.f32.mrb[0].mxu0
        %874 = vdwg.mxu0
        %v875 = vpack.c.bf16 %v870, %v870
        %v876 = vld [vmem:[#allocation7] sm:$0xff]
        %v877 = vld [vmem:[#allocation7 + $0x8] sm:$0xff]
        %v878 = vld [vmem:[#allocation7 + $0x10] sm:$0xff]
        %v879 = vld [vmem:[#allocation7 + $0x18] sm:$0xff]
        %v880 = vld [vmem:[#allocation7 + $0x20] sm:$0xff]
        %v881 = vld [vmem:[#allocation7 + $0x28] sm:$0xff]
        %v882 = vld [vmem:[#allocation7 + $0x30] sm:$0xff]
        %v883 = vld [vmem:[#allocation7 + $0x38] sm:$0xff]
        %v884 = vld [vmem:[#allocation7 + $0x40] sm:$0xff]
        %v885 = vld [vmem:[#allocation7 + $0x48] sm:$0xff]
        %v886 = vld [vmem:[#allocation7 + $0x50] sm:$0xff]
        %v887 = vld [vmem:[#allocation7 + $0x58] sm:$0xff]
        %v888 = vld [vmem:[#allocation7 + $0x60] sm:$0xff]
        %v889 = vld [vmem:[#allocation7 + $0x68] sm:$0xff]
        %v890 = vld [vmem:[#allocation7 + $0x70] sm:$0xff]
        %v891 = vld [vmem:[#allocation7 + $0x78] sm:$0xff]
        %v892 = vld [vmem:[#allocation7 + $0x80] sm:$0xff]
        %v893 = vld [vmem:[#allocation7 + $0x88] sm:$0xff]
        %v894 = vld [vmem:[#allocation7 + $0x90] sm:$0xff]
        %v895 = vld [vmem:[#allocation7 + $0x98] sm:$0xff]
        %v896 = vld [vmem:[#allocation7 + $0xa0] sm:$0xff]
        %v897 = vld [vmem:[#allocation7 + $0xa8] sm:$0xff]
        %v898 = vld [vmem:[#allocation7 + $0xb0] sm:$0xff]
        %v899 = vld [vmem:[#allocation7 + $0xb8] sm:$0xff]
        %v900 = vld [vmem:[#allocation7 + $0xc0] sm:$0xff]
        %v901 = vld [vmem:[#allocation7 + $0xc8] sm:$0xff]
        %v902 = vld [vmem:[#allocation7 + $0xd0] sm:$0xff]
        %v903 = vld [vmem:[#allocation7 + $0xd8] sm:$0xff]
        %v904 = vld [vmem:[#allocation7 + $0xe0] sm:$0xff]
        %v905 = vld [vmem:[#allocation7 + $0xe8] sm:$0xff]
        %v906 = vld [vmem:[#allocation7 + $0xf0] sm:$0xff]
        %v907 = vld [vmem:[#allocation7 + $0xf8] sm:$0xff]
        %v908 = vpack.c.bf16 %v878, %v876
        %v909 = vpack.c.bf16 %v879, %v877
        %v910 = vpack.c.bf16 %v882, %v880
        %v911 = vpack.c.bf16 %v883, %v881
        %v912 = vpack.c.bf16 %v886, %v884
        %v913 = vpack.c.bf16 %v887, %v885
        %v914 = vpack.c.bf16 %v890, %v888
        %v915 = vpack.c.bf16 %v891, %v889
        %v916 = vpack.c.bf16 %v894, %v892
        %v917 = vpack.c.bf16 %v895, %v893
        %v918 = vpack.c.bf16 %v898, %v896
        %v919 = vpack.c.bf16 %v899, %v897
        %v920 = vpack.c.bf16 %v902, %v900
        %v921 = vpack.c.bf16 %v903, %v901
        %v922 = vpack.c.bf16 %v906, %v904
        %v923 = vpack.c.bf16 %v907, %v905
        %v924 = vld [vmem:[%s6] sm:$0x3]
        %v926 = vlaneseq
        %v927 = vshrl.u32 %v926, 7
        %v928 = vsub.s32 0, %v927
        %v929 = vrot.slane %v924, %v928
        %v930 = vlaneseq
        %v931 = vshrl.u32 %v930, 7
        %v932 = vsub.s32 1, %v931
        %v933 = vrot.slane %v924, %v932
        %936 = vmatprep.subr.bf16.mxu0 %v909
        %937 = vmatpush1.bf16.msra.mxu0 %v908
        %938 = vmatprep.subr.bf16.mxu0 %v911
        %939 = vmatpush1.bf16.msra.mxu0 %v910
        %940 = vmatprep.subr.bf16.mxu0 %v913
        %941 = vmatpush1.bf16.msra.mxu0 %v912
        %942 = vmatprep.subr.bf16.mxu0 %v915
        %943 = vmatpush1.bf16.msra.mxu0 %v914
        %944 = vmatprep.subr.bf16.mxu0 %v917
        %945 = vmatpush1.bf16.msra.mxu0 %v916
        %946 = vmatprep.subr.bf16.mxu0 %v919
        %947 = vmatpush1.bf16.msra.mxu0 %v918
        %948 = vmatprep.subr.bf16.mxu0 %v921
        %949 = vmatpush1.bf16.msra.mxu0 %v920
        %950 = vmatprep.subr.bf16.mxu0 %v923
        %951 = vmatpush1.bf16.msra.mxu0 %v922
        %952 = vmatprep.subr.bf16.mxu0 0
        %953 = vmatpush1.bf16.msra.mxu0 0
        %954 = vmatprep.subr.bf16.mxu0 0
        %955 = vmatpush1.bf16.msra.mxu0 0
        %956 = vmatprep.subr.bf16.mxu0 0
        %957 = vmatpush1.bf16.msra.mxu0 0
        %958 = vmatprep.subr.bf16.mxu0 0
        %959 = vmatpush1.bf16.msra.mxu0 0
        %960 = vmatprep.subr.bf16.mxu0 0
        %961 = vmatpush1.bf16.msra.mxu0 0
        %962 = vmatprep.subr.bf16.mxu0 0
        %963 = vmatpush1.bf16.msra.mxu0 0
        %964 = vmatprep.subr.bf16.mxu0 0
        %965 = vmatpush1.bf16.msra.mxu0 0
        %966 = vmatprep.subr.bf16.mxu0 0
        %967 = vmatpush1.bf16.msra.mxu0 0
        %968 = vmatprep.mubr.bf16.mxu0 0
        %969 = vmatmul.mubr.bf16.gmra.mrb[0].mxu0 %v875
        %v970 = vpop.f32.mrb[0].mxu0
        %v971 = vadd.f32 %v929, %v970
        %v972 = vpop.f32.mrb[0].mxu0
        %v973 = vadd.f32 %v933, %v972
        %v974 = vpop.f32.mrb[0].mxu0
        %v975 = vpop.f32.mrb[0].mxu0
        %976 = vdwg.mxu0
        %v977 = vmul.f32 %v971, %v971
        %v978 = vmul.f32 %v973, %v973
        %v979 = vmul.f32 %v971, %v977
        %v980 = vmul.f32 %v973, %v978
        %v981 = vmul.f32 %v979, 0.044715
        %v982 = vmul.f32 %v980, 0.044715
        %v983 = vadd.f32 %v971, %v981
        %v984 = vadd.f32 %v973, %v982
        %v985 = vmul.f32 %v983, 0.7978846
        %v986 = vmul.f32 %v984, 0.7978846
        %v987 = vtanh.pop %v985
        %v988 = vtanh.pop %v986
        %v989 = vadd.f32 %v987, 1.0
        %v990 = vadd.f32 %v988, 1.0
        %v991 = vmul.f32 %v989, 0.5
        %v992 = vmul.f32 %v990, 0.5
        %v993 = vmul.f32 %v971, %v991
        %v994 = vmul.f32 %v973, %v992
        %v995 = vpack.c.bf16 %v993, %v993
        %v996 = vpack.c.bf16 %v994, %v994
        %v997 = vld [vmem:[#allocation9] sm:$0xff]
        %v998 = vld [vmem:[#allocation9 + $0x8] sm:$0xff]
        %v999 = vld [vmem:[#allocation9 + $0x10] sm:$0xff]
        %v1000 = vld [vmem:[#allocation9 + $0x18] sm:$0xff]
        %v1001 = vld [vmem:[#allocation9 + $0x20] sm:$0xff]
        %v1002 = vld [vmem:[#allocation9 + $0x28] sm:$0xff]
        %v1003 = vld [vmem:[#allocation9 + $0x30] sm:$0xff]
        %v1004 = vld [vmem:[#allocation9 + $0x38] sm:$0xff]
        %v1005 = vld [vmem:[#allocation9 + $0x40] sm:$0xff]
        %v1006 = vld [vmem:[#allocation9 + $0x48] sm:$0xff]
        %v1007 = vld [vmem:[#allocation9 + $0x50] sm:$0xff]
        %v1008 = vld [vmem:[#allocation9 + $0x58] sm:$0xff]
        %v1009 = vld [vmem:[#allocation9 + $0x60] sm:$0xff]
        %v1010 = vld [vmem:[#allocation9 + $0x68] sm:$0xff]
        %v1011 = vld [vmem:[#allocation9 + $0x70] sm:$0xff]
        %v1012 = vld [vmem:[#allocation9 + $0x78] sm:$0xff]
        %v1013 = vld [vmem:[#allocation9 + $0x80] sm:$0xff]
        %v1014 = vld [vmem:[#allocation9 + $0x88] sm:$0xff]
        %v1015 = vld [vmem:[#allocation9 + $0x90] sm:$0xff]
        %v1016 = vld [vmem:[#allocation9 + $0x98] sm:$0xff]
        %v1017 = vld [vmem:[#allocation9 + $0xa0] sm:$0xff]
        %v1018 = vld [vmem:[#allocation9 + $0xa8] sm:$0xff]
        %v1019 = vld [vmem:[#allocation9 + $0xb0] sm:$0xff]
        %v1020 = vld [vmem:[#allocation9 + $0xb8] sm:$0xff]
        %v1021 = vld [vmem:[#allocation9 + $0xc0] sm:$0xff]
        %v1022 = vld [vmem:[#allocation9 + $0xc8] sm:$0xff]
        %v1023 = vld [vmem:[#allocation9 + $0xd0] sm:$0xff]
        %v1024 = vld [vmem:[#allocation9 + $0xd8] sm:$0xff]
        %v1025 = vld [vmem:[#allocation9 + $0xe0] sm:$0xff]
        %v1026 = vld [vmem:[#allocation9 + $0xe8] sm:$0xff]
        %v1027 = vld [vmem:[#allocation9 + $0xf0] sm:$0xff]
        %v1028 = vld [vmem:[#allocation9 + $0xf8] sm:$0xff]
        %v1029 = vpack.c.bf16 %v998, %v997
        %v1030 = vpack.c.bf16 %v1000, %v999
        %v1031 = vpack.c.bf16 %v1002, %v1001
        %v1032 = vpack.c.bf16 %v1004, %v1003
        %v1033 = vpack.c.bf16 %v1006, %v1005
        %v1034 = vpack.c.bf16 %v1008, %v1007
        %v1035 = vpack.c.bf16 %v1010, %v1009
        %v1036 = vpack.c.bf16 %v1012, %v1011
        %v1037 = vpack.c.bf16 %v1014, %v1013
        %v1038 = vpack.c.bf16 %v1016, %v1015
        %v1039 = vpack.c.bf16 %v1018, %v1017
        %v1040 = vpack.c.bf16 %v1020, %v1019
        %v1041 = vpack.c.bf16 %v1022, %v1021
        %v1042 = vpack.c.bf16 %v1024, %v1023
        %v1043 = vpack.c.bf16 %v1026, %v1025
        %v1044 = vpack.c.bf16 %v1028, %v1027
        %v1045 = vld [vmem:[%s8] sm:$0x1]
        %v1047 = vlaneseq
        %v1048 = vshrl.u32 %v1047, 7
        %v1049 = vsub.s32 0, %v1048
        %v1050 = vrot.slane %v1045, %v1049
        %1052 = vmatprep.subr.bf16.mxu0 0
        %1053 = vmatpush1.bf16.msra.mxu0 %v1029
        %1054 = vmatprep.subr.bf16.mxu0 0
        %1055 = vmatpush1.bf16.msra.mxu0 %v1030
        %1056 = vmatprep.subr.bf16.mxu0 0
        %1057 = vmatpush1.bf16.msra.mxu0 %v1031
        %1058 = vmatprep.subr.bf16.mxu0 0
        %1059 = vmatpush1.bf16.msra.mxu0 %v1032
        %1060 = vmatprep.subr.bf16.mxu0 0
        %1061 = vmatpush1.bf16.msra.mxu0 %v1033
        %1062 = vmatprep.subr.bf16.mxu0 0
        %1063 = vmatpush1.bf16.msra.mxu0 %v1034
        %1064 = vmatprep.subr.bf16.mxu0 0
        %1065 = vmatpush1.bf16.msra.mxu0 %v1035
        %1066 = vmatprep.subr.bf16.mxu0 0
        %1067 = vmatpush1.bf16.msra.mxu0 %v1036
        %1068 = vmatprep.subr.bf16.mxu0 0
        %1069 = vmatpush1.bf16.msra.mxu0 %v1037
        %1070 = vmatprep.subr.bf16.mxu0 0
        %1071 = vmatpush1.bf16.msra.mxu0 %v1038
        %1072 = vmatprep.subr.bf16.mxu0 0
        %1073 = vmatpush1.bf16.msra.mxu0 %v1039
        %1074 = vmatprep.subr.bf16.mxu0 0
        %1075 = vmatpush1.bf16.msra.mxu0 %v1040
        %1076 = vmatprep.subr.bf16.mxu0 0
        %1077 = vmatpush1.bf16.msra.mxu0 %v1041
        %1078 = vmatprep.subr.bf16.mxu0 0
        %1079 = vmatpush1.bf16.msra.mxu0 %v1042
        %1080 = vmatprep.subr.bf16.mxu0 0
        %1081 = vmatpush1.bf16.msra.mxu0 %v1043
        %1082 = vmatprep.subr.bf16.mxu0 0
        %1083 = vmatpush1.bf16.msra.mxu0 %v1044
        %1084 = vmatprep.mubr.bf16.mxu0 %v996
        %1085 = vmatmul.mubr.bf16.gmra.mrb[0].mxu0 %v995
        %v1086 = vpop.f32.mrb[0].mxu0
        %v1087 = vadd.f32 %v1050, %v1086
        %v1088 = vpop.f32.mrb[0].mxu0
        %v1089 = vpop.f32.mrb[0].mxu0
        %v1090 = vpop.f32.mrb[0].mxu0
        %1091 = vdwg.mxu0
        %v1092 = vlaneseq
        %v1093 = vshrl.u32 %v1092, 7
        %v1094 = vadd.s32 %v1093, 8
        %v1095 = vlaneseq
        %v1096 = vand.u32 %v1095, 127
        %vm1097 = vcmp.eq.s32.totalorder %v1093, %v1096
        %vm1098 = vcmp.eq.s32.totalorder %v1094, %v1096
        %v1099 = vsel %vm1097, 1, 0
        %v1100 = vsel %vm1098, 1, 0
        %v1101 = vcvt.s32.f32 %v1099
        %v1102 = vcvt.s32.f32 %v1100
        %vm1103 = vcmp.eq.s32.totalorder %v1093, 4
        %vm1104 = vcmp.eq.s32.totalorder %v1094, 4
        %s1105 = smul.u32 %s48, 128
        %s1106 = sld [smem:[#allocation3 + %s1105]]
        %v1107 = vstv %s1106
        %v1108 = vsel %vm1103, %v1107, 4294967295
        %v1109 = vsel %vm1104, %v1107, 4294967295
        %vm1110 = vcmp.eq.s32.totalorder %v1093, 5
        %vm1111 = vcmp.eq.s32.totalorder %v1094, 5
        %s1112 = sadd.s32 %s1105, 1
        %s1113 = sld [smem:[#allocation3 + %s1112]]
        %v1114 = vstv %s1113
        %v1115 = vsel %vm1110, %v1114, %v1108
        %v1116 = vsel %vm1111, %v1114, %v1109
        %vm1117 = vcmp.eq.s32.totalorder %v1093, 6
        %vm1118 = vcmp.eq.s32.totalorder %v1094, 6
        %s1119 = sadd.s32 %s1105, 2
        %s1120 = sld [smem:[#allocation3 + %s1119]]
        %v1121 = vstv %s1120
        %v1122 = vsel %vm1117, %v1121, %v1115
        %v1123 = vsel %vm1118, %v1121, %v1116
        %vm1124 = vcmp.eq.s32.totalorder %v1093, 7
        %vm1125 = vcmp.eq.s32.totalorder %v1094, 7
        %s1126 = sadd.s32 %s1105, 3
        %s1127 = sld [smem:[#allocation3 + %s1126]]
        %v1128 = vstv %s1127
        %v1129 = vsel %vm1124, %v1128, %v1122
        %v1130 = vsel %vm1125, %v1128, %v1123
        %vm1131 = vcmp.eq.s32.totalorder %v1093, 8
        %vm1132 = vcmp.eq.s32.totalorder %v1094, 8
        %s1133 = sadd.s32 %s1105, 4
        %s1134 = sld [smem:[#allocation3 + %s1133]]
        %v1135 = vstv %s1134
        %v1136 = vsel %vm1131, %v1135, %v1129
        %v1137 = vsel %vm1132, %v1135, %v1130
        %vm1138 = vcmp.eq.s32.totalorder %v1093, 9
        %vm1139 = vcmp.eq.s32.totalorder %v1094, 9
        %s1140 = sadd.s32 %s1105, 5
        %s1141 = sld [smem:[#allocation3 + %s1140]]
        %v1142 = vstv %s1141
        %v1143 = vsel %vm1138, %v1142, %v1136
        %v1144 = vsel %vm1139, %v1142, %v1137
        %vm1145 = vcmp.eq.s32.totalorder %v1093, 10
        %vm1146 = vcmp.eq.s32.totalorder %v1094, 10
        %s1147 = sadd.s32 %s1105, 6
        %s1148 = sld [smem:[#allocation3 + %s1147]]
        %v1149 = vstv %s1148
        %v1150 = vsel %vm1145, %v1149, %v1143
        %v1151 = vsel %vm1146, %v1149, %v1144
        %vm1152 = vcmp.eq.s32.totalorder %v1093, 11
        %vm1153 = vcmp.eq.s32.totalorder %v1094, 11
        %s1154 = sadd.s32 %s1105, 7
        %s1155 = sld [smem:[#allocation3 + %s1154]]
        %v1156 = vstv %s1155
        %v1157 = vsel %vm1152, %v1156, %v1150
        %v1158 = vsel %vm1153, %v1156, %v1151
        %v1159 = vadd.s32 %v1096, 128
        %vm1160 = vcmp.eq.s32.totalorder %v1096, %v1157
        %vm1161 = vcmp.eq.s32.totalorder %v1159, %v1157
        %vm1162 = vcmp.eq.s32.totalorder %v1096, %v1158
        %vm1163 = vcmp.eq.s32.totalorder %v1159, %v1158
        %v1164 = vsel %vm1160, 1, 0
        %v1165 = vsel %vm1161, 1, 0
        %v1166 = vsel %vm1162, 1, 0
        %v1167 = vsel %vm1163, 1, 0
        %v1168 = vcvt.s32.f32 %v1164
        %v1169 = vcvt.s32.f32 %v1165
        %v1170 = vcvt.s32.f32 %v1166
        %v1171 = vcvt.s32.f32 %v1167
        %v1172 = vld [vmem:[#allocation10] sm:$0xff]
        %v1173 = vld [vmem:[#allocation10 + $0x8] sm:$0xff]
        %v1174 = vld [vmem:[#allocation10 + $0x10] sm:$0xff]
        %v1175 = vld [vmem:[#allocation10 + $0x18] sm:$0xff]
        %v1176 = vld [vmem:[#allocation10 + $0x20] sm:$0xff]
        %v1177 = vld [vmem:[#allocation10 + $0x28] sm:$0xff]
        %v1178 = vld [vmem:[#allocation10 + $0x30] sm:$0xff]
        %v1179 = vld [vmem:[#allocation10 + $0x38] sm:$0xff]
        %v1180 = vld [vmem:[#allocation10 + $0x40] sm:$0xff]
        %v1181 = vld [vmem:[#allocation10 + $0x48] sm:$0xff]
        %v1182 = vld [vmem:[#allocation10 + $0x50] sm:$0xff]
        %v1183 = vld [vmem:[#allocation10 + $0x58] sm:$0xff]
        %v1184 = vld [vmem:[#allocation10 + $0x60] sm:$0xff]
        %v1185 = vld [vmem:[#allocation10 + $0x68] sm:$0xff]
        %v1186 = vld [vmem:[#allocation10 + $0x70] sm:$0xff]
        %v1187 = vld [vmem:[#allocation10 + $0x78] sm:$0xff]
        %v1188 = vld [vmem:[#allocation10 + $0x80] sm:$0xff]
        %v1189 = vld [vmem:[#allocation10 + $0x88] sm:$0xff]
        %v1190 = vld [vmem:[#allocation10 + $0x90] sm:$0xff]
        %v1191 = vld [vmem:[#allocation10 + $0x98] sm:$0xff]
        %v1192 = vld [vmem:[#allocation10 + $0xa0] sm:$0xff]
        %v1193 = vld [vmem:[#allocation10 + $0xa8] sm:$0xff]
        %v1194 = vld [vmem:[#allocation10 + $0xb0] sm:$0xff]
        %v1195 = vld [vmem:[#allocation10 + $0xb8] sm:$0xff]
        %v1196 = vld [vmem:[#allocation10 + $0xc0] sm:$0xff]
        %v1197 = vld [vmem:[#allocation10 + $0xc8] sm:$0xff]
        %v1198 = vld [vmem:[#allocation10 + $0xd0] sm:$0xff]
        %v1199 = vld [vmem:[#allocation10 + $0xd8] sm:$0xff]
        %v1200 = vld [vmem:[#allocation10 + $0xe0] sm:$0xff]
        %v1201 = vld [vmem:[#allocation10 + $0xe8] sm:$0xff]
        %v1202 = vld [vmem:[#allocation10 + $0xf0] sm:$0xff]
        %v1203 = vld [vmem:[#allocation10 + $0xf8] sm:$0xff]
        %1204 = vmatprep.subr.mxu0 0.0
        %1205 = vmatpush1.msra.mxu0 %v1172
        %1206 = vmatprep.subr.mxu0 0.0
        %1207 = vmatpush1.msra.mxu0 %v1173
        %1208 = vmatprep.subr.mxu0 0.0
        %1209 = vmatpush1.msra.mxu0 %v1174
        %1210 = vmatprep.subr.mxu0 0.0
        %1211 = vmatpush1.msra.mxu0 %v1175
        %1212 = vmatprep.subr.mxu0 0.0
        %1213 = vmatpush1.msra.mxu0 %v1176
        %1214 = vmatprep.subr.mxu0 0.0
        %1215 = vmatpush1.msra.mxu0 %v1177
        %1216 = vmatprep.subr.mxu0 0.0
        %1217 = vmatpush1.msra.mxu0 %v1178
        %1218 = vmatprep.subr.mxu0 0.0
        %1219 = vmatpush1.msra.mxu0 %v1179
        %1220 = vmatprep.subr.mxu0 0.0
        %1221 = vmatpush1.msra.mxu0 %v1180
        %1222 = vmatprep.subr.mxu0 0.0
        %1223 = vmatpush1.msra.mxu0 %v1181
        %1224 = vmatprep.subr.mxu0 0.0
        %1225 = vmatpush1.msra.mxu0 %v1182
        %1226 = vmatprep.subr.mxu0 0.0
        %1227 = vmatpush1.msra.mxu0 %v1183
        %1228 = vmatprep.subr.mxu0 0.0
        %1229 = vmatpush1.msra.mxu0 %v1184
        %1230 = vmatprep.subr.mxu0 0.0
        %1231 = vmatpush1.msra.mxu0 %v1185
        %1232 = vmatprep.subr.mxu0 0.0
        %1233 = vmatpush1.msra.mxu0 %v1186
        %1234 = vmatprep.subr.mxu0 0.0
        %1235 = vmatpush1.msra.mxu0 %v1187
        %1236 = vmatprep.subr.mxu0 0.0
        %1237 = vmatpush1.msra.mxu0 %v1188
        %1238 = vmatprep.subr.mxu0 0.0
        %1239 = vmatpush1.msra.mxu0 %v1189
        %1240 = vmatprep.subr.mxu0 0.0
        %1241 = vmatpush1.msra.mxu0 %v1190
        %1242 = vmatprep.subr.mxu0 0.0
        %1243 = vmatpush1.msra.mxu0 %v1191
        %1244 = vmatprep.subr.mxu0 0.0
        %1245 = vmatpush1.msra.mxu0 %v1192
        %1246 = vmatprep.subr.mxu0 0.0
        %1247 = vmatpush1.msra.mxu0 %v1193
        %1248 = vmatprep.subr.mxu0 0.0
        %1249 = vmatpush1.msra.mxu0 %v1194
        %1250 = vmatprep.subr.mxu0 0.0
        %1251 = vmatpush1.msra.mxu0 %v1195
        %1252 = vmatprep.subr.mxu0 0.0
        %1253 = vmatpush1.msra.mxu0 %v1196
        %1254 = vmatprep.subr.mxu0 0.0
        %1255 = vmatpush1.msra.mxu0 %v1197
        %1256 = vmatprep.subr.mxu0 0.0
        %1257 = vmatpush1.msra.mxu0 %v1198
        %1258 = vmatprep.subr.mxu0 0.0
        %1259 = vmatpush1.msra.mxu0 %v1199
        %1260 = vmatprep.subr.mxu0 0.0
        %1261 = vmatpush1.msra.mxu0 %v1200
        %1262 = vmatprep.subr.mxu0 0.0
        %1263 = vmatpush1.msra.mxu0 %v1201
        %1264 = vmatprep.subr.mxu0 0.0
        %1265 = vmatpush1.msra.mxu0 %v1202
        %1266 = vmatprep.subr.mxu0 0.0
        %1267 = vmatpush1.msra.mxu0 %v1203
        %1268 = vmatprep.mubr.f32.mxu0 %v1169
        %1269 = vmatmul.mubr.f32.gmra.mrb[0].mxu0 %v1168
        %v1270 = vpop.f32.mrb[0].mxu0
        %v1271 = vadd.f32 0.0, %v1270
        %v1272 = vpop.f32.mrb[0].mxu0
        %1273 = vmatprep.mubr.f32.mxu0 %v1171
        %1274 = vmatmul.mubr.f32.gmra.mrb[0].mxu0 %v1170
        %v1275 = vpop.f32.mrb[0].mxu0
        %v1276 = vadd.f32 0.0, %v1275
        %v1277 = vpop.f32.mrb[0].mxu0
        %1278 = vdwg.mxu0
        %vm1279 = vcmask 31744
        %v1281 = vsel %vm1279, %v1101, 0
        %v1284 = vsel %vm1279, %v1102, 0
        %vm1286 = vcmask 1043456
        %v1288 = vsel %vm1286, %v1087, 0
        %1290 = vmatprep.subr.mxu0 0.0
        %1291 = vmatpush1.msra.mxu0 %v1288
        %1292 = vmatprep.subr.mxu0 0.0
        %1293 = vmatpush1.msra.mxu0 0.0
        %1294 = vmatprep.subr.mxu0 0.0
        %1295 = vmatpush1.msra.mxu0 0.0
        %1296 = vmatprep.subr.mxu0 0.0
        %1297 = vmatpush1.msra.mxu0 0.0
        %1298 = vmatprep.subr.mxu0 0.0
        %1299 = vmatpush1.msra.mxu0 0.0
        %1300 = vmatprep.subr.mxu0 0.0
        %1301 = vmatpush1.msra.mxu0 0.0
        %1302 = vmatprep.subr.mxu0 0.0
        %1303 = vmatpush1.msra.mxu0 0.0
        %1304 = vmatprep.subr.mxu0 0.0
        %1305 = vmatpush1.msra.mxu0 0.0
        %1306 = vmatprep.subr.mxu0 0.0
        %1307 = vmatpush1.msra.mxu0 0.0
        %1308 = vmatprep.subr.mxu0 0.0
        %1309 = vmatpush1.msra.mxu0 0.0
        %1310 = vmatprep.subr.mxu0 0.0
        %1311 = vmatpush1.msra.mxu0 0.0
        %1312 = vmatprep.subr.mxu0 0.0
        %1313 = vmatpush1.msra.mxu0 0.0
        %1314 = vmatprep.subr.mxu0 0.0
        %1315 = vmatpush1.msra.mxu0 0.0
        %1316 = vmatprep.subr.mxu0 0.0
        %1317 = vmatpush1.msra.mxu0 0.0
        %1318 = vmatprep.subr.mxu0 0.0
        %1319 = vmatpush1.msra.mxu0 0.0
        %1320 = vmatprep.subr.mxu0 0.0
        %1321 = vmatpush1.msra.mxu0 0.0
        %1322 = vmatprep.subr.mxu0 0.0
        %1323 = vmatpush1.msra.mxu0 0.0
        %1324 = vmatprep.subr.mxu0 0.0
        %1325 = vmatpush1.msra.mxu0 0.0
        %1326 = vmatprep.subr.mxu0 0.0
        %1327 = vmatpush1.msra.mxu0 0.0
        %1328 = vmatprep.subr.mxu0 0.0
        %1329 = vmatpush1.msra.mxu0 0.0
        %1330 = vmatprep.subr.mxu0 0.0
        %1331 = vmatpush1.msra.mxu0 0.0
        %1332 = vmatprep.subr.mxu0 0.0
        %1333 = vmatpush1.msra.mxu0 0.0
        %1334 = vmatprep.subr.mxu0 0.0
        %1335 = vmatpush1.msra.mxu0 0.0
        %1336 = vmatprep.subr.mxu0 0.0
        %1337 = vmatpush1.msra.mxu0 0.0
        %1338 = vmatprep.subr.mxu0 0.0
        %1339 = vmatpush1.msra.mxu0 0.0
        %1340 = vmatprep.subr.mxu0 0.0
        %1341 = vmatpush1.msra.mxu0 0.0
        %1342 = vmatprep.subr.mxu0 0.0
        %1343 = vmatpush1.msra.mxu0 0.0
        %1344 = vmatprep.subr.mxu0 0.0
        %1345 = vmatpush1.msra.mxu0 0.0
        %1346 = vmatprep.subr.mxu0 0.0
        %1347 = vmatpush1.msra.mxu0 0.0
        %1348 = vmatprep.subr.mxu0 0.0
        %1349 = vmatpush1.msra.mxu0 0.0
        %1350 = vmatprep.subr.mxu0 0.0
        %1351 = vmatpush1.msra.mxu0 0.0
        %1352 = vmatprep.subr.mxu0 0.0
        %1353 = vmatpush1.msra.mxu0 0.0
        %1354 = vmatprep.mubr.f32.mxu0 0.0
        %1355 = vmatmul.mubr.f32.gmra.mrb[0].mxu0 %v1281
        %v1356 = vpop.f32.mrb[0].mxu0
        %v1357 = vadd.f32 %v1271, %v1356
        %v1358 = vpop.f32.mrb[0].mxu0
        %1359 = vmatprep.mubr.f32.mxu0 0.0
        %1360 = vmatmul.mubr.f32.gmra.mrb[0].mxu0 %v1284
        %v1361 = vpop.f32.mrb[0].mxu0
        %v1362 = vadd.f32 %v1276, %v1361
        %v1363 = vpop.f32.mrb[0].mxu0
        %1364 = vdwg.mxu0
        %vm1365 = vcmp.le.s32.totalorder %v1096, %v1093
        %vm1366 = vcmp.le.s32.totalorder %v1096, %v1094
        %v1367 = vsel %vm1365, 0.0, -1e+30
        %v1368 = vsel %vm1366, 0.0, -1e+30
        %s1369 = sld [smem:[#allocation4 + %s1105]]
        %p1370 = scmp.gt.s32.totalorder %s1369, 0
        %s1371 = scalar_select %p1370, 0.0, -1e+30
        %vm1372 = vcmp.eq.s32.totalorder %v1096, 4
        %v1373 = vstv %s1371
        %v1374 = vsel %vm1372, %v1373, 0.0
        %v1375 = vadd.f32 %v1367, %v1374
        %v1376 = vadd.f32 %v1368, %v1374
        %s1377 = sld [smem:[#allocation4 + %s1112]]
        %p1378 = scmp.gt.s32.totalorder %s1377, 0
        %s1379 = scalar_select %p1378, 0.0, -1e+30
        %vm1380 = vcmp.eq.s32.totalorder %v1096, 5
        %v1381 = vstv %s1379
        %v1382 = vsel %vm1380, %v1381, 0.0
        %v1383 = vadd.f32 %v1375, %v1382
        %v1384 = vadd.f32 %v1376, %v1382
        %s1385 = sld [smem:[#allocation4 + %s1119]]
        %p1386 = scmp.gt.s32.totalorder %s1385, 0
        %s1387 = scalar_select %p1386, 0.0, -1e+30
        %vm1388 = vcmp.eq.s32.totalorder %v1096, 6
        %v1389 = vstv %s1387
        %v1390 = vsel %vm1388, %v1389, 0.0
        %v1391 = vadd.f32 %v1383, %v1390
        %v1392 = vadd.f32 %v1384, %v1390
        %s1393 = sld [smem:[#allocation4 + %s1126]]
        %p1394 = scmp.gt.s32.totalorder %s1393, 0
        %s1395 = scalar_select %p1394, 0.0, -1e+30
        %vm1396 = vcmp.eq.s32.totalorder %v1096, 7
        %v1397 = vstv %s1395
        %v1398 = vsel %vm1396, %v1397, 0.0
        %v1399 = vadd.f32 %v1391, %v1398
        %v1400 = vadd.f32 %v1392, %v1398
        %s1401 = sld [smem:[#allocation4 + %s1133]]
        %p1402 = scmp.gt.s32.totalorder %s1401, 0
        %s1403 = scalar_select %p1402, 0.0, -1e+30
        %vm1404 = vcmp.eq.s32.totalorder %v1096, 8
        %v1405 = vstv %s1403
        %v1406 = vsel %vm1404, %v1405, 0.0
        %v1407 = vadd.f32 %v1399, %v1406
        %v1408 = vadd.f32 %v1400, %v1406
        %s1409 = sld [smem:[#allocation4 + %s1140]]
        %p1410 = scmp.gt.s32.totalorder %s1409, 0
        %s1411 = scalar_select %p1410, 0.0, -1e+30
        %vm1412 = vcmp.eq.s32.totalorder %v1096, 9
        %v1413 = vstv %s1411
        %v1414 = vsel %vm1412, %v1413, 0.0
        %v1415 = vadd.f32 %v1407, %v1414
        %v1416 = vadd.f32 %v1408, %v1414
        %s1417 = sld [smem:[#allocation4 + %s1147]]
        %p1418 = scmp.gt.s32.totalorder %s1417, 0
        %s1419 = scalar_select %p1418, 0.0, -1e+30
        %vm1420 = vcmp.eq.s32.totalorder %v1096, 10
        %v1421 = vstv %s1419
        %v1422 = vsel %vm1420, %v1421, 0.0
        %v1423 = vadd.f32 %v1415, %v1422
        %v1424 = vadd.f32 %v1416, %v1422
        %s1425 = sld [smem:[#allocation4 + %s1154]]
        %p1426 = scmp.gt.s32.totalorder %s1425, 0
        %s1427 = scalar_select %p1426, 0.0, -1e+30
        %vm1428 = vcmp.eq.s32.totalorder %v1096, 11
        %v1429 = vstv %s1427
        %v1430 = vsel %vm1428, %v1429, 0.0
        %v1431 = vadd.f32 %v1423, %v1430
        %v1432 = vadd.f32 %v1424, %v1430
        %v1433 = vld [vmem:[%s10] sm:$0x1]
        %v1434 = vmul.f32 %v1357, %v1357
        %v1435 = vmul.f32 %v1362, %v1362
        %1436 = vadd.xlane.f32.xlu0 %v1434
        %v1437 = vpop.xlane.xlu0 %1436
        %v1438 = vsel %vm1286, %v1435, 0.0
        %1439 = vadd.xlane.f32.xlu0 %v1438
        %v1440 = vpop.xlane.xlu0 %1439
        %v1441 = vrcp.pop 128.0
        %v1442 = vmul.f32 %v1437, %v1441
        %v1443 = vmul.f32 %v1440, %v1441
        %v1444 = vadd.f32 %v1442, 1e-06
        %v1445 = vadd.f32 %v1443, 1e-06
        %v1446 = vrsqrt.pop %v1444
        %v1447 = vrsqrt.pop %v1445
        %v1448 = vmul.f32 %v1357, %v1446
        %v1449 = vmul.f32 %v1362, %v1447
        %v1451 = vlaneseq
        %v1452 = vshrl.u32 %v1451, 7
        %v1453 = vsub.s32 0, %v1452
        %v1454 = vrot.slane %v1433, %v1453
        %v1456 = vmul.f32 %v1448, %v1454
        %v1457 = vmul.f32 %v1449, %v1454
        %v1458 = vpack.c.bf16 %v1457, %v1456
        %v1459 = vld [vmem:[%s11] sm:$0xff]
        %v1460 = vld [vmem:[%s11 + $0x8] sm:$0xff]
        %v1461 = vld [vmem:[%s11 + $0x10] sm:$0xff]
        %v1462 = vld [vmem:[%s11 + $0x18] sm:$0xff]
        %v1463 = vld [vmem:[%s11 + $0x20] sm:$0xff]
        %v1464 = vld [vmem:[%s11 + $0x28] sm:$0xff]
        %v1465 = vld [vmem:[%s11 + $0x30] sm:$0xff]
        %v1466 = vld [vmem:[%s11 + $0x38] sm:$0xff]
        %v1467 = vld [vmem:[%s11 + $0x40] sm:$0xff]
        %v1468 = vld [vmem:[%s11 + $0x48] sm:$0xff]
        %v1469 = vld [vmem:[%s11 + $0x50] sm:$0xff]
        %v1470 = vld [vmem:[%s11 + $0x58] sm:$0xff]
        %v1471 = vld [vmem:[%s11 + $0x60] sm:$0xff]
        %v1472 = vld [vmem:[%s11 + $0x68] sm:$0xff]
        %v1473 = vld [vmem:[%s11 + $0x70] sm:$0xff]
        %v1474 = vld [vmem:[%s11 + $0x78] sm:$0xff]
        %v1475 = vld [vmem:[%s11 + $0x80] sm:$0xff]
        %v1476 = vld [vmem:[%s11 + $0x88] sm:$0xff]
        %v1477 = vld [vmem:[%s11 + $0x90] sm:$0xff]
        %v1478 = vld [vmem:[%s11 + $0x98] sm:$0xff]
        %v1479 = vld [vmem:[%s11 + $0xa0] sm:$0xff]
        %v1480 = vld [vmem:[%s11 + $0xa8] sm:$0xff]
        %v1481 = vld [vmem:[%s11 + $0xb0] sm:$0xff]
        %v1482 = vld [vmem:[%s11 + $0xb8] sm:$0xff]
        %v1483 = vld [vmem:[%s11 + $0xc0] sm:$0xff]
        %v1484 = vld [vmem:[%s11 + $0xc8] sm:$0xff]
        %v1485 = vld [vmem:[%s11 + $0xd0] sm:$0xff]
        %v1486 = vld [vmem:[%s11 + $0xd8] sm:$0xff]
        %v1487 = vld [vmem:[%s11 + $0xe0] sm:$0xff]
        %v1488 = vld [vmem:[%s11 + $0xe8] sm:$0xff]
        %v1489 = vld [vmem:[%s11 + $0xf0] sm:$0xff]
        %v1490 = vld [vmem:[%s11 + $0xf8] sm:$0xff]
        %v1491 = vld [vmem:[%s11 + $0x100] sm:$0xff]
        %v1492 = vld [vmem:[%s11 + $0x108] sm:$0xff]
        %v1493 = vld [vmem:[%s11 + $0x110] sm:$0xff]
        %v1494 = vld [vmem:[%s11 + $0x118] sm:$0xff]
        %v1495 = vld [vmem:[%s11 + $0x120] sm:$0xff]
        %v1496 = vld [vmem:[%s11 + $0x128] sm:$0xff]
        %v1497 = vld [vmem:[%s11 + $0x130] sm:$0xff]
        %v1498 = vld [vmem:[%s11 + $0x138] sm:$0xff]
        %v1499 = vld [vmem:[%s11 + $0x140] sm:$0xff]
        %v1500 = vld [vmem:[%s11 + $0x148] sm:$0xff]
        %v1501 = vld [vmem:[%s11 + $0x150] sm:$0xff]
        %v1502 = vld [vmem:[%s11 + $0x158] sm:$0xff]
        %v1503 = vld [vmem:[%s11 + $0x160] sm:$0xff]
        %v1504 = vld [vmem:[%s11 + $0x168] sm:$0xff]
        %v1505 = vld [vmem:[%s11 + $0x170] sm:$0xff]
        %v1506 = vld [vmem:[%s11 + $0x178] sm:$0xff]
        %v1507 = vpack.c.bf16 %v1462, %v1459
        %v1508 = vpack.c.bf16 %v1463, %v1460
        %v1509 = vpack.c.bf16 %v1464, %v1461
        %v1510 = vpack.c.bf16 %v1468, %v1465
        %v1511 = vpack.c.bf16 %v1469, %v1466
        %v1512 = vpack.c.bf16 %v1470, %v1467
        %v1513 = vpack.c.bf16 %v1474, %v1471
        %v1514 = vpack.c.bf16 %v1475, %v1472
        %v1515 = vpack.c.bf16 %v1476, %v1473
        %v1516 = vpack.c.bf16 %v1480, %v1477
        %v1517 = vpack.c.bf16 %v1481, %v1478
        %v1518 = vpack.c.bf16 %v1482, %v1479
        %v1519 = vpack.c.bf16 %v1486, %v1483
        %v1520 = vpack.c.bf16 %v1487, %v1484
        %v1521 = vpack.c.bf16 %v1488, %v1485
        %v1522 = vpack.c.bf16 %v1492, %v1489
        %v1523 = vpack.c.bf16 %v1493, %v1490
        %v1524 = vpack.c.bf16 %v1494, %v1491
        %v1525 = vpack.c.bf16 %v1498, %v1495
        %v1526 = vpack.c.bf16 %v1499, %v1496
        %v1527 = vpack.c.bf16 %v1500, %v1497
        %v1528 = vpack.c.bf16 %v1504, %v1501
        %v1529 = vpack.c.bf16 %v1505, %v1502
        %v1530 = vpack.c.bf16 %v1506, %v1503
        %1531 = vmatprep.subr.bf16.mxu0 %v1508
        %1532 = vmatpush1.bf16.msra.mxu0 %v1507
        %1533 = vmatprep.subr.bf16.mxu0 %v1511
        %1534 = vmatpush1.bf16.msra.mxu0 %v1510
        %1535 = vmatprep.subr.bf16.mxu0 %v1514
        %1536 = vmatpush1.bf16.msra.mxu0 %v1513
        %1537 = vmatprep.subr.bf16.mxu0 %v1517
        %1538 = vmatpush1.bf16.msra.mxu0 %v1516
        %1539 = vmatprep.subr.bf16.mxu0 %v1520
        %1540 = vmatpush1.bf16.msra.mxu0 %v1519
        %1541 = vmatprep.subr.bf16.mxu0 %v1523
        %1542 = vmatpush1.bf16.msra.mxu0 %v1522
        %1543 = vmatprep.subr.bf16.mxu0 %v1526
        %1544 = vmatpush1.bf16.msra.mxu0 %v1525
        %1545 = vmatprep.subr.bf16.mxu0 %v1529
        %1546 = vmatpush1.bf16.msra.mxu0 %v1528
        %1547 = vmatprep.subr.bf16.mxu0 0
        %1548 = vmatpush1.bf16.msra.mxu0 0
        %1549 = vmatprep.subr.bf16.mxu0 0
        %1550 = vmatpush1.bf16.msra.mxu0 0
        %1551 = vmatprep.subr.bf16.mxu0 0
        %1552 = vmatpush1.bf16.msra.mxu0 0
        %1553 = vmatprep.subr.bf16.mxu0 0
        %1554 = vmatpush1.bf16.msra.mxu0 0
        %1555 = vmatprep.subr.bf16.mxu0 0
        %1556 = vmatpush1.bf16.msra.mxu0 0
        %1557 = vmatprep.subr.bf16.mxu0 0
        %1558 = vmatpush1.bf16.msra.mxu0 0
        %1559 = vmatprep.subr.bf16.mxu0 0
        %1560 = vmatpush1.bf16.msra.mxu0 0
        %1561 = vmatprep.subr.bf16.mxu0 0
        %1562 = vmatpush1.bf16.msra.mxu0 0
        %1563 = vmatprep.mubr.bf16.mxu0 0
        %1564 = vmatmul.mubr.bf16.gmra.mrb[0].mxu0 %v1458
        %v1565 = vpop.f32.mrb[0].mxu0
        %v1566 = vadd.f32 0.0, %v1565
        %v1567 = vpop.f32.mrb[0].mxu0
        %v1568 = vadd.f32 0.0, %v1567
        %v1569 = vpop.f32.mrb[0].mxu0
        %v1570 = vadd.f32 0.0, %v1569
        %v1571 = vpop.f32.mrb[0].mxu0
        %v1572 = vadd.f32 0.0, %v1571
        %1573 = vdwg.mxu0
        %1574 = vmatprep.subr.bf16.mxu0 0
        %1575 = vmatpush1.bf16.msra.mxu0 %v1509
        %1576 = vmatprep.subr.bf16.mxu0 0
        %1577 = vmatpush1.bf16.msra.mxu0 %v1512
        %1578 = vmatprep.subr.bf16.mxu0 0
        %1579 = vmatpush1.bf16.msra.mxu0 %v1515
        %1580 = vmatprep.subr.bf16.mxu0 0
        %1581 = vmatpush1.bf16.msra.mxu0 %v1518
        %1582 = vmatprep.subr.bf16.mxu0 0
        %1583 = vmatpush1.bf16.msra.mxu0 %v1521
        %1584 = vmatprep.subr.bf16.mxu0 0
        %1585 = vmatpush1.bf16.msra.mxu0 %v1524
        %1586 = vmatprep.subr.bf16.mxu0 0
        %1587 = vmatpush1.bf16.msra.mxu0 %v1527
        %1588 = vmatprep.subr.bf16.mxu0 0
        %1589 = vmatpush1.bf16.msra.mxu0 %v1530
        %1590 = vmatprep.subr.bf16.mxu0 0
        %1591 = vmatpush1.bf16.msra.mxu0 0
        %1592 = vmatprep.subr.bf16.mxu0 0
        %1593 = vmatpush1.bf16.msra.mxu0 0
        %1594 = vmatprep.subr.bf16.mxu0 0
        %1595 = vmatpush1.bf16.msra.mxu0 0
        %1596 = vmatprep.subr.bf16.mxu0 0
        %1597 = vmatpush1.bf16.msra.mxu0 0
        %1598 = vmatprep.subr.bf16.mxu0 0
        %1599 = vmatpush1.bf16.msra.mxu0 0
        %1600 = vmatprep.subr.bf16.mxu0 0
        %1601 = vmatpush1.bf16.msra.mxu0 0
        %1602 = vmatprep.subr.bf16.mxu0 0
        %1603 = vmatpush1.bf16.msra.mxu0 0
        %1604 = vmatprep.subr.bf16.mxu0 0
        %1605 = vmatpush1.bf16.msra.mxu0 0
        %1606 = vmatprep.mubr.bf16.mxu0 0
        %1607 = vmatmul.mubr.bf16.gmra.mrb[0].mxu0 %v1458
        %v1608 = vpop.f32.mrb[0].mxu0
        %v1609 = vadd.f32 0.0, %v1608
        %v1610 = vpop.f32.mrb[0].mxu0
        %v1611 = vpop.f32.mrb[0].mxu0
        %v1612 = vadd.f32 0.0, %v1611
        %v1613 = vpop.f32.mrb[0].mxu0
        %1614 = vdwg.mxu0
        %v1615 = vpack.c.bf16 %v1572, %v1568
        %vm1616 = vcmp.ge.s32.totalorder %v1096, 0
        %vm1617 = vcmp.lt.s32.totalorder %v1096, 32
        %vm1618 = vmand %vm1616, %vm1617
        %v1619 = vsel %vm1618, 1, 0
        %v1620 = vcvt.s32.f32 %v1619
        %v1621 = vmul.f32 %v1566, %v1620
        %v1622 = vmul.f32 %v1570, %v1620
        %v1623 = vpack.c.bf16 %v1622, %v1621
        %1624 = vmatprep.subr.bf16.mxu0 0
        %1625 = vmatpush1.bf16.xpose.msra.mxu0 %v1615
        %1626 = vmatprep.subr.bf16.mxu0 0
        %1627 = vmatpush1.bf16.xpose.msra.mxu0 0
        %1628 = vmatprep.subr.bf16.mxu0 0
        %1629 = vmatpush1.bf16.xpose.msra.mxu0 0
        %1630 = vmatprep.subr.bf16.mxu0 0
        %1631 = vmatpush1.bf16.xpose.msra.mxu0 0
        %1632 = vmatprep.subr.bf16.mxu0 0
        %1633 = vmatpush1.bf16.xpose.msra.mxu0 0
        %1634 = vmatprep.subr.bf16.mxu0 0
        %1635 = vmatpush1.bf16.xpose.msra.mxu0 0
        %1636 = vmatprep.subr.bf16.mxu0 0
        %1637 = vmatpush1.bf16.xpose.msra.mxu0 0
        %1638 = vmatprep.subr.bf16.mxu0 0
        %1639 = vmatpush1.bf16.xpose.msra.mxu0 0
        %1640 = vmatprep.subr.bf16.mxu0 0
        %1641 = vmatpush1.bf16.xpose.msra.mxu0 0
        %1642 = vmatprep.subr.bf16.mxu0 0
        %1643 = vmatpush1.bf16.xpose.msra.mxu0 0
        %1644 = vmatprep.subr.bf16.mxu0 0
        %1645 = vmatpush1.bf16.xpose.msra.mxu0 0
        %1646 = vmatprep.subr.bf16.mxu0 0
        %1647 = vmatpush1.bf16.xpose.msra.mxu0 0
        %1648 = vmatprep.subr.bf16.mxu0 0
        %1649 = vmatpush1.bf16.xpose.msra.mxu0 0
        %1650 = vmatprep.subr.bf16.mxu0 0
        %1651 = vmatpush1.bf16.xpose.msra.mxu0 0
        %1652 = vmatprep.subr.bf16.mxu0 0
        %1653 = vmatpush1.bf16.xpose.msra.mxu0 0
        %1654 = vmatprep.subr.bf16.mxu0 0
        %1655 = vmatpush1.bf16.xpose.msra.mxu0 0
        %1656 = vmatprep.mubr.bf16.mxu0 0
        %1657 = vmatmul.mubr.bf16.gmra.mrb[0].mxu0 %v1623
        %v1658 = vpop.f32.mrb[0].mxu0
        %v1659 = vadd.f32 0.0, %v1658
        %v1660 = vpop.f32.mrb[0].mxu0
        %v1661 = vpop.f32.mrb[0].mxu0
        %v1662 = vadd.f32 0.0, %v1661
        %v1663 = vpop.f32.mrb[0].mxu0
        %1664 = vdwg.mxu0
        %v1665 = vmul.f32 %v1659, 0.17677669
        %v1666 = vmul.f32 %v1662, 0.17677669
        %v1667 = vadd.f32 %v1665, %v1431
        %v1668 = vadd.f32 %v1666, %v1432
        %vm1669 = vcmask 97280
        %v1670 = vsel %vm1669, %v1667, -inf
        %1671 = vmax.xlane.f32.xlu0 %v1670
        %v1672 = vpop.xlane.xlu0 %1671
        %vm1673 = vcmask 93184
        %v1674 = vsel %vm1673, %v1668, -inf
        %1675 = vmax.xlane.f32.xlu0 %v1674
        %v1676 = vpop.xlane.xlu0 %1675
        %v1677 = vsub.f32 %v1667, %v1672
        %v1678 = vsub.f32 %v1668, %v1676
        %v1679 = vmul.f32 %v1677, 1.442695
        %v1680 = vpow.pop %v1679
        %v1681 = vmul.f32 %v1678, 1.442695
        %v1682 = vpow.pop %v1681
        %v1683 = vsel %vm1669, %v1680, 0.0
        %1684 = vadd.xlane.f32.xlu0 %v1683
        %v1685 = vpop.xlane.xlu0 %1684
        %v1686 = vsel %vm1673, %v1682, 0.0
        %1687 = vadd.xlane.f32.xlu0 %v1686
        %v1688 = vpop.xlane.xlu0 %1687
        %v1689 = vrcp.pop %v1685
        %v1690 = vmul.f32 %v1680, %v1689
        %v1691 = vrcp.pop %v1688
        %v1692 = vmul.f32 %v1682, %v1691
        %v1693 = vmul.f32 %v1609, %v1620
        %v1694 = vmul.f32 %v1612, %v1620
        %v1695 = vpack.c.bf16 %v1694, %v1693
        %v1696 = vpack.c.bf16 %v1692, %v1690
        %vm1697 = vcmp.ge.s32.totalorder %v1096, 32
        %vm1698 = vcmp.lt.s32.totalorder %v1096, 64
        %vm1699 = vmand %vm1697, %vm1698
        %v1700 = vsel %vm1699, 1, 0
        %v1701 = vcvt.s32.f32 %v1700
        %v1702 = vmul.f32 %v1566, %v1701
        %v1703 = vmul.f32 %v1570, %v1701
        %v1704 = vpack.c.bf16 %v1703, %v1702
        %1705 = vmatprep.subr.bf16.mxu0 0
        %1706 = vmatpush1.bf16.xpose.msra.mxu0 %v1615
        %1707 = vmatprep.subr.bf16.mxu0 0
        %1708 = vmatpush1.bf16.xpose.msra.mxu0 0
        %1709 = vmatprep.subr.bf16.mxu0 0
        %1710 = vmatpush1.bf16.xpose.msra.mxu0 0
        %1711 = vmatprep.subr.bf16.mxu0 0
        %1712 = vmatpush1.bf16.xpose.msra.mxu0 0
        %1713 = vmatprep.subr.bf16.mxu0 0
        %1714 = vmatpush1.bf16.xpose.msra.mxu0 0
        %1715 = vmatprep.subr.bf16.mxu0 0
        %1716 = vmatpush1.bf16.xpose.msra.mxu0 0
        %1717 = vmatprep.subr.bf16.mxu0 0
        %1718 = vmatpush1.bf16.xpose.msra.mxu0 0
        %1719 = vmatprep.subr.bf16.mxu0 0
        %1720 = vmatpush1.bf16.xpose.msra.mxu0 0
        %1721 = vmatprep.subr.bf16.mxu0 0
        %1722 = vmatpush1.bf16.xpose.msra.mxu0 0
        %1723 = vmatprep.subr.bf16.mxu0 0
        %1724 = vmatpush1.bf16.xpose.msra.mxu0 0
        %1725 = vmatprep.subr.bf16.mxu0 0
        %1726 = vmatpush1.bf16.xpose.msra.mxu0 0
        %1727 = vmatprep.subr.bf16.mxu0 0
        %1728 = vmatpush1.bf16.xpose.msra.mxu0 0
        %1729 = vmatprep.subr.bf16.mxu0 0
        %1730 = vmatpush1.bf16.xpose.msra.mxu0 0
        %1731 = vmatprep.subr.bf16.mxu0 0
        %1732 = vmatpush1.bf16.xpose.msra.mxu0 0
        %1733 = vmatprep.subr.bf16.mxu0 0
        %1734 = vmatpush1.bf16.xpose.msra.mxu0 0
        %1735 = vmatprep.subr.bf16.mxu0 0
        %1736 = vmatpush1.bf16.xpose.msra.mxu0 0
        %1737 = vmatprep.mubr.bf16.mxu0 0
        %1738 = vmatmul.mubr.bf16.gmra.mrb[0].mxu0 %v1704
        %v1739 = vpop.f32.mrb[0].mxu0
        %v1740 = vadd.f32 0.0, %v1739
        %v1741 = vpop.f32.mrb[0].mxu0
        %v1742 = vpop.f32.mrb[0].mxu0
        %v1743 = vadd.f32 0.0, %v1742
        %v1744 = vpop.f32.mrb[0].mxu0
        %1745 = vdwg.mxu0
        %v1746 = vmul.f32 %v1740, 0.17677669
        %v1747 = vmul.f32 %v1743, 0.17677669
        %v1748 = vadd.f32 %v1746, %v1431
        %v1749 = vadd.f32 %v1747, %v1432
        %v1750 = vsel %vm1669, %v1748, -inf
        %1751 = vmax.xlane.f32.xlu0 %v1750
        %v1752 = vpop.xlane.xlu0 %1751
        %v1753 = vsel %vm1673, %v1749, -inf
        %1754 = vmax.xlane.f32.xlu0 %v1753
        %v1755 = vpop.xlane.xlu0 %1754
        %v1756 = vsub.f32 %v1748, %v1752
        %v1757 = vsub.f32 %v1749, %v1755
        %v1758 = vmul.f32 %v1756, 1.442695
        %v1759 = vpow.pop %v1758
        %v1760 = vmul.f32 %v1757, 1.442695
        %v1761 = vpow.pop %v1760
        %v1762 = vsel %vm1669, %v1759, 0.0
        %1763 = vadd.xlane.f32.xlu0 %v1762
        %v1764 = vpop.xlane.xlu0 %1763
        %v1765 = vsel %vm1673, %v1761, 0.0
        %1766 = vadd.xlane.f32.xlu0 %v1765
        %v1767 = vpop.xlane.xlu0 %1766
        %v1768 = vrcp.pop %v1764
        %v1769 = vmul.f32 %v1759, %v1768
        %v1770 = vrcp.pop %v1767
        %v1771 = vmul.f32 %v1761, %v1770
        %v1772 = vmul.f32 %v1609, %v1701
        %v1773 = vmul.f32 %v1612, %v1701
        %v1774 = vpack.c.bf16 %v1773, %v1772
        %v1775 = vpack.c.bf16 %v1771, %v1769
        %v1777 = vsel %vm1669, %v1775, 0
        %vm1779 = vcmask 1045504
        %v1781 = vsel %vm1779, %v1774, 0
        %1783 = vmatprep.subr.bf16.mxu0 0
        %1784 = vmatpush1.bf16.msra.mxu0 %v1781
        %1785 = vmatprep.subr.bf16.mxu0 0
        %1786 = vmatpush1.bf16.msra.mxu0 0
        %1787 = vmatprep.subr.bf16.mxu0 0
        %1788 = vmatpush1.bf16.msra.mxu0 0
        %1789 = vmatprep.subr.bf16.mxu0 0
        %1790 = vmatpush1.bf16.msra.mxu0 0
        %1791 = vmatprep.subr.bf16.mxu0 0
        %1792 = vmatpush1.bf16.msra.mxu0 0
        %1793 = vmatprep.subr.bf16.mxu0 0
        %1794 = vmatpush1.bf16.msra.mxu0 0
        %1795 = vmatprep.subr.bf16.mxu0 0
        %1796 = vmatpush1.bf16.msra.mxu0 0
        %1797 = vmatprep.subr.bf16.mxu0 0
        %1798 = vmatpush1.bf16.msra.mxu0 0
        %1799 = vmatprep.subr.bf16.mxu0 0
        %1800 = vmatpush1.bf16.msra.mxu0 0
        %1801 = vmatprep.subr.bf16.mxu0 0
        %1802 = vmatpush1.bf16.msra.mxu0 0
        %1803 = vmatprep.subr.bf16.mxu0 0
        %1804 = vmatpush1.bf16.msra.mxu0 0
        %1805 = vmatprep.subr.bf16.mxu0 0
        %1806 = vmatpush1.bf16.msra.mxu0 0
        %1807 = vmatprep.subr.bf16.mxu0 0
        %1808 = vmatpush1.bf16.msra.mxu0 0
        %1809 = vmatprep.subr.bf16.mxu0 0
        %1810 = vmatpush1.bf16.msra.mxu0 0
        %1811 = vmatprep.subr.bf16.mxu0 0
        %1812 = vmatpush1.bf16.msra.mxu0 0
        %1813 = vmatprep.subr.bf16.mxu0 0
        %1814 = vmatpush1.bf16.msra.mxu0 0
        %1815 = vmatprep.mubr.bf16.mxu0 0
        %1816 = vmatmul.mubr.bf16.gmra.mrb[0].mxu0 %v1777
        %v1817 = vpop.f32.mrb[0].mxu0
        %v1818 = vadd.f32 0.0, %v1817
        %v1819 = vpop.f32.mrb[0].mxu0
        %v1820 = vpop.f32.mrb[0].mxu0
        %v1821 = vadd.f32 0.0, %v1820
        %v1822 = vpop.f32.mrb[0].mxu0
        %1823 = vdwg.mxu0
        %v1825 = vsel %vm1669, %v1696, 0
        %v1828 = vsel %vm1779, %v1695, 0
        %1830 = vmatprep.subr.bf16.mxu0 0
        %1831 = vmatpush1.bf16.msra.mxu0 %v1828
        %1832 = vmatprep.subr.bf16.mxu0 0
        %1833 = vmatpush1.bf16.msra.mxu0 0
        %1834 = vmatprep.subr.bf16.mxu0 0
        %1835 = vmatpush1.bf16.msra.mxu0 0
        %1836 = vmatprep.subr.bf16.mxu0 0
        %1837 = vmatpush1.bf16.msra.mxu0 0
        %1838 = vmatprep.subr.bf16.mxu0 0
        %1839 = vmatpush1.bf16.msra.mxu0 0
        %1840 = vmatprep.subr.bf16.mxu0 0
        %1841 = vmatpush1.bf16.msra.mxu0 0
        %1842 = vmatprep.subr.bf16.mxu0 0
        %1843 = vmatpush1.bf16.msra.mxu0 0
        %1844 = vmatprep.subr.bf16.mxu0 0
        %1845 = vmatpush1.bf16.msra.mxu0 0
        %1846 = vmatprep.subr.bf16.mxu0 0
        %1847 = vmatpush1.bf16.msra.mxu0 0
        %1848 = vmatprep.subr.bf16.mxu0 0
        %1849 = vmatpush1.bf16.msra.mxu0 0
        %1850 = vmatprep.subr.bf16.mxu0 0
        %1851 = vmatpush1.bf16.msra.mxu0 0
        %1852 = vmatprep.subr.bf16.mxu0 0
        %1853 = vmatpush1.bf16.msra.mxu0 0
        %1854 = vmatprep.subr.bf16.mxu0 0
        %1855 = vmatpush1.bf16.msra.mxu0 0
        %1856 = vmatprep.subr.bf16.mxu0 0
        %1857 = vmatpush1.bf16.msra.mxu0 0
        %1858 = vmatprep.subr.bf16.mxu0 0
        %1859 = vmatpush1.bf16.msra.mxu0 0
        %1860 = vmatprep.subr.bf16.mxu0 0
        %1861 = vmatpush1.bf16.msra.mxu0 0
        %1862 = vmatprep.mubr.bf16.mxu0 0
        %1863 = vmatmul.mubr.bf16.gmra.mrb[0].mxu0 %v1825
        %v1864 = vpop.f32.mrb[0].mxu0
        %v1865 = vadd.f32 %v1818, %v1864
        %v1866 = vpop.f32.mrb[0].mxu0
        %v1867 = vpop.f32.mrb[0].mxu0
        %v1868 = vadd.f32 %v1821, %v1867
        %v1869 = vpop.f32.mrb[0].mxu0
        %1870 = vdwg.mxu0
        %vm1871 = vcmp.ge.s32.totalorder %v1096, 64
        %vm1872 = vcmp.lt.s32.totalorder %v1096, 96
        %vm1873 = vmand %vm1871, %vm1872
        %v1874 = vsel %vm1873, 1, 0
        %v1875 = vcvt.s32.f32 %v1874
        %v1876 = vmul.f32 %v1566, %v1875
        %v1877 = vmul.f32 %v1570, %v1875
        %v1878 = vpack.c.bf16 %v1877, %v1876
        %1879 = vmatprep.subr.bf16.mxu0 0
        %1880 = vmatpush1.bf16.xpose.msra.mxu0 %v1615
        %1881 = vmatprep.subr.bf16.mxu0 0
        %1882 = vmatpush1.bf16.xpose.msra.mxu0 0
        %1883 = vmatprep.subr.bf16.mxu0 0
        %1884 = vmatpush1.bf16.xpose.msra.mxu0 0
        %1885 = vmatprep.subr.bf16.mxu0 0
        %1886 = vmatpush1.bf16.xpose.msra.mxu0 0
        %1887 = vmatprep.subr.bf16.mxu0 0
        %1888 = vmatpush1.bf16.xpose.msra.mxu0 0
        %1889 = vmatprep.subr.bf16.mxu0 0
        %1890 = vmatpush1.bf16.xpose.msra.mxu0 0
        %1891 = vmatprep.subr.bf16.mxu0 0
        %1892 = vmatpush1.bf16.xpose.msra.mxu0 0
        %1893 = vmatprep.subr.bf16.mxu0 0
        %1894 = vmatpush1.bf16.xpose.msra.mxu0 0
        %1895 = vmatprep.subr.bf16.mxu0 0
        %1896 = vmatpush1.bf16.xpose.msra.mxu0 0
        %1897 = vmatprep.subr.bf16.mxu0 0
        %1898 = vmatpush1.bf16.xpose.msra.mxu0 0
        %1899 = vmatprep.subr.bf16.mxu0 0
        %1900 = vmatpush1.bf16.xpose.msra.mxu0 0
        %1901 = vmatprep.subr.bf16.mxu0 0
        %1902 = vmatpush1.bf16.xpose.msra.mxu0 0
        %1903 = vmatprep.subr.bf16.mxu0 0
        %1904 = vmatpush1.bf16.xpose.msra.mxu0 0
        %1905 = vmatprep.subr.bf16.mxu0 0
        %1906 = vmatpush1.bf16.xpose.msra.mxu0 0
        %1907 = vmatprep.subr.bf16.mxu0 0
        %1908 = vmatpush1.bf16.xpose.msra.mxu0 0
        %1909 = vmatprep.subr.bf16.mxu0 0
        %1910 = vmatpush1.bf16.xpose.msra.mxu0 0
        %1911 = vmatprep.mubr.bf16.mxu0 0
        %1912 = vmatmul.mubr.bf16.gmra.mrb[0].mxu0 %v1878
        %v1913 = vpop.f32.mrb[0].mxu0
        %v1914 = vadd.f32 0.0, %v1913
        %v1915 = vpop.f32.mrb[0].mxu0
        %v1916 = vpop.f32.mrb[0].mxu0
        %v1917 = vadd.f32 0.0, %v1916
        %v1918 = vpop.f32.mrb[0].mxu0
        %1919 = vdwg.mxu0
        %v1920 = vmul.f32 %v1914, 0.17677669
        %v1921 = vmul.f32 %v1917, 0.17677669
        %v1922 = vadd.f32 %v1920, %v1431
        %v1923 = vadd.f32 %v1921, %v1432
        %v1924 = vsel %vm1669, %v1922, -inf
        %1925 = vmax.xlane.f32.xlu0 %v1924
        %v1926 = vpop.xlane.xlu0 %1925
        %v1927 = vsel %vm1673, %v1923, -inf
        %1928 = vmax.xlane.f32.xlu0 %v1927
        %v1929 = vpop.xlane.xlu0 %1928
        %v1930 = vsub.f32 %v1922, %v1926
        %v1931 = vsub.f32 %v1923, %v1929
        %v1932 = vmul.f32 %v1930, 1.442695
        %v1933 = vpow.pop %v1932
        %v1934 = vmul.f32 %v1931, 1.442695
        %v1935 = vpow.pop %v1934
        %v1936 = vsel %vm1669, %v1933, 0.0
        %1937 = vadd.xlane.f32.xlu0 %v1936
        %v1938 = vpop.xlane.xlu0 %1937
        %v1939 = vsel %vm1673, %v1935, 0.0
        %1940 = vadd.xlane.f32.xlu0 %v1939
        %v1941 = vpop.xlane.xlu0 %1940
        %v1942 = vrcp.pop %v1938
        %v1943 = vmul.f32 %v1933, %v1942
        %v1944 = vrcp.pop %v1941
        %v1945 = vmul.f32 %v1935, %v1944
        %v1946 = vmul.f32 %v1609, %v1875
        %v1947 = vmul.f32 %v1612, %v1875
        %v1948 = vpack.c.bf16 %v1947, %v1946
        %v1949 = vpack.c.bf16 %v1945, %v1943
        %v1951 = vsel %vm1669, %v1949, 0
        %v1954 = vsel %vm1779, %v1948, 0
        %1956 = vmatprep.subr.bf16.mxu0 0
        %1957 = vmatpush1.bf16.msra.mxu0 %v1954
        %1958 = vmatprep.subr.bf16.mxu0 0
        %1959 = vmatpush1.bf16.msra.mxu0 0
        %1960 = vmatprep.subr.bf16.mxu0 0
        %1961 = vmatpush1.bf16.msra.mxu0 0
        %1962 = vmatprep.subr.bf16.mxu0 0
        %1963 = vmatpush1.bf16.msra.mxu0 0
        %1964 = vmatprep.subr.bf16.mxu0 0
        %1965 = vmatpush1.bf16.msra.mxu0 0
        %1966 = vmatprep.subr.bf16.mxu0 0
        %1967 = vmatpush1.bf16.msra.mxu0 0
        %1968 = vmatprep.subr.bf16.mxu0 0
        %1969 = vmatpush1.bf16.msra.mxu0 0
        %1970 = vmatprep.subr.bf16.mxu0 0
        %1971 = vmatpush1.bf16.msra.mxu0 0
        %1972 = vmatprep.subr.bf16.mxu0 0
        %1973 = vmatpush1.bf16.msra.mxu0 0
        %1974 = vmatprep.subr.bf16.mxu0 0
        %1975 = vmatpush1.bf16.msra.mxu0 0
        %1976 = vmatprep.subr.bf16.mxu0 0
        %1977 = vmatpush1.bf16.msra.mxu0 0
        %1978 = vmatprep.subr.bf16.mxu0 0
        %1979 = vmatpush1.bf16.msra.mxu0 0
        %1980 = vmatprep.subr.bf16.mxu0 0
        %1981 = vmatpush1.bf16.msra.mxu0 0
        %1982 = vmatprep.subr.bf16.mxu0 0
        %1983 = vmatpush1.bf16.msra.mxu0 0
        %1984 = vmatprep.subr.bf16.mxu0 0
        %1985 = vmatpush1.bf16.msra.mxu0 0
        %1986 = vmatprep.subr.bf16.mxu0 0
        %1987 = vmatpush1.bf16.msra.mxu0 0
        %1988 = vmatprep.mubr.bf16.mxu0 0
        %1989 = vmatmul.mubr.bf16.gmra.mrb[0].mxu0 %v1951
        %v1990 = vpop.f32.mrb[0].mxu0
        %v1991 = vadd.f32 0.0, %v1990
        %v1992 = vpop.f32.mrb[0].mxu0
        %v1993 = vpop.f32.mrb[0].mxu0
        %v1994 = vadd.f32 0.0, %v1993
        %v1995 = vpop.f32.mrb[0].mxu0
        %1996 = vdwg.mxu0
        %v1997 = vadd.f32 %v1865, %v1991
        %v1998 = vadd.f32 %v1868, %v1994
        %vm1999 = vcmp.ge.s32.totalorder %v1096, 96
        %vm2000 = vcmp.lt.s32.totalorder %v1096, 128
        %vm2001 = vmand %vm1999, %vm2000
        %v2002 = vsel %vm2001, 1, 0
        %v2003 = vcvt.s32.f32 %v2002
        %v2004 = vmul.f32 %v1566, %v2003
        %v2005 = vmul.f32 %v1570, %v2003
        %v2006 = vpack.c.bf16 %v2005, %v2004
        %2007 = vmatprep.subr.bf16.mxu0 0
        %2008 = vmatpush1.bf16.xpose.msra.mxu0 %v1615
        %2009 = vmatprep.subr.bf16.mxu0 0
        %2010 = vmatpush1.bf16.xpose.msra.mxu0 0
        %2011 = vmatprep.subr.bf16.mxu0 0
        %2012 = vmatpush1.bf16.xpose.msra.mxu0 0
        %2013 = vmatprep.subr.bf16.mxu0 0
        %2014 = vmatpush1.bf16.xpose.msra.mxu0 0
        %2015 = vmatprep.subr.bf16.mxu0 0
        %2016 = vmatpush1.bf16.xpose.msra.mxu0 0
        %2017 = vmatprep.subr.bf16.mxu0 0
        %2018 = vmatpush1.bf16.xpose.msra.mxu0 0
        %2019 = vmatprep.subr.bf16.mxu0 0
        %2020 = vmatpush1.bf16.xpose.msra.mxu0 0
        %2021 = vmatprep.subr.bf16.mxu0 0
        %2022 = vmatpush1.bf16.xpose.msra.mxu0 0
        %2023 = vmatprep.subr.bf16.mxu0 0
        %2024 = vmatpush1.bf16.xpose.msra.mxu0 0
        %2025 = vmatprep.subr.bf16.mxu0 0
        %2026 = vmatpush1.bf16.xpose.msra.mxu0 0
        %2027 = vmatprep.subr.bf16.mxu0 0
        %2028 = vmatpush1.bf16.xpose.msra.mxu0 0
        %2029 = vmatprep.subr.bf16.mxu0 0
        %2030 = vmatpush1.bf16.xpose.msra.mxu0 0
        %2031 = vmatprep.subr.bf16.mxu0 0
        %2032 = vmatpush1.bf16.xpose.msra.mxu0 0
        %2033 = vmatprep.subr.bf16.mxu0 0
        %2034 = vmatpush1.bf16.xpose.msra.mxu0 0
        %2035 = vmatprep.subr.bf16.mxu0 0
        %2036 = vmatpush1.bf16.xpose.msra.mxu0 0
        %2037 = vmatprep.subr.bf16.mxu0 0
        %2038 = vmatpush1.bf16.xpose.msra.mxu0 0
        %2039 = vmatprep.mubr.bf16.mxu0 0
        %2040 = vmatmul.mubr.bf16.gmra.mrb[0].mxu0 %v2006
        %v2041 = vpop.f32.mrb[0].mxu0
        %v2042 = vadd.f32 0.0, %v2041
        %v2043 = vpop.f32.mrb[0].mxu0
        %v2044 = vpop.f32.mrb[0].mxu0
        %v2045 = vadd.f32 0.0, %v2044
        %v2046 = vpop.f32.mrb[0].mxu0
        %2047 = vdwg.mxu0
        %v2048 = vmul.f32 %v2042, 0.17677669
        %v2049 = vmul.f32 %v2045, 0.17677669
        %v2050 = vadd.f32 %v2048, %v1431
        %v2051 = vadd.f32 %v2049, %v1432
        %v2052 = vsel %vm1669, %v2050, -inf
        %2053 = vmax.xlane.f32.xlu0 %v2052
        %v2054 = vpop.xlane.xlu0 %2053
        %v2055 = vsel %vm1673, %v2051, -inf
        %2056 = vmax.xlane.f32.xlu0 %v2055
        %v2057 = vpop.xlane.xlu0 %2056
        %v2058 = vsub.f32 %v2050, %v2054
        %v2059 = vsub.f32 %v2051, %v2057
        %v2060 = vmul.f32 %v2058, 1.442695
        %v2061 = vpow.pop %v2060
        %v2062 = vmul.f32 %v2059, 1.442695
        %v2063 = vpow.pop %v2062
        %v2064 = vsel %vm1669, %v2061, 0.0
        %2065 = vadd.xlane.f32.xlu0 %v2064
        %v2066 = vpop.xlane.xlu0 %2065
        %v2067 = vsel %vm1673, %v2063, 0.0
        %2068 = vadd.xlane.f32.xlu0 %v2067
        %v2069 = vpop.xlane.xlu0 %2068
        %v2070 = vrcp.pop %v2066
        %v2071 = vmul.f32 %v2061, %v2070
        %v2072 = vrcp.pop %v2069
        %v2073 = vmul.f32 %v2063, %v2072
        %v2074 = vmul.f32 %v1609, %v2003
        %v2075 = vmul.f32 %v1612, %v2003
        %v2076 = vpack.c.bf16 %v2075, %v2074
        %v2077 = vpack.c.bf16 %v2073, %v2071
        %v2079 = vsel %vm1669, %v2077, 0
        %v2082 = vsel %vm1779, %v2076, 0
        %2084 = vmatprep.subr.bf16.mxu0 0
        %2085 = vmatpush1.bf16.msra.mxu0 %v2082
        %2086 = vmatprep.subr.bf16.mxu0 0
        %2087 = vmatpush1.bf16.msra.mxu0 0
        %2088 = vmatprep.subr.bf16.mxu0 0
        %2089 = vmatpush1.bf16.msra.mxu0 0
        %2090 = vmatprep.subr.bf16.mxu0 0
        %2091 = vmatpush1.bf16.msra.mxu0 0
        %2092 = vmatprep.subr.bf16.mxu0 0
        %2093 = vmatpush1.bf16.msra.mxu0 0
        %2094 = vmatprep.subr.bf16.mxu0 0
        %2095 = vmatpush1.bf16.msra.mxu0 0
        %2096 = vmatprep.subr.bf16.mxu0 0
        %2097 = vmatpush1.bf16.msra.mxu0 0
        %2098 = vmatprep.subr.bf16.mxu0 0
        %2099 = vmatpush1.bf16.msra.mxu0 0
        %2100 = vmatprep.subr.bf16.mxu0 0
        %2101 = vmatpush1.bf16.msra.mxu0 0
        %2102 = vmatprep.subr.bf16.mxu0 0
        %2103 = vmatpush1.bf16.msra.mxu0 0
        %2104 = vmatprep.subr.bf16.mxu0 0
        %2105 = vmatpush1.bf16.msra.mxu0 0
        %2106 = vmatprep.subr.bf16.mxu0 0
        %2107 = vmatpush1.bf16.msra.mxu0 0
        %2108 = vmatprep.subr.bf16.mxu0 0
        %2109 = vmatpush1.bf16.msra.mxu0 0
        %2110 = vmatprep.subr.bf16.mxu0 0
        %2111 = vmatpush1.bf16.msra.mxu0 0
        %2112 = vmatprep.subr.bf16.mxu0 0
        %2113 = vmatpush1.bf16.msra.mxu0 0
        %2114 = vmatprep.subr.bf16.mxu0 0
        %2115 = vmatpush1.bf16.msra.mxu0 0
        %2116 = vmatprep.mubr.bf16.mxu0 0
        %2117 = vmatmul.mubr.bf16.gmra.mrb[0].mxu0 %v2079
        %v2118 = vpop.f32.mrb[0].mxu0
        %v2119 = vadd.f32 0.0, %v2118
        %v2120 = vpop.f32.mrb[0].mxu0
        %v2121 = vpop.f32.mrb[0].mxu0
        %v2122 = vadd.f32 0.0, %v2121
        %v2123 = vpop.f32.mrb[0].mxu0
        %2124 = vdwg.mxu0
        %v2125 = vadd.f32 %v1997, %v2119
        %v2126 = vadd.f32 %v1998, %v2122
        %v2127 = vpack.c.bf16 %v2126, %v2125
        %v2128 = vld [vmem:[#allocation12] sm:$0xff]
        %v2129 = vld [vmem:[#allocation12 + $0x8] sm:$0xff]
        %v2130 = vld [vmem:[#allocation12 + $0x10] sm:$0xff]
        %v2131 = vld [vmem:[#allocation12 + $0x18] sm:$0xff]
        %v2132 = vld [vmem:[#allocation12 + $0x20] sm:$0xff]
        %v2133 = vld [vmem:[#allocation12 + $0x28] sm:$0xff]
        %v2134 = vld [vmem:[#allocation12 + $0x30] sm:$0xff]
        %v2135 = vld [vmem:[#allocation12 + $0x38] sm:$0xff]
        %v2136 = vld [vmem:[#allocation12 + $0x40] sm:$0xff]
        %v2137 = vld [vmem:[#allocation12 + $0x48] sm:$0xff]
        %v2138 = vld [vmem:[#allocation12 + $0x50] sm:$0xff]
        %v2139 = vld [vmem:[#allocation12 + $0x58] sm:$0xff]
        %v2140 = vld [vmem:[#allocation12 + $0x60] sm:$0xff]
        %v2141 = vld [vmem:[#allocation12 + $0x68] sm:$0xff]
        %v2142 = vld [vmem:[#allocation12 + $0x70] sm:$0xff]
        %v2143 = vld [vmem:[#allocation12 + $0x78] sm:$0xff]
        %v2144 = vpack.c.bf16 %v2129, %v2128
        %v2145 = vpack.c.bf16 %v2131, %v2130
        %v2146 = vpack.c.bf16 %v2133, %v2132
        %v2147 = vpack.c.bf16 %v2135, %v2134
        %v2148 = vpack.c.bf16 %v2137, %v2136
        %v2149 = vpack.c.bf16 %v2139, %v2138
        %v2150 = vpack.c.bf16 %v2141, %v2140
        %v2151 = vpack.c.bf16 %v2143, %v2142
        %2152 = vmatprep.subr.bf16.mxu0 0
        %2153 = vmatpush1.bf16.msra.mxu0 %v2144
        %2154 = vmatprep.subr.bf16.mxu0 0
        %2155 = vmatpush1.bf16.msra.mxu0 %v2145
        %2156 = vmatprep.subr.bf16.mxu0 0
        %2157 = vmatpush1.bf16.msra.mxu0 %v2146
        %2158 = vmatprep.subr.bf16.mxu0 0
        %2159 = vmatpush1.bf16.msra.mxu0 %v2147
        %2160 = vmatprep.subr.bf16.mxu0 0
        %2161 = vmatpush1.bf16.msra.mxu0 %v2148
        %2162 = vmatprep.subr.bf16.mxu0 0
        %2163 = vmatpush1.bf16.msra.mxu0 %v2149
        %2164 = vmatprep.subr.bf16.mxu0 0
        %2165 = vmatpush1.bf16.msra.mxu0 %v2150
        %2166 = vmatprep.subr.bf16.mxu0 0
        %2167 = vmatpush1.bf16.msra.mxu0 %v2151
        %2168 = vmatprep.subr.bf16.mxu0 0
        %2169 = vmatpush1.bf16.msra.mxu0 0
        %2170 = vmatprep.subr.bf16.mxu0 0
        %2171 = vmatpush1.bf16.msra.mxu0 0
        %2172 = vmatprep.subr.bf16.mxu0 0
        %2173 = vmatpush1.bf16.msra.mxu0 0
        %2174 = vmatprep.subr.bf16.mxu0 0
        %2175 = vmatpush1.bf16.msra.mxu0 0
        %2176 = vmatprep.subr.bf16.mxu0 0
        %2177 = vmatpush1.bf16.msra.mxu0 0
        %2178 = vmatprep.subr.bf16.mxu0 0
        %2179 = vmatpush1.bf16.msra.mxu0 0
        %2180 = vmatprep.subr.bf16.mxu0 0
        %2181 = vmatpush1.bf16.msra.mxu0 0
        %2182 = vmatprep.subr.bf16.mxu0 0
        %2183 = vmatpush1.bf16.msra.mxu0 0
        %2184 = vmatprep.mubr.bf16.mxu0 0
        %2185 = vmatmul.mubr.bf16.gmra.mrb[0].mxu0 %v2127
        %v2186 = vpop.f32.mrb[0].mxu0
        %v2187 = vadd.f32 0.0, %v2186
        %v2188 = vpop.f32.mrb[0].mxu0
        %v2189 = vpop.f32.mrb[0].mxu0
        %v2190 = vadd.f32 0.0, %v2189
        %v2191 = vpop.f32.mrb[0].mxu0
        %2192 = vdwg.mxu0
        %v2193 = vadd.f32 %v1357, %v2187
        %v2194 = vadd.f32 %v1362, %v2190
        %v2195 = vld [vmem:[%s13] sm:$0x1]
        %v2196 = vmul.f32 %v2193, %v2193
        %v2197 = vmul.f32 %v2194, %v2194
        %2198 = vadd.xlane.f32.xlu0 %v2196
        %v2199 = vpop.xlane.xlu0 %2198
        %v2200 = vsel %vm1286, %v2197, 0.0
        %2201 = vadd.xlane.f32.xlu0 %v2200
        %v2202 = vpop.xlane.xlu0 %2201
        %v2203 = vmul.f32 %v2199, %v1441
        %v2204 = vmul.f32 %v2202, %v1441
        %v2205 = vadd.f32 %v2203, 1e-06
        %v2206 = vadd.f32 %v2204, 1e-06
        %v2207 = vrsqrt.pop %v2205
        %v2208 = vrsqrt.pop %v2206
        %v2209 = vmul.f32 %v2193, %v2207
        %v2210 = vmul.f32 %v2194, %v2208
        %v2212 = vlaneseq
        %v2213 = vshrl.u32 %v2212, 7
        %v2214 = vsub.s32 0, %v2213
        %v2215 = vrot.slane %v2195, %v2214
        %v2217 = vmul.f32 %v2209, %v2215
        %v2218 = vmul.f32 %v2210, %v2215
        %v2219 = vpack.c.bf16 %v2218, %v2217
        %v2220 = vld [vmem:[%s14] sm:$0xff]
        %v2221 = vld [vmem:[%s14 + $0x8] sm:$0xff]
        %v2222 = vld [vmem:[%s14 + $0x10] sm:$0xff]
        %v2223 = vld [vmem:[%s14 + $0x18] sm:$0xff]
        %v2224 = vld [vmem:[%s14 + $0x20] sm:$0xff]
        %v2225 = vld [vmem:[%s14 + $0x28] sm:$0xff]
        %v2226 = vld [vmem:[%s14 + $0x30] sm:$0xff]
        %v2227 = vld [vmem:[%s14 + $0x38] sm:$0xff]
        %v2228 = vld [vmem:[%s14 + $0x40] sm:$0xff]
        %v2229 = vld [vmem:[%s14 + $0x48] sm:$0xff]
        %v2230 = vld [vmem:[%s14 + $0x50] sm:$0xff]
        %v2231 = vld [vmem:[%s14 + $0x58] sm:$0xff]
        %v2232 = vld [vmem:[%s14 + $0x60] sm:$0xff]
        %v2233 = vld [vmem:[%s14 + $0x68] sm:$0xff]
        %v2234 = vld [vmem:[%s14 + $0x70] sm:$0xff]
        %v2235 = vld [vmem:[%s14 + $0x78] sm:$0xff]
        %v2236 = vld [vmem:[%s14 + $0x80] sm:$0xff]
        %v2237 = vld [vmem:[%s14 + $0x88] sm:$0xff]
        %v2238 = vld [vmem:[%s14 + $0x90] sm:$0xff]
        %v2239 = vld [vmem:[%s14 + $0x98] sm:$0xff]
        %v2240 = vld [vmem:[%s14 + $0xa0] sm:$0xff]
        %v2241 = vld [vmem:[%s14 + $0xa8] sm:$0xff]
        %v2242 = vld [vmem:[%s14 + $0xb0] sm:$0xff]
        %v2243 = vld [vmem:[%s14 + $0xb8] sm:$0xff]
        %v2244 = vld [vmem:[%s14 + $0xc0] sm:$0xff]
        %v2245 = vld [vmem:[%s14 + $0xc8] sm:$0xff]
        %v2246 = vld [vmem:[%s14 + $0xd0] sm:$0xff]
        %v2247 = vld [vmem:[%s14 + $0xd8] sm:$0xff]
        %v2248 = vld [vmem:[%s14 + $0xe0] sm:$0xff]
        %v2249 = vld [vmem:[%s14 + $0xe8] sm:$0xff]
        %v2250 = vld [vmem:[%s14 + $0xf0] sm:$0xff]
        %v2251 = vld [vmem:[%s14 + $0xf8] sm:$0xff]
        %v2252 = vld [vmem:[%s14 + $0x100] sm:$0xff]
        %v2253 = vld [vmem:[%s14 + $0x108] sm:$0xff]
        %v2254 = vld [vmem:[%s14 + $0x110] sm:$0xff]
        %v2255 = vld [vmem:[%s14 + $0x118] sm:$0xff]
        %v2256 = vld [vmem:[%s14 + $0x120] sm:$0xff]
        %v2257 = vld [vmem:[%s14 + $0x128] sm:$0xff]
        %v2258 = vld [vmem:[%s14 + $0x130] sm:$0xff]
        %v2259 = vld [vmem:[%s14 + $0x138] sm:$0xff]
        %v2260 = vld [vmem:[%s14 + $0x140] sm:$0xff]
        %v2261 = vld [vmem:[%s14 + $0x148] sm:$0xff]
        %v2262 = vld [vmem:[%s14 + $0x150] sm:$0xff]
        %v2263 = vld [vmem:[%s14 + $0x158] sm:$0xff]
        %v2264 = vld [vmem:[%s14 + $0x160] sm:$0xff]
        %v2265 = vld [vmem:[%s14 + $0x168] sm:$0xff]
        %v2266 = vld [vmem:[%s14 + $0x170] sm:$0xff]
        %v2267 = vld [vmem:[%s14 + $0x178] sm:$0xff]
        %v2268 = vld [vmem:[%s14 + $0x180] sm:$0xff]
        %v2269 = vld [vmem:[%s14 + $0x188] sm:$0xff]
        %v2270 = vld [vmem:[%s14 + $0x190] sm:$0xff]
        %v2271 = vld [vmem:[%s14 + $0x198] sm:$0xff]
        %v2272 = vld [vmem:[%s14 + $0x1a0] sm:$0xff]
        %v2273 = vld [vmem:[%s14 + $0x1a8] sm:$0xff]
        %v2274 = vld [vmem:[%s14 + $0x1b0] sm:$0xff]
        %v2275 = vld [vmem:[%s14 + $0x1b8] sm:$0xff]
        %v2276 = vld [vmem:[%s14 + $0x1c0] sm:$0xff]
        %v2277 = vld [vmem:[%s14 + $0x1c8] sm:$0xff]
        %v2278 = vld [vmem:[%s14 + $0x1d0] sm:$0xff]
        %v2279 = vld [vmem:[%s14 + $0x1d8] sm:$0xff]
        %v2280 = vld [vmem:[%s14 + $0x1e0] sm:$0xff]
        %v2281 = vld [vmem:[%s14 + $0x1e8] sm:$0xff]
        %v2282 = vld [vmem:[%s14 + $0x1f0] sm:$0xff]
        %v2283 = vld [vmem:[%s14 + $0x1f8] sm:$0xff]
        %v2284 = vpack.c.bf16 %v2224, %v2220
        %v2285 = vpack.c.bf16 %v2225, %v2221
        %v2286 = vpack.c.bf16 %v2226, %v2222
        %v2287 = vpack.c.bf16 %v2227, %v2223
        %v2288 = vpack.c.bf16 %v2232, %v2228
        %v2289 = vpack.c.bf16 %v2233, %v2229
        %v2290 = vpack.c.bf16 %v2234, %v2230
        %v2291 = vpack.c.bf16 %v2235, %v2231
        %v2292 = vpack.c.bf16 %v2240, %v2236
        %v2293 = vpack.c.bf16 %v2241, %v2237
        %v2294 = vpack.c.bf16 %v2242, %v2238
        %v2295 = vpack.c.bf16 %v2243, %v2239
        %v2296 = vpack.c.bf16 %v2248, %v2244
        %v2297 = vpack.c.bf16 %v2249, %v2245
        %v2298 = vpack.c.bf16 %v2250, %v2246
        %v2299 = vpack.c.bf16 %v2251, %v2247
        %v2300 = vpack.c.bf16 %v2256, %v2252
        %v2301 = vpack.c.bf16 %v2257, %v2253
        %v2302 = vpack.c.bf16 %v2258, %v2254
        %v2303 = vpack.c.bf16 %v2259, %v2255
        %v2304 = vpack.c.bf16 %v2264, %v2260
        %v2305 = vpack.c.bf16 %v2265, %v2261
        %v2306 = vpack.c.bf16 %v2266, %v2262
        %v2307 = vpack.c.bf16 %v2267, %v2263
        %v2308 = vpack.c.bf16 %v2272, %v2268
        %v2309 = vpack.c.bf16 %v2273, %v2269
        %v2310 = vpack.c.bf16 %v2274, %v2270
        %v2311 = vpack.c.bf16 %v2275, %v2271
        %v2312 = vpack.c.bf16 %v2280, %v2276
        %v2313 = vpack.c.bf16 %v2281, %v2277
        %v2314 = vpack.c.bf16 %v2282, %v2278
        %v2315 = vpack.c.bf16 %v2283, %v2279
        %2316 = vmatprep.subr.bf16.mxu0 %v2285
        %2317 = vmatpush1.bf16.msra.mxu0 %v2284
        %2318 = vmatprep.subr.bf16.mxu0 %v2289
        %2319 = vmatpush1.bf16.msra.mxu0 %v2288
        %2320 = vmatprep.subr.bf16.mxu0 %v2293
        %2321 = vmatpush1.bf16.msra.mxu0 %v2292
        %2322 = vmatprep.subr.bf16.mxu0 %v2297
        %2323 = vmatpush1.bf16.msra.mxu0 %v2296
        %2324 = vmatprep.subr.bf16.mxu0 %v2301
        %2325 = vmatpush1.bf16.msra.mxu0 %v2300
        %2326 = vmatprep.subr.bf16.mxu0 %v2305
        %2327 = vmatpush1.bf16.msra.mxu0 %v2304
        %2328 = vmatprep.subr.bf16.mxu0 %v2309
        %2329 = vmatpush1.bf16.msra.mxu0 %v2308
        %2330 = vmatprep.subr.bf16.mxu0 %v2313
        %2331 = vmatpush1.bf16.msra.mxu0 %v2312
        %2332 = vmatprep.subr.bf16.mxu0 0
        %2333 = vmatpush1.bf16.msra.mxu0 0
        %2334 = vmatprep.subr.bf16.mxu0 0
        %2335 = vmatpush1.bf16.msra.mxu0 0
        %2336 = vmatprep.subr.bf16.mxu0 0
        %2337 = vmatpush1.bf16.msra.mxu0 0
        %2338 = vmatprep.subr.bf16.mxu0 0
        %2339 = vmatpush1.bf16.msra.mxu0 0
        %2340 = vmatprep.subr.bf16.mxu0 0
        %2341 = vmatpush1.bf16.msra.mxu0 0
        %2342 = vmatprep.subr.bf16.mxu0 0
        %2343 = vmatpush1.bf16.msra.mxu0 0
        %2344 = vmatprep.subr.bf16.mxu0 0
        %2345 = vmatpush1.bf16.msra.mxu0 0
        %2346 = vmatprep.subr.bf16.mxu0 0
        %2347 = vmatpush1.bf16.msra.mxu0 0
        %2348 = vmatprep.mubr.bf16.mxu0 0
        %2349 = vmatmul.mubr.bf16.gmra.mrb[0].mxu0 %v2219
        %v2350 = vpop.f32.mrb[0].mxu0
        %v2351 = vadd.f32 0.0, %v2350
        %v2352 = vpop.f32.mrb[0].mxu0
        %v2353 = vadd.f32 0.0, %v2352
        %v2354 = vpop.f32.mrb[0].mxu0
        %v2355 = vadd.f32 0.0, %v2354
        %v2356 = vpop.f32.mrb[0].mxu0
        %v2357 = vadd.f32 0.0, %v2356
        %2358 = vdwg.mxu0
        %2359 = vmatprep.subr.bf16.mxu0 %v2287
        %2360 = vmatpush1.bf16.msra.mxu0 %v2286
        %2361 = vmatprep.subr.bf16.mxu0 %v2291
        %2362 = vmatpush1.bf16.msra.mxu0 %v2290
        %2363 = vmatprep.subr.bf16.mxu0 %v2295
        %2364 = vmatpush1.bf16.msra.mxu0 %v2294
        %2365 = vmatprep.subr.bf16.mxu0 %v2299
        %2366 = vmatpush1.bf16.msra.mxu0 %v2298
        %2367 = vmatprep.subr.bf16.mxu0 %v2303
        %2368 = vmatpush1.bf16.msra.mxu0 %v2302
        %2369 = vmatprep.subr.bf16.mxu0 %v2307
        %2370 = vmatpush1.bf16.msra.mxu0 %v2306
        %2371 = vmatprep.subr.bf16.mxu0 %v2311
        %2372 = vmatpush1.bf16.msra.mxu0 %v2310
        %2373 = vmatprep.subr.bf16.mxu0 %v2315
        %2374 = vmatpush1.bf16.msra.mxu0 %v2314
        %2375 = vmatprep.subr.bf16.mxu0 0
        %2376 = vmatpush1.bf16.msra.mxu0 0
        %2377 = vmatprep.subr.bf16.mxu0 0
        %2378 = vmatpush1.bf16.msra.mxu0 0
        %2379 = vmatprep.subr.bf16.mxu0 0
        %2380 = vmatpush1.bf16.msra.mxu0 0
        %2381 = vmatprep.subr.bf16.mxu0 0
        %2382 = vmatpush1.bf16.msra.mxu0 0
        %2383 = vmatprep.subr.bf16.mxu0 0
        %2384 = vmatpush1.bf16.msra.mxu0 0
        %2385 = vmatprep.subr.bf16.mxu0 0
        %2386 = vmatpush1.bf16.msra.mxu0 0
        %2387 = vmatprep.subr.bf16.mxu0 0
        %2388 = vmatpush1.bf16.msra.mxu0 0
        %2389 = vmatprep.subr.bf16.mxu0 0
        %2390 = vmatpush1.bf16.msra.mxu0 0
        %2391 = vmatprep.mubr.bf16.mxu0 0
        %2392 = vmatmul.mubr.bf16.gmra.mrb[0].mxu0 %v2219
        %v2393 = vpop.f32.mrb[0].mxu0
        %v2394 = vadd.f32 0.0, %v2393
        %v2395 = vpop.f32.mrb[0].mxu0
        %v2396 = vadd.f32 0.0, %v2395
        %v2397 = vpop.f32.mrb[0].mxu0
        %v2398 = vadd.f32 0.0, %v2397
        %v2399 = vpop.f32.mrb[0].mxu0
        %v2400 = vadd.f32 0.0, %v2399
        %2401 = vdwg.mxu0
        %v2402 = vxor.u32 %v2351, 2147483648
        %v2403 = vxor.u32 %v2353, 2147483648
        %v2404 = vxor.u32 %v2355, 2147483648
        %v2405 = vxor.u32 %v2357, 2147483648
        %v2406 = vmul.f32 %v2402, 1.442695
        %v2407 = vpow.pop %v2406
        %v2408 = vmul.f32 %v2403, 1.442695
        %v2409 = vpow.pop %v2408
        %v2410 = vmul.f32 %v2404, 1.442695
        %v2411 = vpow.pop %v2410
        %v2412 = vmul.f32 %v2405, 1.442695
        %v2413 = vpow.pop %v2412
        %v2414 = vadd.f32 %v2407, 1.0
        %v2415 = vadd.f32 %v2409, 1.0
        %v2416 = vadd.f32 %v2411, 1.0
        %v2417 = vadd.f32 %v2413, 1.0
        %v2418 = vrcp.pop %v2414
        %v2419 = vmul.f32 1.0, %v2418
        %v2420 = vrcp.pop %v2415
        %v2421 = vmul.f32 1.0, %v2420
        %v2422 = vrcp.pop %v2416
        %v2423 = vmul.f32 1.0, %v2422
        %v2424 = vrcp.pop %v2417
        %v2425 = vmul.f32 1.0, %v2424
        %v2426 = vmul.f32 %v2351, %v2419
        %v2427 = vmul.f32 %v2353, %v2421
        %v2428 = vmul.f32 %v2355, %v2423
        %v2429 = vmul.f32 %v2357, %v2425
        %v2430 = vmul.f32 %v2426, %v2394
        %v2431 = vmul.f32 %v2427, %v2396
        %v2432 = vmul.f32 %v2428, %v2398
        %v2433 = vmul.f32 %v2429, %v2400
        %v2434 = vpack.c.bf16 %v2432, %v2430
        %v2435 = vpack.c.bf16 %v2433, %v2431
        %v2436 = vld [vmem:[#allocation13] sm:$0xff]
        %v2437 = vld [vmem:[#allocation13 + $0x8] sm:$0xff]
        %v2438 = vld [vmem:[#allocation13 + $0x10] sm:$0xff]
        %v2439 = vld [vmem:[#allocation13 + $0x18] sm:$0xff]
        %v2440 = vld [vmem:[#allocation13 + $0x20] sm:$0xff]
        %v2441 = vld [vmem:[#allocation13 + $0x28] sm:$0xff]
        %v2442 = vld [vmem:[#allocation13 + $0x30] sm:$0xff]
        %v2443 = vld [vmem:[#allocation13 + $0x38] sm:$0xff]
        %v2444 = vld [vmem:[#allocation13 + $0x40] sm:$0xff]
        %v2445 = vld [vmem:[#allocation13 + $0x48] sm:$0xff]
        %v2446 = vld [vmem:[#allocation13 + $0x50] sm:$0xff]
        %v2447 = vld [vmem:[#allocation13 + $0x58] sm:$0xff]
        %v2448 = vld [vmem:[#allocation13 + $0x60] sm:$0xff]
        %v2449 = vld [vmem:[#allocation13 + $0x68] sm:$0xff]
        %v2450 = vld [vmem:[#allocation13 + $0x70] sm:$0xff]
        %v2451 = vld [vmem:[#allocation13 + $0x78] sm:$0xff]
        %v2452 = vld [vmem:[#allocation13 + $0x80] sm:$0xff]
        %v2453 = vld [vmem:[#allocation13 + $0x88] sm:$0xff]
        %v2454 = vld [vmem:[#allocation13 + $0x90] sm:$0xff]
        %v2455 = vld [vmem:[#allocation13 + $0x98] sm:$0xff]
        %v2456 = vld [vmem:[#allocation13 + $0xa0] sm:$0xff]
        %v2457 = vld [vmem:[#allocation13 + $0xa8] sm:$0xff]
        %v2458 = vld [vmem:[#allocation13 + $0xb0] sm:$0xff]
        %v2459 = vld [vmem:[#allocation13 + $0xb8] sm:$0xff]
        %v2460 = vld [vmem:[#allocation13 + $0xc0] sm:$0xff]
        %v2461 = vld [vmem:[#allocation13 + $0xc8] sm:$0xff]
        %v2462 = vld [vmem:[#allocation13 + $0xd0] sm:$0xff]
        %v2463 = vld [vmem:[#allocation13 + $0xd8] sm:$0xff]
        %v2464 = vld [vmem:[#allocation13 + $0xe0] sm:$0xff]
        %v2465 = vld [vmem:[#allocation13 + $0xe8] sm:$0xff]
        %v2466 = vld [vmem:[#allocation13 + $0xf0] sm:$0xff]
        %v2467 = vld [vmem:[#allocation13 + $0xf8] sm:$0xff]
        %v2468 = vpack.c.bf16 %v2437, %v2436
        %v2469 = vpack.c.bf16 %v2439, %v2438
        %v2470 = vpack.c.bf16 %v2441, %v2440
        %v2471 = vpack.c.bf16 %v2443, %v2442
        %v2472 = vpack.c.bf16 %v2445, %v2444
        %v2473 = vpack.c.bf16 %v2447, %v2446
        %v2474 = vpack.c.bf16 %v2449, %v2448
        %v2475 = vpack.c.bf16 %v2451, %v2450
        %v2476 = vpack.c.bf16 %v2453, %v2452
        %v2477 = vpack.c.bf16 %v2455, %v2454
        %v2478 = vpack.c.bf16 %v2457, %v2456
        %v2479 = vpack.c.bf16 %v2459, %v2458
        %v2480 = vpack.c.bf16 %v2461, %v2460
        %v2481 = vpack.c.bf16 %v2463, %v2462
        %v2482 = vpack.c.bf16 %v2465, %v2464
        %v2483 = vpack.c.bf16 %v2467, %v2466
        %2484 = vmatprep.subr.bf16.mxu0 0
        %2485 = vmatpush1.bf16.msra.mxu0 %v2468
        %2486 = vmatprep.subr.bf16.mxu0 0
        %2487 = vmatpush1.bf16.msra.mxu0 %v2469
        %2488 = vmatprep.subr.bf16.mxu0 0
        %2489 = vmatpush1.bf16.msra.mxu0 %v2470
        %2490 = vmatprep.subr.bf16.mxu0 0
        %2491 = vmatpush1.bf16.msra.mxu0 %v2471
        %2492 = vmatprep.subr.bf16.mxu0 0
        %2493 = vmatpush1.bf16.msra.mxu0 %v2472
        %2494 = vmatprep.subr.bf16.mxu0 0
        %2495 = vmatpush1.bf16.msra.mxu0 %v2473
        %2496 = vmatprep.subr.bf16.mxu0 0
        %2497 = vmatpush1.bf16.msra.mxu0 %v2474
        %2498 = vmatprep.subr.bf16.mxu0 0
        %2499 = vmatpush1.bf16.msra.mxu0 %v2475
        %2500 = vmatprep.subr.bf16.mxu0 0
        %2501 = vmatpush1.bf16.msra.mxu0 %v2476
        %2502 = vmatprep.subr.bf16.mxu0 0
        %2503 = vmatpush1.bf16.msra.mxu0 %v2477
        %2504 = vmatprep.subr.bf16.mxu0 0
        %2505 = vmatpush1.bf16.msra.mxu0 %v2478
        %2506 = vmatprep.subr.bf16.mxu0 0
        %2507 = vmatpush1.bf16.msra.mxu0 %v2479
        %2508 = vmatprep.subr.bf16.mxu0 0
        %2509 = vmatpush1.bf16.msra.mxu0 %v2480
        %2510 = vmatprep.subr.bf16.mxu0 0
        %2511 = vmatpush1.bf16.msra.mxu0 %v2481
        %2512 = vmatprep.subr.bf16.mxu0 0
        %2513 = vmatpush1.bf16.msra.mxu0 %v2482
        %2514 = vmatprep.subr.bf16.mxu0 0
        %2515 = vmatpush1.bf16.msra.mxu0 %v2483
        %2516 = vmatprep.mubr.bf16.mxu0 %v2435
        %2517 = vmatmul.mubr.bf16.gmra.mrb[0].mxu0 %v2434
        %v2518 = vpop.f32.mrb[0].mxu0
        %v2519 = vadd.f32 0.0, %v2518
        %v2520 = vpop.f32.mrb[0].mxu0
        %v2521 = vpop.f32.mrb[0].mxu0
        %v2522 = vadd.f32 0.0, %v2521
        %v2523 = vpop.f32.mrb[0].mxu0
        %2524 = vdwg.mxu0
        %v2525 = vadd.f32 %v2193, %v2519
        %v2526 = vadd.f32 %v2194, %v2522
        %v2527 = vld [vmem:[%s16] sm:$0x1]
        %v2528 = vmul.f32 %v2525, %v2525
        %v2529 = vmul.f32 %v2526, %v2526
        %2530 = vadd.xlane.f32.xlu0 %v2528
        %v2531 = vpop.xlane.xlu0 %2530
        %v2532 = vsel %vm1286, %v2529, 0.0
        %2533 = vadd.xlane.f32.xlu0 %v2532
        %v2534 = vpop.xlane.xlu0 %2533
        %v2535 = vmul.f32 %v2531, %v1441
        %v2536 = vmul.f32 %v2534, %v1441
        %v2537 = vadd.f32 %v2535, 1e-06
        %v2538 = vadd.f32 %v2536, 1e-06
        %v2539 = vrsqrt.pop %v2537
        %v2540 = vrsqrt.pop %v2538
        %v2541 = vmul.f32 %v2525, %v2539
        %v2542 = vmul.f32 %v2526, %v2540
        %v2544 = vlaneseq
        %v2545 = vshrl.u32 %v2544, 7
        %v2546 = vsub.s32 0, %v2545
        %v2547 = vrot.slane %v2527, %v2546
        %v2549 = vmul.f32 %v2541, %v2547
        %v2550 = vmul.f32 %v2542, %v2547
        %v2551 = vpack.c.bf16 %v2550, %v2549
        %v2552 = vld [vmem:[#allocation15] sm:$0xff]
        %v2553 = vld [vmem:[#allocation15 + $0x8] sm:$0xff]
        %v2554 = vld [vmem:[#allocation15 + $0x10] sm:$0xff]
        %v2555 = vld [vmem:[#allocation15 + $0x18] sm:$0xff]
        %v2556 = vld [vmem:[#allocation15 + $0x20] sm:$0xff]
        %v2557 = vld [vmem:[#allocation15 + $0x28] sm:$0xff]
        %v2558 = vld [vmem:[#allocation15 + $0x30] sm:$0xff]
        %v2559 = vld [vmem:[#allocation15 + $0x38] sm:$0xff]
        %v2560 = vld [vmem:[#allocation15 + $0x40] sm:$0xff]
        %v2561 = vld [vmem:[#allocation15 + $0x48] sm:$0xff]
        %v2562 = vld [vmem:[#allocation15 + $0x50] sm:$0xff]
        %v2563 = vld [vmem:[#allocation15 + $0x58] sm:$0xff]
        %v2564 = vld [vmem:[#allocation15 + $0x60] sm:$0xff]
        %v2565 = vld [vmem:[#allocation15 + $0x68] sm:$0xff]
        %v2566 = vld [vmem:[#allocation15 + $0x70] sm:$0xff]
        %v2567 = vld [vmem:[#allocation15 + $0x78] sm:$0xff]
        %v2568 = vld [vmem:[#allocation15 + $0x80] sm:$0xff]
        %v2569 = vld [vmem:[#allocation15 + $0x88] sm:$0xff]
        %v2570 = vld [vmem:[#allocation15 + $0x90] sm:$0xff]
        %v2571 = vld [vmem:[#allocation15 + $0x98] sm:$0xff]
        %v2572 = vld [vmem:[#allocation15 + $0xa0] sm:$0xff]
        %v2573 = vld [vmem:[#allocation15 + $0xa8] sm:$0xff]
        %v2574 = vld [vmem:[#allocation15 + $0xb0] sm:$0xff]
        %v2575 = vld [vmem:[#allocation15 + $0xb8] sm:$0xff]
        %v2576 = vld [vmem:[#allocation15 + $0xc0] sm:$0xff]
        %v2577 = vld [vmem:[#allocation15 + $0xc8] sm:$0xff]
        %v2578 = vld [vmem:[#allocation15 + $0xd0] sm:$0xff]
        %v2579 = vld [vmem:[#allocation15 + $0xd8] sm:$0xff]
        %v2580 = vld [vmem:[#allocation15 + $0xe0] sm:$0xff]
        %v2581 = vld [vmem:[#allocation15 + $0xe8] sm:$0xff]
        %v2582 = vld [vmem:[#allocation15 + $0xf0] sm:$0xff]
        %v2583 = vld [vmem:[#allocation15 + $0xf8] sm:$0xff]
        %v2584 = vpack.c.bf16 %v2554, %v2552
        %v2585 = vpack.c.bf16 %v2555, %v2553
        %v2586 = vpack.c.bf16 %v2558, %v2556
        %v2587 = vpack.c.bf16 %v2559, %v2557
        %v2588 = vpack.c.bf16 %v2562, %v2560
        %v2589 = vpack.c.bf16 %v2563, %v2561
        %v2590 = vpack.c.bf16 %v2566, %v2564
        %v2591 = vpack.c.bf16 %v2567, %v2565
        %v2592 = vpack.c.bf16 %v2570, %v2568
        %v2593 = vpack.c.bf16 %v2571, %v2569
        %v2594 = vpack.c.bf16 %v2574, %v2572
        %v2595 = vpack.c.bf16 %v2575, %v2573
        %v2596 = vpack.c.bf16 %v2578, %v2576
        %v2597 = vpack.c.bf16 %v2579, %v2577
        %v2598 = vpack.c.bf16 %v2582, %v2580
        %v2599 = vpack.c.bf16 %v2583, %v2581
        %v2600 = vld [vmem:[%s18] sm:$0x3]
        %v2602 = vlaneseq
        %v2603 = vshrl.u32 %v2602, 7
        %v2604 = vsub.s32 0, %v2603
        %v2605 = vrot.slane %v2600, %v2604
        %v2606 = vlaneseq
        %v2607 = vshrl.u32 %v2606, 7
        %v2608 = vsub.s32 1, %v2607
        %v2609 = vrot.slane %v2600, %v2608
        %2612 = vmatprep.subr.bf16.mxu0 %v2585
        %2613 = vmatpush1.bf16.msra.mxu0 %v2584
        %2614 = vmatprep.subr.bf16.mxu0 %v2587
        %2615 = vmatpush1.bf16.msra.mxu0 %v2586
        %2616 = vmatprep.subr.bf16.mxu0 %v2589
        %2617 = vmatpush1.bf16.msra.mxu0 %v2588
        %2618 = vmatprep.subr.bf16.mxu0 %v2591
        %2619 = vmatpush1.bf16.msra.mxu0 %v2590
        %2620 = vmatprep.subr.bf16.mxu0 %v2593
        %2621 = vmatpush1.bf16.msra.mxu0 %v2592
        %2622 = vmatprep.subr.bf16.mxu0 %v2595
        %2623 = vmatpush1.bf16.msra.mxu0 %v2594
        %2624 = vmatprep.subr.bf16.mxu0 %v2597
        %2625 = vmatpush1.bf16.msra.mxu0 %v2596
        %2626 = vmatprep.subr.bf16.mxu0 %v2599
        %2627 = vmatpush1.bf16.msra.mxu0 %v2598
        %2628 = vmatprep.subr.bf16.mxu0 0
        %2629 = vmatpush1.bf16.msra.mxu0 0
        %2630 = vmatprep.subr.bf16.mxu0 0
        %2631 = vmatpush1.bf16.msra.mxu0 0
        %2632 = vmatprep.subr.bf16.mxu0 0
        %2633 = vmatpush1.bf16.msra.mxu0 0
        %2634 = vmatprep.subr.bf16.mxu0 0
        %2635 = vmatpush1.bf16.msra.mxu0 0
        %2636 = vmatprep.subr.bf16.mxu0 0
        %2637 = vmatpush1.bf16.msra.mxu0 0
        %2638 = vmatprep.subr.bf16.mxu0 0
        %2639 = vmatpush1.bf16.msra.mxu0 0
        %2640 = vmatprep.subr.bf16.mxu0 0
        %2641 = vmatpush1.bf16.msra.mxu0 0
        %2642 = vmatprep.subr.bf16.mxu0 0
        %2643 = vmatpush1.bf16.msra.mxu0 0
        %2644 = vmatprep.mubr.bf16.mxu0 0
        %2645 = vmatmul.mubr.bf16.gmra.mrb[0].mxu0 %v2551
        %v2646 = vpop.f32.mrb[0].mxu0
        %v2647 = vadd.f32 %v2605, %v2646
        %v2648 = vpop.f32.mrb[0].mxu0
        %v2649 = vadd.f32 %v2609, %v2648
        %v2650 = vpop.f32.mrb[0].mxu0
        %v2651 = vadd.f32 %v2605, %v2650
        %v2652 = vpop.f32.mrb[0].mxu0
        %v2653 = vadd.f32 %v2609, %v2652
        %2654 = vdwg.mxu0
        %2655 = vst [vmem:[%s765] sm:$0xff] %v2647
        %2656 = vst [vmem:[%s765 + $0x8] sm:$0xff] %v2649
        %2657 = vst [vmem:[%s765 + $0x10] sm:$0xf] %v2651
        %2658 = vst [vmem:[%s765 + $0x18] sm:$0xf] %v2653
        %2659 = vst [vmem:[%s770] sm:$0xff] %v1357
        %2660 = vst [vmem:[%s770 + $0x8] sm:$0xf] %v1362
        %2661 = vst [vmem:[%s775] sm:$0xff] %v2525
        %2662 = vst [vmem:[%s775 + $0x8] sm:$0xf] %v2526
        %2663 = vst [vmem:[%s780] sm:$0xff] %v2549
        %2664 = vst [vmem:[%s780 + $0x8] sm:$0xf] %v2550
        %p2665 = scmp.lt.s32.totalorder %s48, 1
        %s2666 = scalar_select %p2665, %s48, 1
        %s2667 = smul.addr %s2666, 4
        %s2668 = smul.addr %s2667, 8
        %s2669 = scalar_lea.vmem %s19, %s2668
        %p2670 = scmp.lt.s32.totalorder %s48, 1
        %s2671 = scalar_select %p2670, %s48, 1
        %s2672 = smul.addr %s2671, 2
        %s2673 = smul.addr %s2672, 8
        %s2674 = scalar_lea.vmem %s20, %s2673
        %p2675 = scmp.lt.s32.totalorder %s48, 1
        %s2676 = scalar_select %p2675, %s48, 1
        %s2677 = smul.addr %s2676, 2
        %s2678 = smul.addr %s2677, 8
        %s2679 = scalar_lea.vmem %s21, %s2678
        %p2680 = scmp.lt.s32.totalorder %s48, 1
        %s2681 = scalar_select %p2680, %s48, 1
        %s2682 = smul.addr %s2681, 2
        %s2683 = smul.addr %s2682, 8
        %s2684 = scalar_lea.vmem %s22, %s2683
        // Predicated region
        $region117: #{llava_forward.2} parent=87 // pred_check
          %p2685 = pneg %p428
        $region118: #{llava_forward.2} parent=87 // pred_check_branch
          %2687 = sbr.rel (%p2685) target = $region120
        $region119: #{llava_forward.2} parent=87 // pred_region
          _
        $region120: #{llava_forward.2} parent=87 // pred_fallthru
          _
        // Predicated region
        $region121: #{llava_forward.2} parent=87 // pred_check
          %p2688 = pneg %p454
        $region122: #{llava_forward.2} parent=87 // pred_check_branch
          %2690 = sbr.rel (%p2688) target = $region124
        $region123: #{llava_forward.2} parent=87 // pred_region
          _
        $region124: #{llava_forward.2} parent=87 // pred_fallthru
          _
        // Predicated region
        $region125: #{llava_forward.2} parent=87 // pred_check
          %p2691 = pneg %p480
        $region126: #{llava_forward.2} parent=87 // pred_check_branch
          %2693 = sbr.rel (%p2691) target = $region128
        $region127: #{llava_forward.2} parent=87 // pred_region
          _
        $region128: #{llava_forward.2} parent=87 // pred_fallthru
          _
        // Predicated region
        $region129: #{llava_forward.2} parent=87 // pred_check
          %p2694 = pneg %p506
        $region130: #{llava_forward.2} parent=87 // pred_check_branch
          %2696 = sbr.rel (%p2694) target = $region132
        $region131: #{llava_forward.2} parent=87 // pred_region
          _
        $region132: #{llava_forward.2} parent=87 // pred_fallthru
          _
      $region88: #{llava_forward.2} parent=5 // pred_fallthru
        _
      %p2697 = scmp.le.s32.totalorder 2, %s43
      // Predicated region
      $region133: #{llava_forward.2} parent=5 // pred_check
        %p2698 = pneg %p2697
      $region134: #{llava_forward.2} parent=5 // pred_check_branch
        %2700 = sbr.rel (%p2698) target = $region136
      $region135: #{llava_forward.2} parent=5 // pred_region
        %s2701 = ssub.s32 %s43, 2
        // Predicated region
        $region137: #{llava_forward.2} parent=135 // pred_check
          %p2702 = pneg %p434
        $region138: #{llava_forward.2} parent=135 // pred_check_branch
          %2704 = sbr.rel (%p2702) target = $region140
        $region139: #{llava_forward.2} parent=135 // pred_region
          %p2705 = scmp.lt.s32.totalorder %s49, 1
          %s2706 = scalar_select %p2705, %s49, 1
          %s2707 = smul.addr %s2706, 4
          %s2708 = smul.addr %s2707, 8
          %s2709 = scalar_lea.vmem %s19, %s2708
        $region140: #{llava_forward.2} parent=135 // pred_fallthru
          _
        // Predicated region
        $region141: #{llava_forward.2} parent=135 // pred_check
          %p2710 = pneg %p460
        $region142: #{llava_forward.2} parent=135 // pred_check_branch
          %2712 = sbr.rel (%p2710) target = $region144
        $region143: #{llava_forward.2} parent=135 // pred_region
          %p2713 = scmp.lt.s32.totalorder %s49, 1
          %s2714 = scalar_select %p2713, %s49, 1
          %s2715 = smul.addr %s2714, 2
          %s2716 = smul.addr %s2715, 8
          %s2717 = scalar_lea.vmem %s20, %s2716
        $region144: #{llava_forward.2} parent=135 // pred_fallthru
          _
        // Predicated region
        $region145: #{llava_forward.2} parent=135 // pred_check
          %p2718 = pneg %p486
        $region146: #{llava_forward.2} parent=135 // pred_check_branch
          %2720 = sbr.rel (%p2718) target = $region148
        $region147: #{llava_forward.2} parent=135 // pred_region
          %p2721 = scmp.lt.s32.totalorder %s49, 1
          %s2722 = scalar_select %p2721, %s49, 1
          %s2723 = smul.addr %s2722, 2
          %s2724 = smul.addr %s2723, 8
          %s2725 = scalar_lea.vmem %s21, %s2724
        $region148: #{llava_forward.2} parent=135 // pred_fallthru
          _
        // Predicated region
        $region149: #{llava_forward.2} parent=135 // pred_check
          %p2726 = pneg %p512
        $region150: #{llava_forward.2} parent=135 // pred_check_branch
          %2728 = sbr.rel (%p2726) target = $region152
        $region151: #{llava_forward.2} parent=135 // pred_region
          %p2729 = scmp.lt.s32.totalorder %s49, 1
          %s2730 = scalar_select %p2729, %s49, 1
          %s2731 = smul.addr %s2730, 2
          %s2732 = smul.addr %s2731, 8
          %s2733 = scalar_lea.vmem %s22, %s2732
        $region152: #{llava_forward.2} parent=135 // pred_fallthru
          _
      $region136: #{llava_forward.2} parent=5 // pred_fallthru
        _
    $region6: #{llava_forward.2} parent=1 // loop_footer
      %s47 = sadd.s32 1, %s43
    $region7: #{llava_forward.2} parent=1 // loop_footer_branch
      %42 = sbr.rel target = $region3
    $region8: #{llava_forward.2} parent=1 // loop_exit
      _
    %2734 = vsyncpa [#allocation6], 1
    %s2735 = scalar_lea.sflag [#allocation6], 1
    %2736 = vsyncpa %s2735, 1
    %2737 = vsyncpa [#allocation8], 1
    %2738 = vsyncpa [#allocation11], 1
    %2739 = vsyncpa [#allocation14], 1

</llo_original>
